<compile_context>
chip_gen: v7x
topology: tpu7x:2x2x1
jax: 0.10.0
libtpu: 0.0.40
codegen_flags: <defaults>
</compile_context>

<pallas_src>
import math
from functools import partial

import jax
import jax.numpy as jnp
import numpy as np
from jax.experimental import pallas as pl
from jax.experimental.pallas import tpu as pltpu

# ----------------------------- hyper-params ---------------------------------
B, T, C, H, NLAYER = 2, 8, 32, 4, 2        # batch, seq, n_embd, n_head, n_layer
DH = C // H                                # head dim
BLOCK_SIZE = T                             # Stack block_size
OUT_LANES = ((C + 127) // 128) * 128 if C > 128 else 128        # lane-dense out
VEC_LANES = ((max(4 * C, 128) + 127) // 128) * 128              # packed vectors

# Matmul operand dtype.  jnp.bfloat16 recommended on v6e/v7x (MXU-native,
# halves vreg pressure); keep f32 here to preserve the 2e-3 reference check.
MXU_DTYPE = jnp.float32


# ------------------------------ kernel helpers ------------------------------
def _ln(x, w, b, eps=1e-5):
    # x: [T, C], w/b: [1, C]  (PyTorch LayerNorm: biased variance, eps=1e-5)
    mu = jnp.mean(x, axis=-1, keepdims=True)
    var = jnp.mean((x - mu) ** 2, axis=-1, keepdims=True)
    return (x - mu) * jax.lax.rsqrt(var + eps) * w + b


def _gelu(x):
    return jax.nn.gelu(x, approximate=True)


def _mm(a, b):
    return jnp.dot(a.astype(MXU_DTYPE), b.astype(MXU_DTYPE),
                   preferred_element_type=jnp.float32)


# --------------------------- fused forward kernel ----------------------------
def _stack_kernel(x_ref, m_ref, pe_ref, wqkvo_ref, wfc_ref, wp2_ref,
                  whead_ref, vecs_ref, o_ref, *, n_layer, n_head):
    _, t, c = x_ref.shape
    dh = c // n_head

    # additive key mask, broadcast ONCE to [H, T, T] (no per-layer re-select)
    neg = jnp.where(m_ref[...] > 0.5, 0.0, jnp.float32(-1e30))        # [1,1,T]
    neg = jnp.broadcast_to(neg.reshape(1, 1, t), (n_head, t, t))      # [H,T,T]

    # positional encoding before layer 0 only (pos_all=False); drop = identity
    x = (x_ref[...] + pe_ref[...]).reshape(t, c)                      # [T, C]

    def vec(layer, row, width):
        # static, tile-aligned slice of the packed small-vector array -> [1,w]
        return vecs_ref[layer, row:row + 1, :width]

    for l in range(n_layer):
        # ---- LN1 + Q/K/V projections (lane-aligned [T,C]@[C,C] dots) ----
        h = _ln(x, vec(l, 0, c), vec(l, 1, c))
        q = _mm(h, wqkvo_ref[l, 0]) + vec(l, 2, c)   # 1/sqrt(dh) folded in
        k = _mm(h, wqkvo_ref[l, 1]) + vec(l, 3, c)
        v = _mm(h, wqkvo_ref[l, 2]) + vec(l, 4, c)

        # ---- batched multi-head self-attention (non-causal, key-masked) ----
        qh = q.reshape(t, n_head, dh).swapaxes(0, 1)                  # [H,T,DH]
        kh = k.reshape(t, n_head, dh).swapaxes(0, 1)
        vh = v.reshape(t, n_head, dh).swapaxes(0, 1)
        s = jnp.einsum('hqd,hkd->hqk',
                       qh.astype(MXU_DTYPE), kh.astype(MXU_DTYPE),
                       preferred_element_type=jnp.float32) + neg      # [H,T,T]
        p = jnp.exp(s - jnp.max(s, axis=-1, keepdims=True))
        p = p * pl.reciprocal(jnp.sum(p, axis=-1, keepdims=True), approx=True)
        oh = jnp.einsum('hqk,hkd->hqd',
                        p.astype(MXU_DTYPE), vh.astype(MXU_DTYPE),
                        preferred_element_type=jnp.float32)           # [H,T,DH]
        y = oh.swapaxes(0, 1).reshape(t, c)                           # [T,C]
        x = x + _mm(y, wqkvo_ref[l, 3]) + vec(l, 5, c)                # residual

        # ---- LN2 + MLP ----
        h2 = _ln(x, vec(l, 6, c), vec(l, 7, c))
        f = _gelu(_mm(h2, wfc_ref[l]) + vec(l, 8, 4 * c))
        x = x + _mm(f, wp2_ref[l]) + vec(l, 9, c)

    # ---- final LayerNorm + lane-dense (zero-padded) head ----
    hf = _ln(x, vec(n_layer, 0, c), vec(n_layer, 1, c))
    o_ref[...] = _mm(hf, whead_ref[...])[None]                        # [1,T,128]


# ------------------------------- pallas wrapper -------------------------------
def stack_forward(x, mask, packed, pe, *, n_layer=NLAYER, n_head=H):
    """x: [B, T, C] float32, mask: [B, T] bool -> (logits [B, T, C], mask)."""
    b, t, c = x.shape
    assert t <= BLOCK_SIZE, 'Cannot forward, model block size is exhausted.'
    mask_f = mask.astype(jnp.float32)[:, None, :]            # [B, 1, T]
    pe_in = pe[None, :t, :]                                   # [1, T, C]

    nlay = packed['wqkvo'].shape[0]
    grid_spec = pltpu.PrefetchScalarGridSpec(
        num_scalar_prefetch=0,
        grid=(b,),
        in_specs=[
            pl.BlockSpec((1, t, c), lambda i: (i, 0, 0)),                 # x
            pl.BlockSpec((1, 1, t), lambda i: (i, 0, 0)),                 # mask
            pl.BlockSpec((1, t, c), lambda i: (0, 0, 0)),                 # pe
            pl.BlockSpec((nlay, 4, c, c), lambda i: (0, 0, 0, 0)),        # wqkvo
            pl.BlockSpec((nlay, c, 4 * c), lambda i: (0, 0, 0)),          # wfc
            pl.BlockSpec((nlay, 4 * c, c), lambda i: (0, 0, 0)),          # wp2
            pl.BlockSpec((c, OUT_LANES), lambda i: (0, 0)),               # head
            pl.BlockSpec((nlay + 1, 10, VEC_LANES), lambda i: (0, 0, 0)), # vecs
        ],
        out_specs=pl.BlockSpec((1, t, OUT_LANES), lambda i: (i, 0, 0)),
    )

    out = pl.pallas_call(
        partial(_stack_kernel, n_layer=n_layer, n_head=n_head),
        out_shape=jax.ShapeDtypeStruct((b, t, OUT_LANES), jnp.float32),
        grid_spec=grid_spec,
        compiler_params=pltpu.CompilerParams(
            dimension_semantics=("parallel",)),   # v7x: split batch over 2 TCs
    )(x, mask_f, pe_in, packed['wqkvo'], packed['wfc'], packed['wp2'],
      packed['w_head_pad'], packed['vecs'])

    logits = out[:, :, :c]
    return logits, mask


# ------------------------- deterministic parameter init ----------------------
def sine_pe(max_len, dim):
    rest = dim % 2
    pe = np.zeros((max_len, dim + rest), dtype=np.float32)
    position = np.arange(0, max_len, dtype=np.float32)[:, None]
    div_term = np.exp(np.arange(0, dim + rest, 2, dtype=np.float32)
                      * (-math.log(10000.0) / (dim + rest)))
    pe[:, 0::2] = np.sin(position * div_term)
    pe[:, 1::2] = np.cos(position * div_term)
    return jnp.asarray(pe[:, :dim])


def make_params(key):
    n_mats = NLAYER * 6 + 1              # wq,wk,wv,wo,wfc,wp2 per layer + head
    keys = jax.random.split(key, n_mats)
    it = iter(keys)

    def nrm(shape):
        return 0.02 * jax.random.normal(next(it), shape, dtype=jnp.float32)

    layers = []
    for _ in range(NLAYER):
        layers.append(dict(
            ln1w=jnp.ones((1, C), jnp.float32), ln1b=jnp.zeros((1, C), jnp.float32),
            wq=nrm((C, C)), bq=jnp.zeros((1, C), jnp.float32),
            wk=nrm((C, C)), bk=jnp.zeros((1, C), jnp.float32),
            wv=nrm((C, C)), bv=jnp.zeros((1, C), jnp.float32),
            wo=nrm((C, C)), bo=jnp.zeros((1, C), jnp.float32),
            ln2w=jnp.ones((1, C), jnp.float32), ln2b=jnp.zeros((1, C), jnp.float32),
            wfc=nrm((C, 4 * C)), bfc=jnp.zeros((1, 4 * C), jnp.float32),
            wp2=nrm((4 * C, C)), bp2=jnp.zeros((1, C), jnp.float32),
        ))
    return dict(layers=layers,
                lnf_w=jnp.ones((1, C), jnp.float32),
                lnf_b=jnp.zeros((1, C), jnp.float32),
                w_head=nrm((C, C)))


def pack_params(params):
    """One-time weight preprocessing:
       - stack Q/K/V/O weights as [L,4,C,C]; fold 1/sqrt(DH) into wq and bq;
       - pack every small [1,*] LN weight / bias into one lane-dense
         [L+1, 10, VEC_LANES] array (rows: ln1w,ln1b,bq,bk,bv,bo,ln2w,ln2b,
         bfc,bp2; extra slot L holds lnf_w/lnf_b);
       - zero-pad the head weight to [C, OUT_LANES] for an unmasked store."""
    lps = params['layers']
    scale = 1.0 / math.sqrt(DH)

    wqkvo = jnp.stack(
        [jnp.stack([lp['wq'] * scale, lp['wk'], lp['wv'], lp['wo']], axis=0)
         for lp in lps], axis=0)                              # [L, 4, C, C]
    wfc = jnp.stack([lp['wfc'] for lp in lps], axis=0)        # [L, C, 4C]
    wp2 = jnp.stack([lp['wp2'] for lp in lps], axis=0)        # [L, 4C, C]

    def pad_row(v):
        v = v.reshape(-1)
        return jnp.pad(v, (0, VEC_LANES - v.shape[0]))

    vec_rows = []
    for lp in lps:
        vec_rows.append(jnp.stack([
            pad_row(lp['ln1w']), pad_row(lp['ln1b']),
            pad_row(lp['bq'] * scale), pad_row(lp['bk']), pad_row(lp['bv']),
            pad_row(lp['bo']),
            pad_row(lp['ln2w']), pad_row(lp['ln2b']),
            pad_row(lp['bfc']), pad_row(lp['bp2']),
        ], axis=0))
    final_rows = jnp.stack(
        [pad_row(params['lnf_w']), pad_row(params['lnf_b'])]
        + [jnp.zeros((VEC_LANES,), jnp.float32)] * 8, axis=0)
    vecs = jnp.stack(vec_rows + [final_rows], axis=0)         # [L+1, 10, 128]

    w_head_pad = jnp.pad(params['w_head'],
                         ((0, 0), (0, OUT_LANES - params['w_head'].shape[1])))
    return dict(wqkvo=wqkvo, wfc=wfc, wp2=wp2, vecs=vecs, w_head_pad=w_head_pad)


# ------------------------------ pure-JAX reference ---------------------------
def _ref_ln(x, w, b, eps=1e-5):
    mu = x.mean(-1, keepdims=True)
    var = ((x - mu) ** 2).mean(-1, keepdims=True)
    return (x - mu) * jax.lax.rsqrt(var + eps) * w + b


def _ref_block(x, mask_b, p):
    h = _ref_ln(x, p['ln1w'], p['ln1b'])
    q = h @ p['wq'] + p['bq']
    k = h @ p['wk'] + p['bk']
    v = h @ p['wv'] + p['bv']
    Bq, Tq, Cq = x.shape
    qh = q.reshape(Bq, Tq, H, DH).transpose(0, 2, 1, 3)
    kh = k.reshape(Bq, Tq, H, DH).transpose(0, 2, 1, 3)
    vh = v.reshape(Bq, Tq, H, DH).transpose(0, 2, 1, 3)
    att = (qh @ kh.transpose(0, 1, 3, 2)) / math.sqrt(DH)
    att = jnp.where(mask_b[:, None, None, :], att, -1e30)
    att = jax.nn.softmax(att, axis=-1)
    y = (att @ vh).transpose(0, 2, 1, 3).reshape(Bq, Tq, Cq)
    x = x + (y @ p['wo'] + p['bo'])
    h2 = _ref_ln(x, p['ln2w'], p['ln2b'])
    f = _gelu(h2 @ p['wfc'] + p['bfc']) @ p['wp2'] + p['bp2']
    return x + f


def _ref_forward(x, mask_b, params, pe):
    h = x + pe[None, :x.shape[1], :]
    for lp in params['layers']:
        h = _ref_block(h, mask_b, lp)
    h = _ref_ln(h, params['lnf_w'], params['lnf_b'])
    return h @ params['w_head']


# ------------------------------------ main -----------------------------------
if __name__ == "__main__":
    key = jax.random.PRNGKey(0)
    kx, kp = jax.random.split(key)
    x = jax.random.normal(kx, (B, T, C), dtype=jnp.float32)
    mask = jnp.array([[True] * T,
                      [True] * (T - 2) + [False, False]], dtype=bool)
    params = make_params(kp)
    packed = pack_params(params)
    pe = sine_pe(BLOCK_SIZE, C)

    fwd = jax.jit(stack_forward)
    logits, out_mask = fwd(x, mask, packed, pe)
    logits = jax.block_until_ready(logits)

    ref = _ref_forward(x, mask, params, pe)
    np.testing.assert_allclose(np.asarray(logits), np.asarray(ref),
                               rtol=2e-3, atol=2e-3)
    assert logits.shape == (B, T, C) and out_mask.shape == (B, T)
    print("KERNEL_OK")
</pallas_src>

<mosaic_0001>
module attributes {stable_mosaic.version = 11 : i64} {
  func.func @_stack_kernel(%arg0: i32, %arg1: memref<1x8x32xf32, #tpu.memory_space<vmem>>, %arg2: memref<1x1x8xf32, #tpu.memory_space<vmem>>, %arg3: memref<1x8x32xf32, #tpu.memory_space<vmem>>, %arg4: memref<2x4x32x32xf32, #tpu.memory_space<vmem>>, %arg5: memref<2x32x128xf32, #tpu.memory_space<vmem>>, %arg6: memref<2x128x32xf32, #tpu.memory_space<vmem>>, %arg7: memref<32x128xf32, #tpu.memory_space<vmem>>, %arg8: memref<3x10x128xf32, #tpu.memory_space<vmem>>, %arg9: memref<1x8x128xf32, #tpu.memory_space<vmem>>) attributes {dimension_semantics = [#tpu.dimension_semantics<parallel>], iteration_bounds = array<i64: 2>, scalar_prefetch = 0 : i64, scratch_operands = 0 : i64, tpu.core_type = #tpu.core_type<tc>, window_params = [{transform_indices = @transform_0, window_bounds = array<i64: 1, 8, 32>}, {transform_indices = @transform_1, window_bounds = array<i64: 1, 1, 8>}, {pipeline_mode = #tpu.pipeline_mode<synchronous>, transform_indices = @transform_2, window_bounds = array<i64: 1, 8, 32>}, {pipeline_mode = #tpu.pipeline_mode<synchronous>, transform_indices = @transform_3, window_bounds = array<i64: 2, 4, 32, 32>}, {pipeline_mode = #tpu.pipeline_mode<synchronous>, transform_indices = @transform_4, window_bounds = array<i64: 2, 32, 128>}, {pipeline_mode = #tpu.pipeline_mode<synchronous>, transform_indices = @transform_5, window_bounds = array<i64: 2, 128, 32>}, {pipeline_mode = #tpu.pipeline_mode<synchronous>, transform_indices = @transform_6, window_bounds = array<i64: 32, 128>}, {pipeline_mode = #tpu.pipeline_mode<synchronous>, transform_indices = @transform_7, window_bounds = array<i64: 3, 10, 128>}, {transform_indices = @transform_8, window_bounds = array<i64: 1, 8, 128>}]} {
    %c0 = arith.constant 0 : index
    %c0_0 = arith.constant 0 : index
    %c0_1 = arith.constant 0 : index
    %0 = vector.load %arg2[%c0, %c0_0, %c0_1] : memref<1x1x8xf32, #tpu.memory_space<vmem>>, vector<1x1x8xf32>
    %cst = arith.constant 5.000000e-01 : f32
    %1 = vector.broadcast %cst : f32 to vector<1x1x8xf32>
    %2 = arith.cmpf ogt, %0, %1 : vector<1x1x8xf32>
    %cst_2 = arith.constant 0.000000e+00 : f32
    %cst_3 = arith.constant -1.000000e+30 : f32
    %3 = vector.broadcast %cst_2 : f32 to vector<1x1x8xf32>
    %4 = vector.broadcast %cst_3 : f32 to vector<1x1x8xf32>
    %5 = arith.select %2, %3, %4 : vector<1x1x8xi1>, vector<1x1x8xf32>
    %6 = vector.shape_cast %5 : vector<1x1x8xf32> to vector<1x1x8xf32>
    %7 = vector.broadcast %6 : vector<1x1x8xf32> to vector<4x8x8xf32>
    %c0_4 = arith.constant 0 : index
    %c0_5 = arith.constant 0 : index
    %c0_6 = arith.constant 0 : index
    %8 = vector.load %arg1[%c0_4, %c0_5, %c0_6] : memref<1x8x32xf32, #tpu.memory_space<vmem>>, vector<1x8x32xf32>
    %c0_7 = arith.constant 0 : index
    %c0_8 = arith.constant 0 : index
    %c0_9 = arith.constant 0 : index
    %9 = vector.load %arg3[%c0_7, %c0_8, %c0_9] : memref<1x8x32xf32, #tpu.memory_space<vmem>>, vector<1x8x32xf32>
    %10 = arith.addf %8, %9 : vector<1x8x32xf32>
    %11 = vector.shape_cast %10 : vector<1x8x32xf32> to vector<8x32xf32>
    %c0_10 = arith.constant 0 : index
    %c0_11 = arith.constant 0 : index
    %c0_12 = arith.constant 0 : index
    %12 = vector.load %arg8[%c0_10, %c0_11, %c0_12] : memref<3x10x128xf32, #tpu.memory_space<vmem>>, vector<1x1x32xf32>
    %13 = vector.shape_cast %12 : vector<1x1x32xf32> to vector<1x32xf32>
    %c0_13 = arith.constant 0 : index
    %c1 = arith.constant 1 : index
    %c0_14 = arith.constant 0 : index
    %14 = vector.load %arg8[%c0_13, %c1, %c0_14] : memref<3x10x128xf32, #tpu.memory_space<vmem>>, vector<1x1x32xf32>
    %15 = vector.shape_cast %14 : vector<1x1x32xf32> to vector<1x32xf32>
    %cst_15 = arith.constant dense<0.000000e+00> : vector<8xf32>
    %16 = vector.multi_reduction <add>, %11, %cst_15 [1] : vector<8x32xf32> to vector<8xf32>
    %17 = vector.shape_cast %16 : vector<8xf32> to vector<8x1xf32>
    %cst_16 = arith.constant 3.200000e+01 : f32
    %18 = vector.broadcast %cst_16 : f32 to vector<8x1xf32>
    %19 = arith.divf %17, %18 : vector<8x1xf32>
    %20 = vector.broadcast %19 : vector<8x1xf32> to vector<8x32xf32>
    %21 = arith.subf %11, %20 : vector<8x32xf32>
    %22 = arith.mulf %21, %21 : vector<8x32xf32>
    %cst_17 = arith.constant dense<0.000000e+00> : vector<8xf32>
    %23 = vector.multi_reduction <add>, %22, %cst_17 [1] : vector<8x32xf32> to vector<8xf32>
    %24 = vector.shape_cast %23 : vector<8xf32> to vector<8x1xf32>
    %cst_18 = arith.constant 3.200000e+01 : f32
    %25 = vector.broadcast %cst_18 : f32 to vector<8x1xf32>
    %26 = arith.divf %24, %25 : vector<8x1xf32>
    %27 = vector.broadcast %19 : vector<8x1xf32> to vector<8x32xf32>
    %28 = arith.subf %11, %27 : vector<8x32xf32>
    %cst_19 = arith.constant 9.99999974E-6 : f32
    %29 = vector.broadcast %cst_19 : f32 to vector<8x1xf32>
    %30 = arith.addf %26, %29 : vector<8x1xf32>
    %31 = math.rsqrt %30 : vector<8x1xf32>
    %32 = vector.broadcast %31 : vector<8x1xf32> to vector<8x32xf32>
    %33 = arith.mulf %28, %32 : vector<8x32xf32>
    %34 = vector.broadcast %13 : vector<1x32xf32> to vector<8x32xf32>
    %35 = arith.mulf %33, %34 : vector<8x32xf32>
    %36 = vector.broadcast %15 : vector<1x32xf32> to vector<8x32xf32>
    %37 = arith.addf %35, %36 : vector<8x32xf32>
    %c0_20 = arith.constant 0 : index
    %c0_21 = arith.constant 0 : index
    %c0_22 = arith.constant 0 : index
    %c0_23 = arith.constant 0 : index
    %38 = vector.load %arg4[%c0_20, %c0_21, %c0_22, %c0_23] : memref<2x4x32x32xf32, #tpu.memory_space<vmem>>, vector<1x1x32x32xf32>
    %39 = vector.shape_cast %38 : vector<1x1x32x32xf32> to vector<32x32xf32>
    %cst_24 = arith.constant dense<0.000000e+00> : vector<8x32xf32>
    %40 = tpu.matmul %37, %39, %cst_24 {dimension_numbers = #tpu.dot_dimension_numbers<[1], [0], [0], [1], [0, 0, 1, 1], [], []>} : vector<8x32xf32>, vector<32x32xf32>, vector<8x32xf32> -> vector<8x32xf32>
    %c0_25 = arith.constant 0 : index
    %c2 = arith.constant 2 : index
    %c0_26 = arith.constant 0 : index
    %41 = vector.load %arg8[%c0_25, %c2, %c0_26] : memref<3x10x128xf32, #tpu.memory_space<vmem>>, vector<1x1x32xf32>
    %42 = vector.shape_cast %41 : vector<1x1x32xf32> to vector<1x32xf32>
    %43 = vector.broadcast %42 : vector<1x32xf32> to vector<8x32xf32>
    %44 = arith.addf %40, %43 : vector<8x32xf32>
    %c0_27 = arith.constant 0 : index
    %c1_28 = arith.constant 1 : index
    %c0_29 = arith.constant 0 : index
    %c0_30 = arith.constant 0 : index
    %45 = vector.load %arg4[%c0_27, %c1_28, %c0_29, %c0_30] : memref<2x4x32x32xf32, #tpu.memory_space<vmem>>, vector<1x1x32x32xf32>
    %46 = vector.shape_cast %45 : vector<1x1x32x32xf32> to vector<32x32xf32>
    %cst_31 = arith.constant dense<0.000000e+00> : vector<8x32xf32>
    %47 = tpu.matmul %37, %46, %cst_31 {dimension_numbers = #tpu.dot_dimension_numbers<[1], [0], [0], [1], [0, 0, 1, 1], [], []>} : vector<8x32xf32>, vector<32x32xf32>, vector<8x32xf32> -> vector<8x32xf32>
    %c0_32 = arith.constant 0 : index
    %c3 = arith.constant 3 : index
    %c0_33 = arith.constant 0 : index
    %48 = vector.load %arg8[%c0_32, %c3, %c0_33] : memref<3x10x128xf32, #tpu.memory_space<vmem>>, vector<1x1x32xf32>
    %49 = vector.shape_cast %48 : vector<1x1x32xf32> to vector<1x32xf32>
    %50 = vector.broadcast %49 : vector<1x32xf32> to vector<8x32xf32>
    %51 = arith.addf %47, %50 : vector<8x32xf32>
    %c0_34 = arith.constant 0 : index
    %c2_35 = arith.constant 2 : index
    %c0_36 = arith.constant 0 : index
    %c0_37 = arith.constant 0 : index
    %52 = vector.load %arg4[%c0_34, %c2_35, %c0_36, %c0_37] : memref<2x4x32x32xf32, #tpu.memory_space<vmem>>, vector<1x1x32x32xf32>
    %53 = vector.shape_cast %52 : vector<1x1x32x32xf32> to vector<32x32xf32>
    %cst_38 = arith.constant dense<0.000000e+00> : vector<8x32xf32>
    %54 = tpu.matmul %37, %53, %cst_38 {dimension_numbers = #tpu.dot_dimension_numbers<[1], [0], [0], [1], [0, 0, 1, 1], [], []>} : vector<8x32xf32>, vector<32x32xf32>, vector<8x32xf32> -> vector<8x32xf32>
    %c0_39 = arith.constant 0 : index
    %c4 = arith.constant 4 : index
    %c0_40 = arith.constant 0 : index
    %55 = vector.load %arg8[%c0_39, %c4, %c0_40] : memref<3x10x128xf32, #tpu.memory_space<vmem>>, vector<1x1x32xf32>
    %56 = vector.shape_cast %55 : vector<1x1x32xf32> to vector<1x32xf32>
    %57 = vector.broadcast %56 : vector<1x32xf32> to vector<8x32xf32>
    %58 = arith.addf %54, %57 : vector<8x32xf32>
    %59 = vector.shape_cast %44 : vector<8x32xf32> to vector<8x4x8xf32>
    %60 = tpu.transpose %59, [1, 0, 2] : vector<8x4x8xf32> -> vector<4x8x8xf32>
    %61 = vector.shape_cast %51 : vector<8x32xf32> to vector<8x4x8xf32>
    %62 = tpu.transpose %61, [1, 0, 2] : vector<8x4x8xf32> -> vector<4x8x8xf32>
    %63 = vector.shape_cast %58 : vector<8x32xf32> to vector<8x4x8xf32>
    %64 = tpu.transpose %63, [1, 0, 2] : vector<8x4x8xf32> -> vector<4x8x8xf32>
    "tpu.trace_start"() <{level = 10 : i32, message = "hqd,hkd->hqk"}> : () -> ()
    %cst_41 = arith.constant dense<0.000000e+00> : vector<4x8x8xf32>
    %65 = tpu.matmul %60, %62, %cst_41 {dimension_numbers = #tpu.dot_dimension_numbers<[2], [2], [1], [1], [0, 0, 0, 1, 1, 1], [0], [0]>} : vector<4x8x8xf32>, vector<4x8x8xf32>, vector<4x8x8xf32> -> vector<4x8x8xf32>
    "tpu.trace_stop"() : () -> ()
    %66 = arith.addf %65, %7 : vector<4x8x8xf32>
    %cst_42 = arith.constant dense<0xFF800000> : vector<4x8xf32>
    %67 = vector.multi_reduction <maximumf>, %66, %cst_42 [2] : vector<4x8x8xf32> to vector<4x8xf32>
    %68 = vector.shape_cast %67 : vector<4x8xf32> to vector<4x8x1xf32>
    %69 = vector.broadcast %68 : vector<4x8x1xf32> to vector<4x8x8xf32>
    %70 = arith.subf %66, %69 : vector<4x8x8xf32>
    %71 = math.exp %70 : vector<4x8x8xf32>
    %cst_43 = arith.constant dense<0.000000e+00> : vector<4x8xf32>
    %72 = vector.multi_reduction <add>, %71, %cst_43 [2] : vector<4x8x8xf32> to vector<4x8xf32>
    %73 = vector.shape_cast %72 : vector<4x8xf32> to vector<4x8x1xf32>
    %74 = tpu.reciprocal %73 {approx = true} : vector<4x8x1xf32> -> vector<4x8x1xf32>
    %75 = vector.broadcast %74 : vector<4x8x1xf32> to vector<4x8x8xf32>
    %76 = arith.mulf %71, %75 : vector<4x8x8xf32>
    "tpu.trace_start"() <{level = 10 : i32, message = "hqk,hkd->hqd"}> : () -> ()
    %cst_44 = arith.constant dense<0.000000e+00> : vector<4x8x8xf32>
    %77 = tpu.matmul %76, %64, %cst_44 {dimension_numbers = #tpu.dot_dimension_numbers<[2], [1], [1], [2], [0, 0, 0, 1, 1, 2], [0], [0]>} : vector<4x8x8xf32>, vector<4x8x8xf32>, vector<4x8x8xf32> -> vector<4x8x8xf32>
    "tpu.trace_stop"() : () -> ()
    %78 = tpu.transpose %77, [1, 0, 2] : vector<4x8x8xf32> -> vector<8x4x8xf32>
    %79 = vector.shape_cast %78 : vector<8x4x8xf32> to vector<8x32xf32>
    %c0_45 = arith.constant 0 : index
    %c3_46 = arith.constant 3 : index
    %c0_47 = arith.constant 0 : index
    %c0_48 = arith.constant 0 : index
    %80 = vector.load %arg4[%c0_45, %c3_46, %c0_47, %c0_48] : memref<2x4x32x32xf32, #tpu.memory_space<vmem>>, vector<1x1x32x32xf32>
    %81 = vector.shape_cast %80 : vector<1x1x32x32xf32> to vector<32x32xf32>
    %cst_49 = arith.constant dense<0.000000e+00> : vector<8x32xf32>
    %82 = tpu.matmul %79, %81, %cst_49 {dimension_numbers = #tpu.dot_dimension_numbers<[1], [0], [0], [1], [0, 0, 1, 1], [], []>} : vector<8x32xf32>, vector<32x32xf32>, vector<8x32xf32> -> vector<8x32xf32>
    %83 = arith.addf %11, %82 : vector<8x32xf32>
    %c0_50 = arith.constant 0 : index
    %c5 = arith.constant 5 : index
    %c0_51 = arith.constant 0 : index
    %84 = vector.load %arg8[%c0_50, %c5, %c0_51] : memref<3x10x128xf32, #tpu.memory_space<vmem>>, vector<1x1x32xf32>
    %85 = vector.shape_cast %84 : vector<1x1x32xf32> to vector<1x32xf32>
    %86 = vector.broadcast %85 : vector<1x32xf32> to vector<8x32xf32>
    %87 = arith.addf %83, %86 : vector<8x32xf32>
    %c0_52 = arith.constant 0 : index
    %c6 = arith.constant 6 : index
    %c0_53 = arith.constant 0 : index
    %88 = vector.load %arg8[%c0_52, %c6, %c0_53] : memref<3x10x128xf32, #tpu.memory_space<vmem>>, vector<1x1x32xf32>
    %89 = vector.shape_cast %88 : vector<1x1x32xf32> to vector<1x32xf32>
    %c0_54 = arith.constant 0 : index
    %c7 = arith.constant 7 : index
    %c0_55 = arith.constant 0 : index
    %90 = vector.load %arg8[%c0_54, %c7, %c0_55] : memref<3x10x128xf32, #tpu.memory_space<vmem>>, vector<1x1x32xf32>
    %91 = vector.shape_cast %90 : vector<1x1x32xf32> to vector<1x32xf32>
    %cst_56 = arith.constant dense<0.000000e+00> : vector<8xf32>
    %92 = vector.multi_reduction <add>, %87, %cst_56 [1] : vector<8x32xf32> to vector<8xf32>
    %93 = vector.shape_cast %92 : vector<8xf32> to vector<8x1xf32>
    %cst_57 = arith.constant 3.200000e+01 : f32
    %94 = vector.broadcast %cst_57 : f32 to vector<8x1xf32>
    %95 = arith.divf %93, %94 : vector<8x1xf32>
    %96 = vector.broadcast %95 : vector<8x1xf32> to vector<8x32xf32>
    %97 = arith.subf %87, %96 : vector<8x32xf32>
    %98 = arith.mulf %97, %97 : vector<8x32xf32>
    %cst_58 = arith.constant dense<0.000000e+00> : vector<8xf32>
    %99 = vector.multi_reduction <add>, %98, %cst_58 [1] : vector<8x32xf32> to vector<8xf32>
    %100 = vector.shape_cast %99 : vector<8xf32> to vector<8x1xf32>
    %cst_59 = arith.constant 3.200000e+01 : f32
    %101 = vector.broadcast %cst_59 : f32 to vector<8x1xf32>
    %102 = arith.divf %100, %101 : vector<8x1xf32>
    %103 = vector.broadcast %95 : vector<8x1xf32> to vector<8x32xf32>
    %104 = arith.subf %87, %103 : vector<8x32xf32>
    %cst_60 = arith.constant 9.99999974E-6 : f32
    %105 = vector.broadcast %cst_60 : f32 to vector<8x1xf32>
    %106 = arith.addf %102, %105 : vector<8x1xf32>
    %107 = math.rsqrt %106 : vector<8x1xf32>
    %108 = vector.broadcast %107 : vector<8x1xf32> to vector<8x32xf32>
    %109 = arith.mulf %104, %108 : vector<8x32xf32>
    %110 = vector.broadcast %89 : vector<1x32xf32> to vector<8x32xf32>
    %111 = arith.mulf %109, %110 : vector<8x32xf32>
    %112 = vector.broadcast %91 : vector<1x32xf32> to vector<8x32xf32>
    %113 = arith.addf %111, %112 : vector<8x32xf32>
    %c0_61 = arith.constant 0 : index
    %c0_62 = arith.constant 0 : index
    %c0_63 = arith.constant 0 : index
    %114 = vector.load %arg5[%c0_61, %c0_62, %c0_63] : memref<2x32x128xf32, #tpu.memory_space<vmem>>, vector<1x32x128xf32>
    %115 = vector.shape_cast %114 : vector<1x32x128xf32> to vector<32x128xf32>
    %cst_64 = arith.constant dense<0.000000e+00> : vector<8x128xf32>
    %116 = tpu.matmul %113, %115, %cst_64 {dimension_numbers = #tpu.dot_dimension_numbers<[1], [0], [0], [1], [0, 0, 1, 1], [], []>} : vector<8x32xf32>, vector<32x128xf32>, vector<8x128xf32> -> vector<8x128xf32>
    %c0_65 = arith.constant 0 : index
    %c8 = arith.constant 8 : index
    %c0_66 = arith.constant 0 : index
    %117 = vector.load %arg8[%c0_65, %c8, %c0_66] : memref<3x10x128xf32, #tpu.memory_space<vmem>>, vector<1x1x128xf32>
    %118 = vector.shape_cast %117 : vector<1x1x128xf32> to vector<1x128xf32>
    %119 = vector.broadcast %118 : vector<1x128xf32> to vector<8x128xf32>
    %120 = arith.addf %116, %119 : vector<8x128xf32>
    %121 = arith.mulf %120, %120 : vector<8x128xf32>
    %122 = arith.mulf %120, %121 : vector<8x128xf32>
    %cst_67 = arith.constant 4.471500e-02 : f32
    %123 = vector.broadcast %cst_67 : f32 to vector<8x128xf32>
    %124 = arith.mulf %123, %122 : vector<8x128xf32>
    %125 = arith.addf %120, %124 : vector<8x128xf32>
    %cst_68 = arith.constant 0.797884583 : f32
    %126 = vector.broadcast %cst_68 : f32 to vector<8x128xf32>
    %127 = arith.mulf %126, %125 : vector<8x128xf32>
    %128 = math.tanh %127 : vector<8x128xf32>
    %cst_69 = arith.constant 1.000000e+00 : f32
    %129 = vector.broadcast %cst_69 : f32 to vector<8x128xf32>
    %130 = arith.addf %129, %128 : vector<8x128xf32>
    %cst_70 = arith.constant 5.000000e-01 : f32
    %131 = vector.broadcast %cst_70 : f32 to vector<8x128xf32>
    %132 = arith.mulf %131, %130 : vector<8x128xf32>
    %133 = arith.mulf %120, %132 : vector<8x128xf32>
    %c0_71 = arith.constant 0 : index
    %c0_72 = arith.constant 0 : index
    %c0_73 = arith.constant 0 : index
    %134 = vector.load %arg6[%c0_71, %c0_72, %c0_73] : memref<2x128x32xf32, #tpu.memory_space<vmem>>, vector<1x128x32xf32>
    %135 = vector.shape_cast %134 : vector<1x128x32xf32> to vector<128x32xf32>
    %cst_74 = arith.constant dense<0.000000e+00> : vector<8x32xf32>
    %136 = tpu.matmul %133, %135, %cst_74 {dimension_numbers = #tpu.dot_dimension_numbers<[1], [0], [0], [1], [0, 0, 1, 1], [], []>} : vector<8x128xf32>, vector<128x32xf32>, vector<8x32xf32> -> vector<8x32xf32>
    %137 = arith.addf %87, %136 : vector<8x32xf32>
    %c0_75 = arith.constant 0 : index
    %c9 = arith.constant 9 : index
    %c0_76 = arith.constant 0 : index
    %138 = vector.load %arg8[%c0_75, %c9, %c0_76] : memref<3x10x128xf32, #tpu.memory_space<vmem>>, vector<1x1x32xf32>
    %139 = vector.shape_cast %138 : vector<1x1x32xf32> to vector<1x32xf32>
    %140 = vector.broadcast %139 : vector<1x32xf32> to vector<8x32xf32>
    %141 = arith.addf %137, %140 : vector<8x32xf32>
    %c1_77 = arith.constant 1 : index
    %c0_78 = arith.constant 0 : index
    %c0_79 = arith.constant 0 : index
    %142 = vector.load %arg8[%c1_77, %c0_78, %c0_79] : memref<3x10x128xf32, #tpu.memory_space<vmem>>, vector<1x1x32xf32>
    %143 = vector.shape_cast %142 : vector<1x1x32xf32> to vector<1x32xf32>
    %c1_80 = arith.constant 1 : index
    %c1_81 = arith.constant 1 : index
    %c0_82 = arith.constant 0 : index
    %144 = vector.load %arg8[%c1_80, %c1_81, %c0_82] : memref<3x10x128xf32, #tpu.memory_space<vmem>>, vector<1x1x32xf32>
    %145 = vector.shape_cast %144 : vector<1x1x32xf32> to vector<1x32xf32>
    %cst_83 = arith.constant dense<0.000000e+00> : vector<8xf32>
    %146 = vector.multi_reduction <add>, %141, %cst_83 [1] : vector<8x32xf32> to vector<8xf32>
    %147 = vector.shape_cast %146 : vector<8xf32> to vector<8x1xf32>
    %cst_84 = arith.constant 3.200000e+01 : f32
    %148 = vector.broadcast %cst_84 : f32 to vector<8x1xf32>
    %149 = arith.divf %147, %148 : vector<8x1xf32>
    %150 = vector.broadcast %149 : vector<8x1xf32> to vector<8x32xf32>
    %151 = arith.subf %141, %150 : vector<8x32xf32>
    %152 = arith.mulf %151, %151 : vector<8x32xf32>
    %cst_85 = arith.constant dense<0.000000e+00> : vector<8xf32>
    %153 = vector.multi_reduction <add>, %152, %cst_85 [1] : vector<8x32xf32> to vector<8xf32>
    %154 = vector.shape_cast %153 : vector<8xf32> to vector<8x1xf32>
    %cst_86 = arith.constant 3.200000e+01 : f32
    %155 = vector.broadcast %cst_86 : f32 to vector<8x1xf32>
    %156 = arith.divf %154, %155 : vector<8x1xf32>
    %157 = vector.broadcast %149 : vector<8x1xf32> to vector<8x32xf32>
    %158 = arith.subf %141, %157 : vector<8x32xf32>
    %cst_87 = arith.constant 9.99999974E-6 : f32
    %159 = vector.broadcast %cst_87 : f32 to vector<8x1xf32>
    %160 = arith.addf %156, %159 : vector<8x1xf32>
    %161 = math.rsqrt %160 : vector<8x1xf32>
    %162 = vector.broadcast %161 : vector<8x1xf32> to vector<8x32xf32>
    %163 = arith.mulf %158, %162 : vector<8x32xf32>
    %164 = vector.broadcast %143 : vector<1x32xf32> to vector<8x32xf32>
    %165 = arith.mulf %163, %164 : vector<8x32xf32>
    %166 = vector.broadcast %145 : vector<1x32xf32> to vector<8x32xf32>
    %167 = arith.addf %165, %166 : vector<8x32xf32>
    %c1_88 = arith.constant 1 : index
    %c0_89 = arith.constant 0 : index
    %c0_90 = arith.constant 0 : index
    %c0_91 = arith.constant 0 : index
    %168 = vector.load %arg4[%c1_88, %c0_89, %c0_90, %c0_91] : memref<2x4x32x32xf32, #tpu.memory_space<vmem>>, vector<1x1x32x32xf32>
    %169 = vector.shape_cast %168 : vector<1x1x32x32xf32> to vector<32x32xf32>
    %cst_92 = arith.constant dense<0.000000e+00> : vector<8x32xf32>
    %170 = tpu.matmul %167, %169, %cst_92 {dimension_numbers = #tpu.dot_dimension_numbers<[1], [0], [0], [1], [0, 0, 1, 1], [], []>} : vector<8x32xf32>, vector<32x32xf32>, vector<8x32xf32> -> vector<8x32xf32>
    %c1_93 = arith.constant 1 : index
    %c2_94 = arith.constant 2 : index
    %c0_95 = arith.constant 0 : index
    %171 = vector.load %arg8[%c1_93, %c2_94, %c0_95] : memref<3x10x128xf32, #tpu.memory_space<vmem>>, vector<1x1x32xf32>
    %172 = vector.shape_cast %171 : vector<1x1x32xf32> to vector<1x32xf32>
    %173 = vector.broadcast %172 : vector<1x32xf32> to vector<8x32xf32>
    %174 = arith.addf %170, %173 : vector<8x32xf32>
    %c1_96 = arith.constant 1 : index
    %c1_97 = arith.constant 1 : index
    %c0_98 = arith.constant 0 : index
    %c0_99 = arith.constant 0 : index
    %175 = vector.load %arg4[%c1_96, %c1_97, %c0_98, %c0_99] : memref<2x4x32x32xf32, #tpu.memory_space<vmem>>, vector<1x1x32x32xf32>
    %176 = vector.shape_cast %175 : vector<1x1x32x32xf32> to vector<32x32xf32>
    %cst_100 = arith.constant dense<0.000000e+00> : vector<8x32xf32>
    %177 = tpu.matmul %167, %176, %cst_100 {dimension_numbers = #tpu.dot_dimension_numbers<[1], [0], [0], [1], [0, 0, 1, 1], [], []>} : vector<8x32xf32>, vector<32x32xf32>, vector<8x32xf32> -> vector<8x32xf32>
    %c1_101 = arith.constant 1 : index
    %c3_102 = arith.constant 3 : index
    %c0_103 = arith.constant 0 : index
    %178 = vector.load %arg8[%c1_101, %c3_102, %c0_103] : memref<3x10x128xf32, #tpu.memory_space<vmem>>, vector<1x1x32xf32>
    %179 = vector.shape_cast %178 : vector<1x1x32xf32> to vector<1x32xf32>
    %180 = vector.broadcast %179 : vector<1x32xf32> to vector<8x32xf32>
    %181 = arith.addf %177, %180 : vector<8x32xf32>
    %c1_104 = arith.constant 1 : index
    %c2_105 = arith.constant 2 : index
    %c0_106 = arith.constant 0 : index
    %c0_107 = arith.constant 0 : index
    %182 = vector.load %arg4[%c1_104, %c2_105, %c0_106, %c0_107] : memref<2x4x32x32xf32, #tpu.memory_space<vmem>>, vector<1x1x32x32xf32>
    %183 = vector.shape_cast %182 : vector<1x1x32x32xf32> to vector<32x32xf32>
    %cst_108 = arith.constant dense<0.000000e+00> : vector<8x32xf32>
    %184 = tpu.matmul %167, %183, %cst_108 {dimension_numbers = #tpu.dot_dimension_numbers<[1], [0], [0], [1], [0, 0, 1, 1], [], []>} : vector<8x32xf32>, vector<32x32xf32>, vector<8x32xf32> -> vector<8x32xf32>
    %c1_109 = arith.constant 1 : index
    %c4_110 = arith.constant 4 : index
    %c0_111 = arith.constant 0 : index
    %185 = vector.load %arg8[%c1_109, %c4_110, %c0_111] : memref<3x10x128xf32, #tpu.memory_space<vmem>>, vector<1x1x32xf32>
    %186 = vector.shape_cast %185 : vector<1x1x32xf32> to vector<1x32xf32>
    %187 = vector.broadcast %186 : vector<1x32xf32> to vector<8x32xf32>
    %188 = arith.addf %184, %187 : vector<8x32xf32>
    %189 = vector.shape_cast %174 : vector<8x32xf32> to vector<8x4x8xf32>
    %190 = tpu.transpose %189, [1, 0, 2] : vector<8x4x8xf32> -> vector<4x8x8xf32>
    %191 = vector.shape_cast %181 : vector<8x32xf32> to vector<8x4x8xf32>
    %192 = tpu.transpose %191, [1, 0, 2] : vector<8x4x8xf32> -> vector<4x8x8xf32>
    %193 = vector.shape_cast %188 : vector<8x32xf32> to vector<8x4x8xf32>
    %194 = tpu.transpose %193, [1, 0, 2] : vector<8x4x8xf32> -> vector<4x8x8xf32>
    "tpu.trace_start"() <{level = 10 : i32, message = "hqd,hkd->hqk"}> : () -> ()
    %cst_112 = arith.constant dense<0.000000e+00> : vector<4x8x8xf32>
    %195 = tpu.matmul %190, %192, %cst_112 {dimension_numbers = #tpu.dot_dimension_numbers<[2], [2], [1], [1], [0, 0, 0, 1, 1, 1], [0], [0]>} : vector<4x8x8xf32>, vector<4x8x8xf32>, vector<4x8x8xf32> -> vector<4x8x8xf32>
    "tpu.trace_stop"() : () -> ()
    %196 = arith.addf %195, %7 : vector<4x8x8xf32>
    %cst_113 = arith.constant dense<0xFF800000> : vector<4x8xf32>
    %197 = vector.multi_reduction <maximumf>, %196, %cst_113 [2] : vector<4x8x8xf32> to vector<4x8xf32>
    %198 = vector.shape_cast %197 : vector<4x8xf32> to vector<4x8x1xf32>
    %199 = vector.broadcast %198 : vector<4x8x1xf32> to vector<4x8x8xf32>
    %200 = arith.subf %196, %199 : vector<4x8x8xf32>
    %201 = math.exp %200 : vector<4x8x8xf32>
    %cst_114 = arith.constant dense<0.000000e+00> : vector<4x8xf32>
    %202 = vector.multi_reduction <add>, %201, %cst_114 [2] : vector<4x8x8xf32> to vector<4x8xf32>
    %203 = vector.shape_cast %202 : vector<4x8xf32> to vector<4x8x1xf32>
    %204 = tpu.reciprocal %203 {approx = true} : vector<4x8x1xf32> -> vector<4x8x1xf32>
    %205 = vector.broadcast %204 : vector<4x8x1xf32> to vector<4x8x8xf32>
    %206 = arith.mulf %201, %205 : vector<4x8x8xf32>
    "tpu.trace_start"() <{level = 10 : i32, message = "hqk,hkd->hqd"}> : () -> ()
    %cst_115 = arith.constant dense<0.000000e+00> : vector<4x8x8xf32>
    %207 = tpu.matmul %206, %194, %cst_115 {dimension_numbers = #tpu.dot_dimension_numbers<[2], [1], [1], [2], [0, 0, 0, 1, 1, 2], [0], [0]>} : vector<4x8x8xf32>, vector<4x8x8xf32>, vector<4x8x8xf32> -> vector<4x8x8xf32>
    "tpu.trace_stop"() : () -> ()
    %208 = tpu.transpose %207, [1, 0, 2] : vector<4x8x8xf32> -> vector<8x4x8xf32>
    %209 = vector.shape_cast %208 : vector<8x4x8xf32> to vector<8x32xf32>
    %c1_116 = arith.constant 1 : index
    %c3_117 = arith.constant 3 : index
    %c0_118 = arith.constant 0 : index
    %c0_119 = arith.constant 0 : index
    %210 = vector.load %arg4[%c1_116, %c3_117, %c0_118, %c0_119] : memref<2x4x32x32xf32, #tpu.memory_space<vmem>>, vector<1x1x32x32xf32>
    %211 = vector.shape_cast %210 : vector<1x1x32x32xf32> to vector<32x32xf32>
    %cst_120 = arith.constant dense<0.000000e+00> : vector<8x32xf32>
    %212 = tpu.matmul %209, %211, %cst_120 {dimension_numbers = #tpu.dot_dimension_numbers<[1], [0], [0], [1], [0, 0, 1, 1], [], []>} : vector<8x32xf32>, vector<32x32xf32>, vector<8x32xf32> -> vector<8x32xf32>
    %213 = arith.addf %141, %212 : vector<8x32xf32>
    %c1_121 = arith.constant 1 : index
    %c5_122 = arith.constant 5 : index
    %c0_123 = arith.constant 0 : index
    %214 = vector.load %arg8[%c1_121, %c5_122, %c0_123] : memref<3x10x128xf32, #tpu.memory_space<vmem>>, vector<1x1x32xf32>
    %215 = vector.shape_cast %214 : vector<1x1x32xf32> to vector<1x32xf32>
    %216 = vector.broadcast %215 : vector<1x32xf32> to vector<8x32xf32>
    %217 = arith.addf %213, %216 : vector<8x32xf32>
    %c1_124 = arith.constant 1 : index
    %c6_125 = arith.constant 6 : index
    %c0_126 = arith.constant 0 : index
    %218 = vector.load %arg8[%c1_124, %c6_125, %c0_126] : memref<3x10x128xf32, #tpu.memory_space<vmem>>, vector<1x1x32xf32>
    %219 = vector.shape_cast %218 : vector<1x1x32xf32> to vector<1x32xf32>
    %c1_127 = arith.constant 1 : index
    %c7_128 = arith.constant 7 : index
    %c0_129 = arith.constant 0 : index
    %220 = vector.load %arg8[%c1_127, %c7_128, %c0_129] : memref<3x10x128xf32, #tpu.memory_space<vmem>>, vector<1x1x32xf32>
    %221 = vector.shape_cast %220 : vector<1x1x32xf32> to vector<1x32xf32>
    %cst_130 = arith.constant dense<0.000000e+00> : vector<8xf32>
    %222 = vector.multi_reduction <add>, %217, %cst_130 [1] : vector<8x32xf32> to vector<8xf32>
    %223 = vector.shape_cast %222 : vector<8xf32> to vector<8x1xf32>
    %cst_131 = arith.constant 3.200000e+01 : f32
    %224 = vector.broadcast %cst_131 : f32 to vector<8x1xf32>
    %225 = arith.divf %223, %224 : vector<8x1xf32>
    %226 = vector.broadcast %225 : vector<8x1xf32> to vector<8x32xf32>
    %227 = arith.subf %217, %226 : vector<8x32xf32>
    %228 = arith.mulf %227, %227 : vector<8x32xf32>
    %cst_132 = arith.constant dense<0.000000e+00> : vector<8xf32>
    %229 = vector.multi_reduction <add>, %228, %cst_132 [1] : vector<8x32xf32> to vector<8xf32>
    %230 = vector.shape_cast %229 : vector<8xf32> to vector<8x1xf32>
    %cst_133 = arith.constant 3.200000e+01 : f32
    %231 = vector.broadcast %cst_133 : f32 to vector<8x1xf32>
    %232 = arith.divf %230, %231 : vector<8x1xf32>
    %233 = vector.broadcast %225 : vector<8x1xf32> to vector<8x32xf32>
    %234 = arith.subf %217, %233 : vector<8x32xf32>
    %cst_134 = arith.constant 9.99999974E-6 : f32
    %235 = vector.broadcast %cst_134 : f32 to vector<8x1xf32>
    %236 = arith.addf %232, %235 : vector<8x1xf32>
    %237 = math.rsqrt %236 : vector<8x1xf32>
    %238 = vector.broadcast %237 : vector<8x1xf32> to vector<8x32xf32>
    %239 = arith.mulf %234, %238 : vector<8x32xf32>
    %240 = vector.broadcast %219 : vector<1x32xf32> to vector<8x32xf32>
    %241 = arith.mulf %239, %240 : vector<8x32xf32>
    %242 = vector.broadcast %221 : vector<1x32xf32> to vector<8x32xf32>
    %243 = arith.addf %241, %242 : vector<8x32xf32>
    %c1_135 = arith.constant 1 : index
    %c0_136 = arith.constant 0 : index
    %c0_137 = arith.constant 0 : index
    %244 = vector.load %arg5[%c1_135, %c0_136, %c0_137] : memref<2x32x128xf32, #tpu.memory_space<vmem>>, vector<1x32x128xf32>
    %245 = vector.shape_cast %244 : vector<1x32x128xf32> to vector<32x128xf32>
    %cst_138 = arith.constant dense<0.000000e+00> : vector<8x128xf32>
    %246 = tpu.matmul %243, %245, %cst_138 {dimension_numbers = #tpu.dot_dimension_numbers<[1], [0], [0], [1], [0, 0, 1, 1], [], []>} : vector<8x32xf32>, vector<32x128xf32>, vector<8x128xf32> -> vector<8x128xf32>
    %c1_139 = arith.constant 1 : index
    %c8_140 = arith.constant 8 : index
    %c0_141 = arith.constant 0 : index
    %247 = vector.load %arg8[%c1_139, %c8_140, %c0_141] : memref<3x10x128xf32, #tpu.memory_space<vmem>>, vector<1x1x128xf32>
    %248 = vector.shape_cast %247 : vector<1x1x128xf32> to vector<1x128xf32>
    %249 = vector.broadcast %248 : vector<1x128xf32> to vector<8x128xf32>
    %250 = arith.addf %246, %249 : vector<8x128xf32>
    %251 = arith.mulf %250, %250 : vector<8x128xf32>
    %252 = arith.mulf %250, %251 : vector<8x128xf32>
    %cst_142 = arith.constant 4.471500e-02 : f32
    %253 = vector.broadcast %cst_142 : f32 to vector<8x128xf32>
    %254 = arith.mulf %253, %252 : vector<8x128xf32>
    %255 = arith.addf %250, %254 : vector<8x128xf32>
    %cst_143 = arith.constant 0.797884583 : f32
    %256 = vector.broadcast %cst_143 : f32 to vector<8x128xf32>
    %257 = arith.mulf %256, %255 : vector<8x128xf32>
    %258 = math.tanh %257 : vector<8x128xf32>
    %cst_144 = arith.constant 1.000000e+00 : f32
    %259 = vector.broadcast %cst_144 : f32 to vector<8x128xf32>
    %260 = arith.addf %259, %258 : vector<8x128xf32>
    %cst_145 = arith.constant 5.000000e-01 : f32
    %261 = vector.broadcast %cst_145 : f32 to vector<8x128xf32>
    %262 = arith.mulf %261, %260 : vector<8x128xf32>
    %263 = arith.mulf %250, %262 : vector<8x128xf32>
    %c1_146 = arith.constant 1 : index
    %c0_147 = arith.constant 0 : index
    %c0_148 = arith.constant 0 : index
    %264 = vector.load %arg6[%c1_146, %c0_147, %c0_148] : memref<2x128x32xf32, #tpu.memory_space<vmem>>, vector<1x128x32xf32>
    %265 = vector.shape_cast %264 : vector<1x128x32xf32> to vector<128x32xf32>
    %cst_149 = arith.constant dense<0.000000e+00> : vector<8x32xf32>
    %266 = tpu.matmul %263, %265, %cst_149 {dimension_numbers = #tpu.dot_dimension_numbers<[1], [0], [0], [1], [0, 0, 1, 1], [], []>} : vector<8x128xf32>, vector<128x32xf32>, vector<8x32xf32> -> vector<8x32xf32>
    %267 = arith.addf %217, %266 : vector<8x32xf32>
    %c1_150 = arith.constant 1 : index
    %c9_151 = arith.constant 9 : index
    %c0_152 = arith.constant 0 : index
    %268 = vector.load %arg8[%c1_150, %c9_151, %c0_152] : memref<3x10x128xf32, #tpu.memory_space<vmem>>, vector<1x1x32xf32>
    %269 = vector.shape_cast %268 : vector<1x1x32xf32> to vector<1x32xf32>
    %270 = vector.broadcast %269 : vector<1x32xf32> to vector<8x32xf32>
    %271 = arith.addf %267, %270 : vector<8x32xf32>
    %c2_153 = arith.constant 2 : index
    %c0_154 = arith.constant 0 : index
    %c0_155 = arith.constant 0 : index
    %272 = vector.load %arg8[%c2_153, %c0_154, %c0_155] : memref<3x10x128xf32, #tpu.memory_space<vmem>>, vector<1x1x32xf32>
    %273 = vector.shape_cast %272 : vector<1x1x32xf32> to vector<1x32xf32>
    %c2_156 = arith.constant 2 : index
    %c1_157 = arith.constant 1 : index
    %c0_158 = arith.constant 0 : index
    %274 = vector.load %arg8[%c2_156, %c1_157, %c0_158] : memref<3x10x128xf32, #tpu.memory_space<vmem>>, vector<1x1x32xf32>
    %275 = vector.shape_cast %274 : vector<1x1x32xf32> to vector<1x32xf32>
    %cst_159 = arith.constant dense<0.000000e+00> : vector<8xf32>
    %276 = vector.multi_reduction <add>, %271, %cst_159 [1] : vector<8x32xf32> to vector<8xf32>
    %277 = vector.shape_cast %276 : vector<8xf32> to vector<8x1xf32>
    %cst_160 = arith.constant 3.200000e+01 : f32
    %278 = vector.broadcast %cst_160 : f32 to vector<8x1xf32>
    %279 = arith.divf %277, %278 : vector<8x1xf32>
    %280 = vector.broadcast %279 : vector<8x1xf32> to vector<8x32xf32>
    %281 = arith.subf %271, %280 : vector<8x32xf32>
    %282 = arith.mulf %281, %281 : vector<8x32xf32>
    %cst_161 = arith.constant dense<0.000000e+00> : vector<8xf32>
    %283 = vector.multi_reduction <add>, %282, %cst_161 [1] : vector<8x32xf32> to vector<8xf32>
    %284 = vector.shape_cast %283 : vector<8xf32> to vector<8x1xf32>
    %cst_162 = arith.constant 3.200000e+01 : f32
    %285 = vector.broadcast %cst_162 : f32 to vector<8x1xf32>
    %286 = arith.divf %284, %285 : vector<8x1xf32>
    %287 = vector.broadcast %279 : vector<8x1xf32> to vector<8x32xf32>
    %288 = arith.subf %271, %287 : vector<8x32xf32>
    %cst_163 = arith.constant 9.99999974E-6 : f32
    %289 = vector.broadcast %cst_163 : f32 to vector<8x1xf32>
    %290 = arith.addf %286, %289 : vector<8x1xf32>
    %291 = math.rsqrt %290 : vector<8x1xf32>
    %292 = vector.broadcast %291 : vector<8x1xf32> to vector<8x32xf32>
    %293 = arith.mulf %288, %292 : vector<8x32xf32>
    %294 = vector.broadcast %273 : vector<1x32xf32> to vector<8x32xf32>
    %295 = arith.mulf %293, %294 : vector<8x32xf32>
    %296 = vector.broadcast %275 : vector<1x32xf32> to vector<8x32xf32>
    %297 = arith.addf %295, %296 : vector<8x32xf32>
    %c0_164 = arith.constant 0 : index
    %c0_165 = arith.constant 0 : index
    %298 = vector.load %arg7[%c0_164, %c0_165] : memref<32x128xf32, #tpu.memory_space<vmem>>, vector<32x128xf32>
    %cst_166 = arith.constant dense<0.000000e+00> : vector<8x128xf32>
    %299 = tpu.matmul %297, %298, %cst_166 {dimension_numbers = #tpu.dot_dimension_numbers<[1], [0], [0], [1], [0, 0, 1, 1], [], []>} : vector<8x32xf32>, vector<32x128xf32>, vector<8x128xf32> -> vector<8x128xf32>
    %300 = vector.shape_cast %299 : vector<8x128xf32> to vector<1x8x128xf32>
    %c0_167 = arith.constant 0 : index
    %c0_168 = arith.constant 0 : index
    %c0_169 = arith.constant 0 : index
    %301 = vector.load %arg9[%c0_167, %c0_168, %c0_169] : memref<1x8x128xf32, #tpu.memory_space<vmem>>, vector<1x8x128xf32>
    tpu.vector_store %arg9[%c0_167, %c0_168, %c0_169], %300 {strides = array<i32>} : memref<1x8x128xf32, #tpu.memory_space<vmem>>, vector<1x8x128xf32>,
    return
  }
  func.func @transform_0(%arg0: i32) -> (i32, i32, i32) {
    %c0_i32 = arith.constant 0 : i32
    %c0_i32_0 = arith.constant 0 : i32
    %c0_i32_1 = arith.constant 0 : i32
    return %arg0, %c0_i32, %c0_i32_0 : i32, i32, i32
  }
  func.func @transform_1(%arg0: i32) -> (i32, i32, i32) {
    %c0_i32 = arith.constant 0 : i32
    %c0_i32_0 = arith.constant 0 : i32
    %c0_i32_1 = arith.constant 0 : i32
    return %arg0, %c0_i32, %c0_i32_0 : i32, i32, i32
  }
  func.func @transform_2(%arg0: i32) -> (i32, i32, i32) {
    %c0_i32 = arith.constant 0 : i32
    %c0_i32_0 = arith.constant 0 : i32
    %c0_i32_1 = arith.constant 0 : i32
    %c0_i32_2 = arith.constant 0 : i32
    return %c0_i32, %c0_i32_0, %c0_i32_1 : i32, i32, i32
  }
  func.func @transform_3(%arg0: i32) -> (i32, i32, i32, i32) {
    %c0_i32 = arith.constant 0 : i32
    %c0_i32_0 = arith.constant 0 : i32
    %c0_i32_1 = arith.constant 0 : i32
    %c0_i32_2 = arith.constant 0 : i32
    %c0_i32_3 = arith.constant 0 : i32
    return %c0_i32, %c0_i32_0, %c0_i32_1, %c0_i32_2 : i32, i32, i32, i32
  }
  func.func @transform_4(%arg0: i32) -> (i32, i32, i32) {
    %c0_i32 = arith.constant 0 : i32
    %c0_i32_0 = arith.constant 0 : i32
    %c0_i32_1 = arith.constant 0 : i32
    %c0_i32_2 = arith.constant 0 : i32
    return %c0_i32, %c0_i32_0, %c0_i32_1 : i32, i32, i32
  }
  func.func @transform_5(%arg0: i32) -> (i32, i32, i32) {
    %c0_i32 = arith.constant 0 : i32
    %c0_i32_0 = arith.constant 0 : i32
    %c0_i32_1 = arith.constant 0 : i32
    %c0_i32_2 = arith.constant 0 : i32
    return %c0_i32, %c0_i32_0, %c0_i32_1 : i32, i32, i32
  }
  func.func @transform_6(%arg0: i32) -> (i32, i32) {
    %c0_i32 = arith.constant 0 : i32
    %c0_i32_0 = arith.constant 0 : i32
    %c0_i32_1 = arith.constant 0 : i32
    return %c0_i32, %c0_i32_0 : i32, i32
  }
  func.func @transform_7(%arg0: i32) -> (i32, i32, i32) {
    %c0_i32 = arith.constant 0 : i32
    %c0_i32_0 = arith.constant 0 : i32
    %c0_i32_1 = arith.constant 0 : i32
    %c0_i32_2 = arith.constant 0 : i32
    return %c0_i32, %c0_i32_0, %c0_i32_1 : i32, i32, i32
  }
  func.func @transform_8(%arg0: i32) -> (i32, i32, i32) {
    %c0_i32 = arith.constant 0 : i32
    %c0_i32_0 = arith.constant 0 : i32
    %c0_i32_1 = arith.constant 0 : i32
    return %arg0, %c0_i32, %c0_i32_0 : i32, i32, i32
  }
}

</mosaic_0001>

<llo_original>
// kernel: stack_forward.1
$region0: #{stack_forward.1}
  #allocation0 [shape = 'u32[]', space=smem, size = 0x4, offset = 0x4, fixed_abs, tag = 'smem constant byte address 0x4 - core index']
  #allocation1 [shape = 'u32[144,128]{1,0:T(1,128)}', space=vmem, size = 0x12000, scoped, tag = 'internal scratch']
  %s0 = inlined_call_operand.vmem [shape: f32[2,8,32], index: 0, kind: input, shape index: {}]
  %s1 = inlined_call_operand.vmem [shape: f32[2,1,8], index: 1, kind: input, shape index: {}]
  %s2 = inlined_call_operand.vmem [shape: f32[1,8,32], index: 2, kind: input, shape index: {}]
  %s3 = inlined_call_operand.vmem [shape: f32[2,4,32,32], index: 3, kind: input, shape index: {}]
  %s4 = inlined_call_operand.vmem [shape: f32[2,32,128], index: 4, kind: input, shape index: {}]
  %s5 = inlined_call_operand.vmem [shape: f32[2,128,32], index: 5, kind: input, shape index: {}]
  %s6 = inlined_call_operand.vmem [shape: f32[32,128], index: 6, kind: input, shape index: {}]
  %s7 = inlined_call_operand.vmem [shape: f32[3,10,128], index: 7, kind: input, shape index: {}]
  %s8 = inlined_call_operand.hbm [shape: f32[2,8,128], index: 8, kind: output, shape index: {}]
  %s9 = sld [smem:[#allocation0]]
  $region65: #{stack_forward.1} parent=0
    _
  %s11 = ssub.s32 1, %s9
  %s12 = scalar_select 0, %s11, %s9
  $region1: #{stack_forward.1} parent=0
    #allocation2 [shape = 'u8[8192]{0}', space=vmem, size = 0x2000, scoped, tag = 'output window, operand 0']
    #allocation3 [shape = 's32[2]{0}', space=sflag, size = 0x8, scoped, tag = 'scoped memory for stack_forward.1']
    %13 = vsyncpa [#allocation3], 0
    %s14 = scalar_lea.sflag [#allocation3], 1
    %15 = vsyncpa %s14, 0
    loop: start=0, step=1, limit=4
    $region2: #{stack_forward.1} parent=1 // loop_pre_header
      _
    $region3: #{stack_forward.1} parent=1 // loop_header
      %s17 = sphi 0, %s21
      %p18 = scmp.ge.s32.totalorder %s17, 4
      %s27 = sphi 0, %s29
      %s30 = sphi 0, %s27
      %s31 = sphi 0, %s30
      %s47 = sphi 0, %s31
      %s53 = sphi 0, %s55
      %s56 = sphi 0, %s53
      %s57 = sphi 0, %s56
      %s73 = sphi 0, %s57
      %s77 = sphi 0, %s77
      %s79 = sphi 0, %s77
      %s80 = sphi 0, %s79
      %s94 = sphi 0, %s80
      %s98 = sphi 0, %s98
      %s100 = sphi 0, %s98
      %s101 = sphi 0, %s100
      %s115 = sphi 0, %s101
      %s119 = sphi 0, %s119
      %s121 = sphi 0, %s119
      %s122 = sphi 0, %s121
      %s136 = sphi 0, %s122
      %s140 = sphi 0, %s140
      %s142 = sphi 0, %s140
      %s143 = sphi 0, %s142
      %s157 = sphi 0, %s143
      %s161 = sphi 0, %s161
      %s163 = sphi 0, %s161
      %s164 = sphi 0, %s163
      %s178 = sphi 0, %s164
      %s182 = sphi 0, %s182
      %s184 = sphi 0, %s182
      %s185 = sphi 0, %s184
      %s199 = sphi 0, %s185
      %s205 = sphi 0, %s207
      %s208 = sphi 0, %s205
      %s209 = sphi 0, %s208
      %s225 = sphi 0, %s209
    $region4: #{stack_forward.1} parent=1 // loop_header_branch
      %20 = sbr.rel (%p18) target = $region8
    $region5: #{stack_forward.1} parent=1 // loop_body
      %s22 = ssub.s32 %s17, 1
      %s23 = ssub.s32 %s17, 2
      %s24 = sadd.s32 %s17, 1
      %s25 = ssub.s32 %s17, %s24
      %p26 = scmp.eq.s32.totalorder %s25, 0
      %s28 = sadd.s32 %s27, 1
      %s29 = scalar_select %p26, %s27, %s28
      %p32 = pneg %p26
      %p33 = scmp.eq.s32.totalorder %s17, 1
      %p34 = por %p32, %p33
      %p35 = scmp.ne.s32.totalorder %s27, %s30
      %p36 = scmp.eq.s32.totalorder %s17, 0
      %p37 = por %p35, %p36
      %p38 = scmp.ne.s32.totalorder %s27, %s30
      %p39 = scmp.eq.s32.totalorder %s22, 1
      %p40 = por %p38, %p39
      %p41 = scmp.ne.s32.totalorder %s30, %s31
      %p42 = scmp.eq.s32.totalorder %s22, 0
      %p43 = por %p41, %p42
      %p44 = scmp.ne.s32.totalorder %s30, %s31
      %p45 = scmp.eq.s32.totalorder %s23, 1
      %p46 = por %p44, %p45
      %p48 = scmp.ne.s32.totalorder %s31, %s47
      %p49 = scmp.eq.s32.totalorder %s23, 0
      %p50 = por %p48, %p49
      %s51 = ssub.s32 %s17, %s24
      %p52 = scmp.eq.s32.totalorder %s51, 0
      %s54 = sadd.s32 %s53, 1
      %s55 = scalar_select %p52, %s53, %s54
      %p58 = pneg %p52
      %p59 = scmp.eq.s32.totalorder %s17, 1
      %p60 = por %p58, %p59
      %p61 = scmp.ne.s32.totalorder %s53, %s56
      %p62 = scmp.eq.s32.totalorder %s17, 0
      %p63 = por %p61, %p62
      %p64 = scmp.ne.s32.totalorder %s53, %s56
      %p65 = scmp.eq.s32.totalorder %s22, 1
      %p66 = por %p64, %p65
      %p67 = scmp.ne.s32.totalorder %s56, %s57
      %p68 = scmp.eq.s32.totalorder %s22, 0
      %p69 = por %p67, %p68
      %p70 = scmp.ne.s32.totalorder %s56, %s57
      %p71 = scmp.eq.s32.totalorder %s23, 1
      %p72 = por %p70, %p71
      %p74 = scmp.ne.s32.totalorder %s57, %s73
      %p75 = scmp.eq.s32.totalorder %s23, 0
      %p76 = por %p74, %p75
      %s78 = sadd.s32 %s77, 1
      %p81 = scmp.eq.s32.totalorder %s17, 1
      %p82 = scmp.ne.s32.totalorder %s77, %s79
      %p83 = scmp.eq.s32.totalorder %s17, 0
      %p84 = por %p82, %p83
      %p85 = scmp.ne.s32.totalorder %s77, %s79
      %p86 = scmp.eq.s32.totalorder %s22, 1
      %p87 = por %p85, %p86
      %p88 = scmp.ne.s32.totalorder %s79, %s80
      %p89 = scmp.eq.s32.totalorder %s22, 0
      %p90 = por %p88, %p89
      %p91 = scmp.ne.s32.totalorder %s79, %s80
      %p92 = scmp.eq.s32.totalorder %s23, 1
      %p93 = por %p91, %p92
      %p95 = scmp.ne.s32.totalorder %s80, %s94
      %p96 = scmp.eq.s32.totalorder %s23, 0
      %p97 = por %p95, %p96
      %s99 = sadd.s32 %s98, 1
      %p102 = scmp.eq.s32.totalorder %s17, 1
      %p103 = scmp.ne.s32.totalorder %s98, %s100
      %p104 = scmp.eq.s32.totalorder %s17, 0
      %p105 = por %p103, %p104
      %p106 = scmp.ne.s32.totalorder %s98, %s100
      %p107 = scmp.eq.s32.totalorder %s22, 1
      %p108 = por %p106, %p107
      %p109 = scmp.ne.s32.totalorder %s100, %s101
      %p110 = scmp.eq.s32.totalorder %s22, 0
      %p111 = por %p109, %p110
      %p112 = scmp.ne.s32.totalorder %s100, %s101
      %p113 = scmp.eq.s32.totalorder %s23, 1
      %p114 = por %p112, %p113
      %p116 = scmp.ne.s32.totalorder %s101, %s115
      %p117 = scmp.eq.s32.totalorder %s23, 0
      %p118 = por %p116, %p117
      %s120 = sadd.s32 %s119, 1
      %p123 = scmp.eq.s32.totalorder %s17, 1
      %p124 = scmp.ne.s32.totalorder %s119, %s121
      %p125 = scmp.eq.s32.totalorder %s17, 0
      %p126 = por %p124, %p125
      %p127 = scmp.ne.s32.totalorder %s119, %s121
      %p128 = scmp.eq.s32.totalorder %s22, 1
      %p129 = por %p127, %p128
      %p130 = scmp.ne.s32.totalorder %s121, %s122
      %p131 = scmp.eq.s32.totalorder %s22, 0
      %p132 = por %p130, %p131
      %p133 = scmp.ne.s32.totalorder %s121, %s122
      %p134 = scmp.eq.s32.totalorder %s23, 1
      %p135 = por %p133, %p134
      %p137 = scmp.ne.s32.totalorder %s122, %s136
      %p138 = scmp.eq.s32.totalorder %s23, 0
      %p139 = por %p137, %p138
      %s141 = sadd.s32 %s140, 1
      %p144 = scmp.eq.s32.totalorder %s17, 1
      %p145 = scmp.ne.s32.totalorder %s140, %s142
      %p146 = scmp.eq.s32.totalorder %s17, 0
      %p147 = por %p145, %p146
      %p148 = scmp.ne.s32.totalorder %s140, %s142
      %p149 = scmp.eq.s32.totalorder %s22, 1
      %p150 = por %p148, %p149
      %p151 = scmp.ne.s32.totalorder %s142, %s143
      %p152 = scmp.eq.s32.totalorder %s22, 0
      %p153 = por %p151, %p152
      %p154 = scmp.ne.s32.totalorder %s142, %s143
      %p155 = scmp.eq.s32.totalorder %s23, 1
      %p156 = por %p154, %p155
      %p158 = scmp.ne.s32.totalorder %s143, %s157
      %p159 = scmp.eq.s32.totalorder %s23, 0
      %p160 = por %p158, %p159
      %s162 = sadd.s32 %s161, 1
      %p165 = scmp.eq.s32.totalorder %s17, 1
      %p166 = scmp.ne.s32.totalorder %s161, %s163
      %p167 = scmp.eq.s32.totalorder %s17, 0
      %p168 = por %p166, %p167
      %p169 = scmp.ne.s32.totalorder %s161, %s163
      %p170 = scmp.eq.s32.totalorder %s22, 1
      %p171 = por %p169, %p170
      %p172 = scmp.ne.s32.totalorder %s163, %s164
      %p173 = scmp.eq.s32.totalorder %s22, 0
      %p174 = por %p172, %p173
      %p175 = scmp.ne.s32.totalorder %s163, %s164
      %p176 = scmp.eq.s32.totalorder %s23, 1
      %p177 = por %p175, %p176
      %p179 = scmp.ne.s32.totalorder %s164, %s178
      %p180 = scmp.eq.s32.totalorder %s23, 0
      %p181 = por %p179, %p180
      %s183 = sadd.s32 %s182, 1
      %p186 = scmp.eq.s32.totalorder %s17, 1
      %p187 = scmp.ne.s32.totalorder %s182, %s184
      %p188 = scmp.eq.s32.totalorder %s17, 0
      %p189 = por %p187, %p188
      %p190 = scmp.ne.s32.totalorder %s182, %s184
      %p191 = scmp.eq.s32.totalorder %s22, 1
      %p192 = por %p190, %p191
      %p193 = scmp.ne.s32.totalorder %s184, %s185
      %p194 = scmp.eq.s32.totalorder %s22, 0
      %p195 = por %p193, %p194
      %p196 = scmp.ne.s32.totalorder %s184, %s185
      %p197 = scmp.eq.s32.totalorder %s23, 1
      %p198 = por %p196, %p197
      %p200 = scmp.ne.s32.totalorder %s185, %s199
      %p201 = scmp.eq.s32.totalorder %s23, 0
      %p202 = por %p200, %p201
      %s203 = ssub.s32 %s17, %s24
      %p204 = scmp.eq.s32.totalorder %s203, 0
      %s206 = sadd.s32 %s205, 1
      %s207 = scalar_select %p204, %s205, %s206
      %p210 = pneg %p204
      %p211 = scmp.eq.s32.totalorder %s17, 1
      %p212 = por %p210, %p211
      %p213 = scmp.ne.s32.totalorder %s205, %s208
      %p214 = scmp.eq.s32.totalorder %s17, 0
      %p215 = por %p213, %p214
      %p216 = scmp.ne.s32.totalorder %s205, %s208
      %p217 = scmp.eq.s32.totalorder %s22, 1
      %p218 = por %p216, %p217
      %p219 = scmp.ne.s32.totalorder %s208, %s209
      %p220 = scmp.eq.s32.totalorder %s22, 0
      %p221 = por %p219, %p220
      %p222 = scmp.ne.s32.totalorder %s208, %s209
      %p223 = scmp.eq.s32.totalorder %s23, 1
      %p224 = por %p222, %p223
      %p226 = scmp.ne.s32.totalorder %s209, %s225
      %p227 = scmp.eq.s32.totalorder %s23, 0
      %p228 = por %p226, %p227
      %p229 = scmp.le.s32.totalorder 1, %s17
      %p230 = scmp.lt.s32.totalorder %s17, 3
      %p231 = pnand %p229, %p230
      %p232 = pneg %p231
      // Predicated region
      $region9: #{stack_forward.1} parent=5 // pred_check
        _
      $region10: #{stack_forward.1} parent=5 // pred_check_branch
        %234 = sbr.rel (%p231) target = $region12
      $region11: #{stack_forward.1} parent=5 // pred_region
        %s235 = ssub.s32 %s17, 1
        // Predicated region
        $region13: #{stack_forward.1} parent=11 // pred_check
          %p236 = pneg %p90
        $region14: #{stack_forward.1} parent=11 // pred_check_branch
          %238 = sbr.rel (%p236) target = $region16
        $region15: #{stack_forward.1} parent=11 // pred_region
          _
        $region16: #{stack_forward.1} parent=11 // pred_fallthru
          _
        // Predicated region
        $region17: #{stack_forward.1} parent=11 // pred_check
          %p239 = pneg %p111
        $region18: #{stack_forward.1} parent=11 // pred_check_branch
          %241 = sbr.rel (%p239) target = $region20
        $region19: #{stack_forward.1} parent=11 // pred_region
          _
        $region20: #{stack_forward.1} parent=11 // pred_fallthru
          _
        // Predicated region
        $region21: #{stack_forward.1} parent=11 // pred_check
          %p242 = pneg %p132
        $region22: #{stack_forward.1} parent=11 // pred_check_branch
          %244 = sbr.rel (%p242) target = $region24
        $region23: #{stack_forward.1} parent=11 // pred_region
          _
        $region24: #{stack_forward.1} parent=11 // pred_fallthru
          _
        // Predicated region
        $region25: #{stack_forward.1} parent=11 // pred_check
          %p245 = pneg %p153
        $region26: #{stack_forward.1} parent=11 // pred_check_branch
          %247 = sbr.rel (%p245) target = $region28
        $region27: #{stack_forward.1} parent=11 // pred_region
          _
        $region28: #{stack_forward.1} parent=11 // pred_fallthru
          _
        // Predicated region
        $region29: #{stack_forward.1} parent=11 // pred_check
          %p248 = pneg %p174
        $region30: #{stack_forward.1} parent=11 // pred_check_branch
          %250 = sbr.rel (%p248) target = $region32
        $region31: #{stack_forward.1} parent=11 // pred_region
          _
        $region32: #{stack_forward.1} parent=11 // pred_fallthru
          _
        // Predicated region
        $region33: #{stack_forward.1} parent=11 // pred_check
          %p251 = pneg %p195
        $region34: #{stack_forward.1} parent=11 // pred_check_branch
          %253 = sbr.rel (%p251) target = $region36
        $region35: #{stack_forward.1} parent=11 // pred_region
          _
        $region36: #{stack_forward.1} parent=11 // pred_fallthru
          _
      $region12: #{stack_forward.1} parent=5 // pred_fallthru
        _
      %p254 = scmp.lt.s32.totalorder %s17, 2
      // Predicated region
      $region37: #{stack_forward.1} parent=5 // pred_check
        %p255 = pneg %p254
      $region38: #{stack_forward.1} parent=5 // pred_check_branch
        %257 = sbr.rel (%p255) target = $region40
      $region39: #{stack_forward.1} parent=5 // pred_region
        // Predicated region
        $region41: #{stack_forward.1} parent=39 // pred_check
          %p258 = pneg %p37
        $region42: #{stack_forward.1} parent=39 // pred_check_branch
          %260 = sbr.rel (%p258) target = $region44
        $region43: #{stack_forward.1} parent=39 // pred_region
          %p261 = scmp.lt.s32.totalorder %s17, 1
          %s262 = scalar_select %p261, %s17, 1
          %s263 = smul.addr %s262, 8
          %s264 = scalar_lea.vmem %s0, %s263
        $region44: #{stack_forward.1} parent=39 // pred_fallthru
          _
        // Predicated region
        $region45: #{stack_forward.1} parent=39 // pred_check
          %p265 = pneg %p63
        $region46: #{stack_forward.1} parent=39 // pred_check_branch
          %267 = sbr.rel (%p265) target = $region48
        $region47: #{stack_forward.1} parent=39 // pred_region
          %p268 = scmp.lt.s32.totalorder %s17, 1
          %s269 = scalar_select %p268, %s17, 1
          %s270 = scalar_lea.vmem %s1, %s269
        $region48: #{stack_forward.1} parent=39 // pred_fallthru
          _
      $region40: #{stack_forward.1} parent=5 // pred_fallthru
        _
      %p271 = scmp.le.s32.totalorder 1, %s17
      %p272 = scmp.lt.s32.totalorder %s17, 3
      %p273 = pnand %p271, %p272
      %p274 = pneg %p273
      // Predicated region
      $region49: #{stack_forward.1} parent=5 // pred_check
        _
      $region50: #{stack_forward.1} parent=5 // pred_check_branch
        %276 = sbr.rel (%p273) target = $region52
      $region51: #{stack_forward.1} parent=5 // pred_region
        %s277 = ssub.s32 %s17, 1
        %p278 = scmp.lt.s32.totalorder %s22, 1
        %s279 = scalar_select %p278, %s22, 1
        %s280 = smul.addr %s279, 8
        %s281 = scalar_lea.vmem %s0, %s280
        %p282 = pneg %p43
        %p283 = pneg %p40
        %p284 = scmp.lt.s32.totalorder %s22, 1
        %s285 = scalar_select %p284, %s22, 1
        %s286 = scalar_lea.vmem %s1, %s285
        %p287 = pneg %p69
        %p288 = pneg %p66
        %p289 = pneg %p90
        %p290 = pneg %p87
        %p291 = pneg %p111
        %p292 = pneg %p108
        %p293 = pneg %p132
        %p294 = pneg %p129
        %p295 = pneg %p153
        %p296 = pneg %p150
        %p297 = pneg %p174
        %p298 = pneg %p171
        %p299 = pneg %p195
        %p300 = pneg %p192
        %p301 = pneg %p221
        %p302 = pneg %p218
        %s303 = sand.u32 %s208, 1
        %s304 = scalar_lea.sflag [#allocation3], %s303
        %s305 = sand.u32 %s208, 1
        %s306 = smul.addr %s305, 8
        %s307 = scalar_lea.vmem [#allocation2], %s306
        %p308 = scmp.lt.s32.totalorder %s22, 1
        %s309 = scalar_select %p308, %s22, 1
        %s310 = smul.addr %s309, 8
        %s311 = scalar_lea.vmem %s0, %s310
        %p312 = scmp.lt.s32.totalorder %s22, 1
        %s313 = scalar_select %p312, %s22, 1
        %s314 = scalar_lea.vmem %s1, %s313
        %v315 = vld [vmem:[%s314] sm:$0x1]
        %vm316 = vcmp.gt.f32.partialorder %v315, 0.5
        %v317 = vsel %vm316, 0.0, -1e+30
        %v319 = vlaneseq
        %v320 = vshrl.u32 %v319, 7
        %v321 = vsub.s32 0, %v320
        %v322 = vrot.slane %v317, %v321
        %v324 = vld [vmem:[%s311] sm:$0xff]
        %v325 = vld [vmem:[%s2] sm:$0xff]
        %v326 = vadd.f32 %v324, %v325
        %v327 = vld [vmem:[%s7] sm:$0x1]
        %v328 = vld [vmem:[%s7 + $0x1] sm:$0x1]
        %vm329 = vcmask 261120
        %v330 = vsel %vm329, %v326, 0.0
        %331 = vadd.xlane.f32.xlu0 %v330
        %v332 = vpop.xlane.xlu0 %331
        %v333 = vrcp.pop 32.0
        %v334 = vmul.f32 %v332, %v333
        %v335 = vsub.f32 %v326, %v334
        %v336 = vmul.f32 %v335, %v335
        %v337 = vsel %vm329, %v336, 0.0
        %338 = vadd.xlane.f32.xlu0 %v337
        %v339 = vpop.xlane.xlu0 %338
        %v340 = vmul.f32 %v339, %v333
        %v341 = vadd.f32 %v340, 1e-05
        %v342 = vrsqrt.pop %v341
        %v343 = vmul.f32 %v335, %v342
        %v344 = vlaneseq
        %v345 = vshrl.u32 %v344, 7
        %v346 = vsub.s32 0, %v345
        %v347 = vrot.slane %v327, %v346
        %v348 = vmul.f32 %v343, %v347
        %v349 = vlaneseq
        %v350 = vshrl.u32 %v349, 7
        %v351 = vsub.s32 0, %v350
        %v352 = vrot.slane %v328, %v351
        %v353 = vadd.f32 %v348, %v352
        %v354 = vld [vmem:[%s3] sm:$0xff]
        %v355 = vld [vmem:[%s3 + $0x8] sm:$0xff]
        %v356 = vld [vmem:[%s3 + $0x10] sm:$0xff]
        %v357 = vld [vmem:[%s3 + $0x18] sm:$0xff]
        %v358 = vld [vmem:[%s7 + $0x2] sm:$0x1]
        %v359 = vlaneseq
        %v360 = vshrl.u32 %v359, 7
        %v361 = vsub.s32 0, %v360
        %v362 = vrot.slane %v358, %v361
        %v364 = vsel %vm329, %v353, 0
        %366 = vmatprep.subr.mxu0 0.0
        %367 = vmatpush1.msra.mxu0 %v354
        %368 = vmatprep.subr.mxu0 0.0
        %369 = vmatpush1.msra.mxu0 %v355
        %370 = vmatprep.subr.mxu0 0.0
        %371 = vmatpush1.msra.mxu0 %v356
        %372 = vmatprep.subr.mxu0 0.0
        %373 = vmatpush1.msra.mxu0 %v357
        %374 = vmatprep.subr.mxu0 0.0
        %375 = vmatpush1.msra.mxu0 0.0
        %376 = vmatprep.subr.mxu0 0.0
        %377 = vmatpush1.msra.mxu0 0.0
        %378 = vmatprep.subr.mxu0 0.0
        %379 = vmatpush1.msra.mxu0 0.0
        %380 = vmatprep.subr.mxu0 0.0
        %381 = vmatpush1.msra.mxu0 0.0
        %382 = vmatprep.subr.mxu0 0.0
        %383 = vmatpush1.msra.mxu0 0.0
        %384 = vmatprep.subr.mxu0 0.0
        %385 = vmatpush1.msra.mxu0 0.0
        %386 = vmatprep.subr.mxu0 0.0
        %387 = vmatpush1.msra.mxu0 0.0
        %388 = vmatprep.subr.mxu0 0.0
        %389 = vmatpush1.msra.mxu0 0.0
        %390 = vmatprep.subr.mxu0 0.0
        %391 = vmatpush1.msra.mxu0 0.0
        %392 = vmatprep.subr.mxu0 0.0
        %393 = vmatpush1.msra.mxu0 0.0
        %394 = vmatprep.subr.mxu0 0.0
        %395 = vmatpush1.msra.mxu0 0.0
        %396 = vmatprep.subr.mxu0 0.0
        %397 = vmatpush1.msra.mxu0 0.0
        %398 = vmatprep.subr.mxu0 0.0
        %399 = vmatpush1.msra.mxu0 0.0
        %400 = vmatprep.subr.mxu0 0.0
        %401 = vmatpush1.msra.mxu0 0.0
        %402 = vmatprep.subr.mxu0 0.0
        %403 = vmatpush1.msra.mxu0 0.0
        %404 = vmatprep.subr.mxu0 0.0
        %405 = vmatpush1.msra.mxu0 0.0
        %406 = vmatprep.subr.mxu0 0.0
        %407 = vmatpush1.msra.mxu0 0.0
        %408 = vmatprep.subr.mxu0 0.0
        %409 = vmatpush1.msra.mxu0 0.0
        %410 = vmatprep.subr.mxu0 0.0
        %411 = vmatpush1.msra.mxu0 0.0
        %412 = vmatprep.subr.mxu0 0.0
        %413 = vmatpush1.msra.mxu0 0.0
        %414 = vmatprep.subr.mxu0 0.0
        %415 = vmatpush1.msra.mxu0 0.0
        %416 = vmatprep.subr.mxu0 0.0
        %417 = vmatpush1.msra.mxu0 0.0
        %418 = vmatprep.subr.mxu0 0.0
        %419 = vmatpush1.msra.mxu0 0.0
        %420 = vmatprep.subr.mxu0 0.0
        %421 = vmatpush1.msra.mxu0 0.0
        %422 = vmatprep.subr.mxu0 0.0
        %423 = vmatpush1.msra.mxu0 0.0
        %424 = vmatprep.subr.mxu0 0.0
        %425 = vmatpush1.msra.mxu0 0.0
        %426 = vmatprep.subr.mxu0 0.0
        %427 = vmatpush1.msra.mxu0 0.0
        %428 = vmatprep.subr.mxu0 0.0
        %429 = vmatpush1.msra.mxu0 0.0
        %430 = vmatprep.mubr.f32.mxu0 0.0
        %431 = vmatmul.mubr.f32.gmra.mrb[0].mxu0 %v364
        %v432 = vpop.f32.mrb[0].mxu0
        %v433 = vadd.f32 %v362, %v432
        %v434 = vpop.f32.mrb[0].mxu0
        %435 = vdwg.mxu0
        %s436 = scalar_lea.vmem %s3, 32
        %v437 = vld [vmem:[%s436] sm:$0xff]
        %v438 = vld [vmem:[%s436 + $0x8] sm:$0xff]
        %v439 = vld [vmem:[%s436 + $0x10] sm:$0xff]
        %v440 = vld [vmem:[%s436 + $0x18] sm:$0xff]
        %v441 = vld [vmem:[%s7 + $0x3] sm:$0x1]
        %v442 = vlaneseq
        %v443 = vshrl.u32 %v442, 7
        %v444 = vsub.s32 0, %v443
        %v445 = vrot.slane %v441, %v444
        %446 = vmatprep.subr.mxu0 0.0
        %447 = vmatpush1.msra.mxu0 %v437
        %448 = vmatprep.subr.mxu0 0.0
        %449 = vmatpush1.msra.mxu0 %v438
        %450 = vmatprep.subr.mxu0 0.0
        %451 = vmatpush1.msra.mxu0 %v439
        %452 = vmatprep.subr.mxu0 0.0
        %453 = vmatpush1.msra.mxu0 %v440
        %454 = vmatprep.subr.mxu0 0.0
        %455 = vmatpush1.msra.mxu0 0.0
        %456 = vmatprep.subr.mxu0 0.0
        %457 = vmatpush1.msra.mxu0 0.0
        %458 = vmatprep.subr.mxu0 0.0
        %459 = vmatpush1.msra.mxu0 0.0
        %460 = vmatprep.subr.mxu0 0.0
        %461 = vmatpush1.msra.mxu0 0.0
        %462 = vmatprep.subr.mxu0 0.0
        %463 = vmatpush1.msra.mxu0 0.0
        %464 = vmatprep.subr.mxu0 0.0
        %465 = vmatpush1.msra.mxu0 0.0
        %466 = vmatprep.subr.mxu0 0.0
        %467 = vmatpush1.msra.mxu0 0.0
        %468 = vmatprep.subr.mxu0 0.0
        %469 = vmatpush1.msra.mxu0 0.0
        %470 = vmatprep.subr.mxu0 0.0
        %471 = vmatpush1.msra.mxu0 0.0
        %472 = vmatprep.subr.mxu0 0.0
        %473 = vmatpush1.msra.mxu0 0.0
        %474 = vmatprep.subr.mxu0 0.0
        %475 = vmatpush1.msra.mxu0 0.0
        %476 = vmatprep.subr.mxu0 0.0
        %477 = vmatpush1.msra.mxu0 0.0
        %478 = vmatprep.subr.mxu0 0.0
        %479 = vmatpush1.msra.mxu0 0.0
        %480 = vmatprep.subr.mxu0 0.0
        %481 = vmatpush1.msra.mxu0 0.0
        %482 = vmatprep.subr.mxu0 0.0
        %483 = vmatpush1.msra.mxu0 0.0
        %484 = vmatprep.subr.mxu0 0.0
        %485 = vmatpush1.msra.mxu0 0.0
        %486 = vmatprep.subr.mxu0 0.0
        %487 = vmatpush1.msra.mxu0 0.0
        %488 = vmatprep.subr.mxu0 0.0
        %489 = vmatpush1.msra.mxu0 0.0
        %490 = vmatprep.subr.mxu0 0.0
        %491 = vmatpush1.msra.mxu0 0.0
        %492 = vmatprep.subr.mxu0 0.0
        %493 = vmatpush1.msra.mxu0 0.0
        %494 = vmatprep.subr.mxu0 0.0
        %495 = vmatpush1.msra.mxu0 0.0
        %496 = vmatprep.subr.mxu0 0.0
        %497 = vmatpush1.msra.mxu0 0.0
        %498 = vmatprep.subr.mxu0 0.0
        %499 = vmatpush1.msra.mxu0 0.0
        %500 = vmatprep.subr.mxu0 0.0
        %501 = vmatpush1.msra.mxu0 0.0
        %502 = vmatprep.subr.mxu0 0.0
        %503 = vmatpush1.msra.mxu0 0.0
        %504 = vmatprep.subr.mxu0 0.0
        %505 = vmatpush1.msra.mxu0 0.0
        %506 = vmatprep.subr.mxu0 0.0
        %507 = vmatpush1.msra.mxu0 0.0
        %508 = vmatprep.subr.mxu0 0.0
        %509 = vmatpush1.msra.mxu0 0.0
        %510 = vmatprep.mubr.f32.mxu0 0.0
        %511 = vmatmul.mubr.f32.gmra.mrb[0].mxu0 %v364
        %v512 = vpop.f32.mrb[0].mxu0
        %v513 = vadd.f32 %v445, %v512
        %v514 = vpop.f32.mrb[0].mxu0
        %515 = vdwg.mxu0
        %s516 = scalar_lea.vmem %s3, 64
        %v517 = vld [vmem:[%s516] sm:$0xff]
        %v518 = vld [vmem:[%s516 + $0x8] sm:$0xff]
        %v519 = vld [vmem:[%s516 + $0x10] sm:$0xff]
        %v520 = vld [vmem:[%s516 + $0x18] sm:$0xff]
        %v521 = vld [vmem:[%s7 + $0x4] sm:$0x1]
        %v522 = vlaneseq
        %v523 = vshrl.u32 %v522, 7
        %v524 = vsub.s32 0, %v523
        %v525 = vrot.slane %v521, %v524
        %526 = vmatprep.subr.mxu0 0.0
        %527 = vmatpush1.msra.mxu0 %v517
        %528 = vmatprep.subr.mxu0 0.0
        %529 = vmatpush1.msra.mxu0 %v518
        %530 = vmatprep.subr.mxu0 0.0
        %531 = vmatpush1.msra.mxu0 %v519
        %532 = vmatprep.subr.mxu0 0.0
        %533 = vmatpush1.msra.mxu0 %v520
        %534 = vmatprep.subr.mxu0 0.0
        %535 = vmatpush1.msra.mxu0 0.0
        %536 = vmatprep.subr.mxu0 0.0
        %537 = vmatpush1.msra.mxu0 0.0
        %538 = vmatprep.subr.mxu0 0.0
        %539 = vmatpush1.msra.mxu0 0.0
        %540 = vmatprep.subr.mxu0 0.0
        %541 = vmatpush1.msra.mxu0 0.0
        %542 = vmatprep.subr.mxu0 0.0
        %543 = vmatpush1.msra.mxu0 0.0
        %544 = vmatprep.subr.mxu0 0.0
        %545 = vmatpush1.msra.mxu0 0.0
        %546 = vmatprep.subr.mxu0 0.0
        %547 = vmatpush1.msra.mxu0 0.0
        %548 = vmatprep.subr.mxu0 0.0
        %549 = vmatpush1.msra.mxu0 0.0
        %550 = vmatprep.subr.mxu0 0.0
        %551 = vmatpush1.msra.mxu0 0.0
        %552 = vmatprep.subr.mxu0 0.0
        %553 = vmatpush1.msra.mxu0 0.0
        %554 = vmatprep.subr.mxu0 0.0
        %555 = vmatpush1.msra.mxu0 0.0
        %556 = vmatprep.subr.mxu0 0.0
        %557 = vmatpush1.msra.mxu0 0.0
        %558 = vmatprep.subr.mxu0 0.0
        %559 = vmatpush1.msra.mxu0 0.0
        %560 = vmatprep.subr.mxu0 0.0
        %561 = vmatpush1.msra.mxu0 0.0
        %562 = vmatprep.subr.mxu0 0.0
        %563 = vmatpush1.msra.mxu0 0.0
        %564 = vmatprep.subr.mxu0 0.0
        %565 = vmatpush1.msra.mxu0 0.0
        %566 = vmatprep.subr.mxu0 0.0
        %567 = vmatpush1.msra.mxu0 0.0
        %568 = vmatprep.subr.mxu0 0.0
        %569 = vmatpush1.msra.mxu0 0.0
        %570 = vmatprep.subr.mxu0 0.0
        %571 = vmatpush1.msra.mxu0 0.0
        %572 = vmatprep.subr.mxu0 0.0
        %573 = vmatpush1.msra.mxu0 0.0
        %574 = vmatprep.subr.mxu0 0.0
        %575 = vmatpush1.msra.mxu0 0.0
        %576 = vmatprep.subr.mxu0 0.0
        %577 = vmatpush1.msra.mxu0 0.0
        %578 = vmatprep.subr.mxu0 0.0
        %579 = vmatpush1.msra.mxu0 0.0
        %580 = vmatprep.subr.mxu0 0.0
        %581 = vmatpush1.msra.mxu0 0.0
        %582 = vmatprep.subr.mxu0 0.0
        %583 = vmatpush1.msra.mxu0 0.0
        %584 = vmatprep.subr.mxu0 0.0
        %585 = vmatpush1.msra.mxu0 0.0
        %586 = vmatprep.subr.mxu0 0.0
        %587 = vmatpush1.msra.mxu0 0.0
        %588 = vmatprep.subr.mxu0 0.0
        %589 = vmatpush1.msra.mxu0 0.0
        %590 = vmatprep.mubr.f32.mxu0 0.0
        %591 = vmatmul.mubr.f32.gmra.mrb[0].mxu0 %v364
        %v592 = vpop.f32.mrb[0].mxu0
        %v593 = vadd.f32 %v525, %v592
        %v594 = vpop.f32.mrb[0].mxu0
        %595 = vdwg.mxu0
        %597 = vrot.lane.b32.xlu0 %v433, 120
        %v598 = vpop.permute.xlu0 %597
        %600 = vrot.lane.b32.xlu0 %v433, 112
        %v601 = vpop.permute.xlu0 %600
        %603 = vrot.lane.b32.xlu0 %v433, 104
        %v604 = vpop.permute.xlu0 %603
        %v606 = vcombine.low %v433, %v601
        %v607 = vcombine.high %v433, %v601
        %v609 = vunpack.c.l.s4 1983009808
        %v610 = vunpack.c.0.s8 %v609
        %v611 = vlaneseq
        %v612 = vshrl.u32 %v611, 7
        %v613 = vsub.s32 %v610, %v612
        %v614 = vrot.slane %v606, %v613
        %v616 = vunpack.c.l.s4 1983009808
        %v617 = vunpack.c.0.s8 %v616
        %v618 = vlaneseq
        %v619 = vshrl.u32 %v618, 7
        %v620 = vsub.s32 %v617, %v619
        %v621 = vrot.slane %v607, %v620
        %v622 = vcombine.low %v598, %v604
        %v623 = vcombine.high %v598, %v604
        %v625 = vunpack.c.l.s4 1983009808
        %v626 = vunpack.c.0.s8 %v625
        %v627 = vlaneseq
        %v628 = vshrl.u32 %v627, 7
        %v629 = vsub.s32 %v626, %v628
        %v630 = vrot.slane %v622, %v629
        %v632 = vunpack.c.l.s4 1983009808
        %v633 = vunpack.c.0.s8 %v632
        %v634 = vlaneseq
        %v635 = vshrl.u32 %v634, 7
        %v636 = vsub.s32 %v633, %v635
        %v637 = vrot.slane %v623, %v636
        %v638 = vcombine.low %v614, %v630
        %v639 = vcombine.high %v614, %v630
        %v641 = vunpack.c.l.s4 1934713408
        %v642 = vunpack.c.0.s8 %v641
        %v643 = vlaneseq
        %v644 = vshrl.u32 %v643, 7
        %v645 = vsub.s32 %v642, %v644
        %v646 = vrot.slane %v638, %v645
        %v648 = vunpack.c.l.s4 1934713408
        %v649 = vunpack.c.0.s8 %v648
        %v650 = vlaneseq
        %v651 = vshrl.u32 %v650, 7
        %v652 = vsub.s32 %v649, %v651
        %v653 = vrot.slane %v639, %v652
        %v654 = vcombine.low %v621, %v637
        %v655 = vcombine.high %v621, %v637
        %v657 = vunpack.c.l.s4 1934713408
        %v658 = vunpack.c.0.s8 %v657
        %v659 = vlaneseq
        %v660 = vshrl.u32 %v659, 7
        %v661 = vsub.s32 %v658, %v660
        %v662 = vrot.slane %v654, %v661
        %v664 = vunpack.c.l.s4 1934713408
        %v665 = vunpack.c.0.s8 %v664
        %v666 = vlaneseq
        %v667 = vshrl.u32 %v666, 7
        %v668 = vsub.s32 %v665, %v667
        %v669 = vrot.slane %v655, %v668
        %v670 = vcombine.high %v646, 0.0
        %v671 = vcombine.high %v653, 0.0
        %v672 = vcombine.high %v662, 0.0
        %v673 = vcombine.high %v669, 0.0
        %v674 = vcombine.low %v646, %v653
        %v676 = vunpack.c.l.s4 1983009808
        %v677 = vunpack.c.0.s8 %v676
        %v678 = vlaneseq
        %v679 = vshrl.u32 %v678, 7
        %v680 = vsub.s32 %v677, %v679
        %v681 = vrot.slane %v674, %v680
        %v682 = vcombine.low %v670, %v671
        %v684 = vunpack.c.l.s4 1983009808
        %v685 = vunpack.c.0.s8 %v684
        %v686 = vlaneseq
        %v687 = vshrl.u32 %v686, 7
        %v688 = vsub.s32 %v685, %v687
        %v689 = vrot.slane %v682, %v688
        %v690 = vcombine.low %v662, %v669
        %v692 = vunpack.c.l.s4 1983009808
        %v693 = vunpack.c.0.s8 %v692
        %v694 = vlaneseq
        %v695 = vshrl.u32 %v694, 7
        %v696 = vsub.s32 %v693, %v695
        %v697 = vrot.slane %v690, %v696
        %v698 = vcombine.low %v672, %v673
        %v700 = vunpack.c.l.s4 1983009808
        %v701 = vunpack.c.0.s8 %v700
        %v702 = vlaneseq
        %v703 = vshrl.u32 %v702, 7
        %v704 = vsub.s32 %v701, %v703
        %v705 = vrot.slane %v698, %v704
        %v706 = vcombine.low %v681, %v689
        %v707 = vcombine.high %v681, %v689
        %v709 = vunpack.c.l.s4 1934713408
        %v710 = vunpack.c.0.s8 %v709
        %v711 = vlaneseq
        %v712 = vshrl.u32 %v711, 7
        %v713 = vsub.s32 %v710, %v712
        %v714 = vrot.slane %v706, %v713
        %v716 = vunpack.c.l.s4 1934713408
        %v717 = vunpack.c.0.s8 %v716
        %v718 = vlaneseq
        %v719 = vshrl.u32 %v718, 7
        %v720 = vsub.s32 %v717, %v719
        %v721 = vrot.slane %v707, %v720
        %v722 = vcombine.low %v697, %v705
        %v723 = vcombine.high %v697, %v705
        %v725 = vunpack.c.l.s4 1934713408
        %v726 = vunpack.c.0.s8 %v725
        %v727 = vlaneseq
        %v728 = vshrl.u32 %v727, 7
        %v729 = vsub.s32 %v726, %v728
        %v730 = vrot.slane %v722, %v729
        %v732 = vunpack.c.l.s4 1934713408
        %v733 = vunpack.c.0.s8 %v732
        %v734 = vlaneseq
        %v735 = vshrl.u32 %v734, 7
        %v736 = vsub.s32 %v733, %v735
        %v737 = vrot.slane %v723, %v736
        %v738 = vcombine.low %v714, %v730
        %v739 = vcombine.high %v714, %v730
        %v740 = vcombine.low %v721, %v737
        %v741 = vcombine.high %v721, %v737
        %743 = vrot.lane.b32.xlu0 %v513, 120
        %v744 = vpop.permute.xlu0 %743
        %746 = vrot.lane.b32.xlu0 %v513, 112
        %v747 = vpop.permute.xlu0 %746
        %749 = vrot.lane.b32.xlu0 %v513, 104
        %v750 = vpop.permute.xlu0 %749
        %v752 = vcombine.low %v513, %v747
        %v753 = vcombine.high %v513, %v747
        %v755 = vunpack.c.l.s4 1983009808
        %v756 = vunpack.c.0.s8 %v755
        %v757 = vlaneseq
        %v758 = vshrl.u32 %v757, 7
        %v759 = vsub.s32 %v756, %v758
        %v760 = vrot.slane %v752, %v759
        %v762 = vunpack.c.l.s4 1983009808
        %v763 = vunpack.c.0.s8 %v762
        %v764 = vlaneseq
        %v765 = vshrl.u32 %v764, 7
        %v766 = vsub.s32 %v763, %v765
        %v767 = vrot.slane %v753, %v766
        %v768 = vcombine.low %v744, %v750
        %v769 = vcombine.high %v744, %v750
        %v771 = vunpack.c.l.s4 1983009808
        %v772 = vunpack.c.0.s8 %v771
        %v773 = vlaneseq
        %v774 = vshrl.u32 %v773, 7
        %v775 = vsub.s32 %v772, %v774
        %v776 = vrot.slane %v768, %v775
        %v778 = vunpack.c.l.s4 1983009808
        %v779 = vunpack.c.0.s8 %v778
        %v780 = vlaneseq
        %v781 = vshrl.u32 %v780, 7
        %v782 = vsub.s32 %v779, %v781
        %v783 = vrot.slane %v769, %v782
        %v784 = vcombine.low %v760, %v776
        %v785 = vcombine.high %v760, %v776
        %v787 = vunpack.c.l.s4 1934713408
        %v788 = vunpack.c.0.s8 %v787
        %v789 = vlaneseq
        %v790 = vshrl.u32 %v789, 7
        %v791 = vsub.s32 %v788, %v790
        %v792 = vrot.slane %v784, %v791
        %v794 = vunpack.c.l.s4 1934713408
        %v795 = vunpack.c.0.s8 %v794
        %v796 = vlaneseq
        %v797 = vshrl.u32 %v796, 7
        %v798 = vsub.s32 %v795, %v797
        %v799 = vrot.slane %v785, %v798
        %v800 = vcombine.low %v767, %v783
        %v801 = vcombine.high %v767, %v783
        %v803 = vunpack.c.l.s4 1934713408
        %v804 = vunpack.c.0.s8 %v803
        %v805 = vlaneseq
        %v806 = vshrl.u32 %v805, 7
        %v807 = vsub.s32 %v804, %v806
        %v808 = vrot.slane %v800, %v807
        %v810 = vunpack.c.l.s4 1934713408
        %v811 = vunpack.c.0.s8 %v810
        %v812 = vlaneseq
        %v813 = vshrl.u32 %v812, 7
        %v814 = vsub.s32 %v811, %v813
        %v815 = vrot.slane %v801, %v814
        %v816 = vcombine.high %v792, 0.0
        %v817 = vcombine.high %v799, 0.0
        %v818 = vcombine.high %v808, 0.0
        %v819 = vcombine.high %v815, 0.0
        %v820 = vcombine.low %v792, %v799
        %v822 = vunpack.c.l.s4 1983009808
        %v823 = vunpack.c.0.s8 %v822
        %v824 = vlaneseq
        %v825 = vshrl.u32 %v824, 7
        %v826 = vsub.s32 %v823, %v825
        %v827 = vrot.slane %v820, %v826
        %v828 = vcombine.low %v816, %v817
        %v830 = vunpack.c.l.s4 1983009808
        %v831 = vunpack.c.0.s8 %v830
        %v832 = vlaneseq
        %v833 = vshrl.u32 %v832, 7
        %v834 = vsub.s32 %v831, %v833
        %v835 = vrot.slane %v828, %v834
        %v836 = vcombine.low %v808, %v815
        %v838 = vunpack.c.l.s4 1983009808
        %v839 = vunpack.c.0.s8 %v838
        %v840 = vlaneseq
        %v841 = vshrl.u32 %v840, 7
        %v842 = vsub.s32 %v839, %v841
        %v843 = vrot.slane %v836, %v842
        %v844 = vcombine.low %v818, %v819
        %v846 = vunpack.c.l.s4 1983009808
        %v847 = vunpack.c.0.s8 %v846
        %v848 = vlaneseq
        %v849 = vshrl.u32 %v848, 7
        %v850 = vsub.s32 %v847, %v849
        %v851 = vrot.slane %v844, %v850
        %v852 = vcombine.low %v827, %v835
        %v853 = vcombine.high %v827, %v835
        %v855 = vunpack.c.l.s4 1934713408
        %v856 = vunpack.c.0.s8 %v855
        %v857 = vlaneseq
        %v858 = vshrl.u32 %v857, 7
        %v859 = vsub.s32 %v856, %v858
        %v860 = vrot.slane %v852, %v859
        %v862 = vunpack.c.l.s4 1934713408
        %v863 = vunpack.c.0.s8 %v862
        %v864 = vlaneseq
        %v865 = vshrl.u32 %v864, 7
        %v866 = vsub.s32 %v863, %v865
        %v867 = vrot.slane %v853, %v866
        %v868 = vcombine.low %v843, %v851
        %v869 = vcombine.high %v843, %v851
        %v871 = vunpack.c.l.s4 1934713408
        %v872 = vunpack.c.0.s8 %v871
        %v873 = vlaneseq
        %v874 = vshrl.u32 %v873, 7
        %v875 = vsub.s32 %v872, %v874
        %v876 = vrot.slane %v868, %v875
        %v878 = vunpack.c.l.s4 1934713408
        %v879 = vunpack.c.0.s8 %v878
        %v880 = vlaneseq
        %v881 = vshrl.u32 %v880, 7
        %v882 = vsub.s32 %v879, %v881
        %v883 = vrot.slane %v869, %v882
        %v884 = vcombine.low %v860, %v876
        %v885 = vcombine.high %v860, %v876
        %v886 = vcombine.low %v867, %v883
        %v887 = vcombine.high %v867, %v883
        %889 = vrot.lane.b32.xlu0 %v593, 120
        %v890 = vpop.permute.xlu0 %889
        %892 = vrot.lane.b32.xlu0 %v593, 112
        %v893 = vpop.permute.xlu0 %892
        %895 = vrot.lane.b32.xlu0 %v593, 104
        %v896 = vpop.permute.xlu0 %895
        %v898 = vcombine.low %v593, %v893
        %v899 = vcombine.high %v593, %v893
        %v901 = vunpack.c.l.s4 1983009808
        %v902 = vunpack.c.0.s8 %v901
        %v903 = vlaneseq
        %v904 = vshrl.u32 %v903, 7
        %v905 = vsub.s32 %v902, %v904
        %v906 = vrot.slane %v898, %v905
        %v908 = vunpack.c.l.s4 1983009808
        %v909 = vunpack.c.0.s8 %v908
        %v910 = vlaneseq
        %v911 = vshrl.u32 %v910, 7
        %v912 = vsub.s32 %v909, %v911
        %v913 = vrot.slane %v899, %v912
        %v914 = vcombine.low %v890, %v896
        %v915 = vcombine.high %v890, %v896
        %v917 = vunpack.c.l.s4 1983009808
        %v918 = vunpack.c.0.s8 %v917
        %v919 = vlaneseq
        %v920 = vshrl.u32 %v919, 7
        %v921 = vsub.s32 %v918, %v920
        %v922 = vrot.slane %v914, %v921
        %v924 = vunpack.c.l.s4 1983009808
        %v925 = vunpack.c.0.s8 %v924
        %v926 = vlaneseq
        %v927 = vshrl.u32 %v926, 7
        %v928 = vsub.s32 %v925, %v927
        %v929 = vrot.slane %v915, %v928
        %v930 = vcombine.low %v906, %v922
        %v931 = vcombine.high %v906, %v922
        %v933 = vunpack.c.l.s4 1934713408
        %v934 = vunpack.c.0.s8 %v933
        %v935 = vlaneseq
        %v936 = vshrl.u32 %v935, 7
        %v937 = vsub.s32 %v934, %v936
        %v938 = vrot.slane %v930, %v937
        %v940 = vunpack.c.l.s4 1934713408
        %v941 = vunpack.c.0.s8 %v940
        %v942 = vlaneseq
        %v943 = vshrl.u32 %v942, 7
        %v944 = vsub.s32 %v941, %v943
        %v945 = vrot.slane %v931, %v944
        %v946 = vcombine.low %v913, %v929
        %v947 = vcombine.high %v913, %v929
        %v949 = vunpack.c.l.s4 1934713408
        %v950 = vunpack.c.0.s8 %v949
        %v951 = vlaneseq
        %v952 = vshrl.u32 %v951, 7
        %v953 = vsub.s32 %v950, %v952
        %v954 = vrot.slane %v946, %v953
        %v956 = vunpack.c.l.s4 1934713408
        %v957 = vunpack.c.0.s8 %v956
        %v958 = vlaneseq
        %v959 = vshrl.u32 %v958, 7
        %v960 = vsub.s32 %v957, %v959
        %v961 = vrot.slane %v947, %v960
        %v962 = vcombine.high %v938, 0.0
        %v963 = vcombine.high %v945, 0.0
        %v964 = vcombine.high %v954, 0.0
        %v965 = vcombine.high %v961, 0.0
        %v966 = vcombine.low %v938, %v945
        %v968 = vunpack.c.l.s4 1983009808
        %v969 = vunpack.c.0.s8 %v968
        %v970 = vlaneseq
        %v971 = vshrl.u32 %v970, 7
        %v972 = vsub.s32 %v969, %v971
        %v973 = vrot.slane %v966, %v972
        %v974 = vcombine.low %v962, %v963
        %v976 = vunpack.c.l.s4 1983009808
        %v977 = vunpack.c.0.s8 %v976
        %v978 = vlaneseq
        %v979 = vshrl.u32 %v978, 7
        %v980 = vsub.s32 %v977, %v979
        %v981 = vrot.slane %v974, %v980
        %v982 = vcombine.low %v954, %v961
        %v984 = vunpack.c.l.s4 1983009808
        %v985 = vunpack.c.0.s8 %v984
        %v986 = vlaneseq
        %v987 = vshrl.u32 %v986, 7
        %v988 = vsub.s32 %v985, %v987
        %v989 = vrot.slane %v982, %v988
        %v990 = vcombine.low %v964, %v965
        %v992 = vunpack.c.l.s4 1983009808
        %v993 = vunpack.c.0.s8 %v992
        %v994 = vlaneseq
        %v995 = vshrl.u32 %v994, 7
        %v996 = vsub.s32 %v993, %v995
        %v997 = vrot.slane %v990, %v996
        %v998 = vcombine.low %v973, %v981
        %v999 = vcombine.high %v973, %v981
        %v1001 = vunpack.c.l.s4 1934713408
        %v1002 = vunpack.c.0.s8 %v1001
        %v1003 = vlaneseq
        %v1004 = vshrl.u32 %v1003, 7
        %v1005 = vsub.s32 %v1002, %v1004
        %v1006 = vrot.slane %v998, %v1005
        %v1008 = vunpack.c.l.s4 1934713408
        %v1009 = vunpack.c.0.s8 %v1008
        %v1010 = vlaneseq
        %v1011 = vshrl.u32 %v1010, 7
        %v1012 = vsub.s32 %v1009, %v1011
        %v1013 = vrot.slane %v999, %v1012
        %v1014 = vcombine.low %v989, %v997
        %v1015 = vcombine.high %v989, %v997
        %v1017 = vunpack.c.l.s4 1934713408
        %v1018 = vunpack.c.0.s8 %v1017
        %v1019 = vlaneseq
        %v1020 = vshrl.u32 %v1019, 7
        %v1021 = vsub.s32 %v1018, %v1020
        %v1022 = vrot.slane %v1014, %v1021
        %v1024 = vunpack.c.l.s4 1934713408
        %v1025 = vunpack.c.0.s8 %v1024
        %v1026 = vlaneseq
        %v1027 = vshrl.u32 %v1026, 7
        %v1028 = vsub.s32 %v1025, %v1027
        %v1029 = vrot.slane %v1015, %v1028
        %v1030 = vcombine.low %v1006, %v1022
        %v1031 = vcombine.high %v1006, %v1022
        %v1032 = vcombine.low %v1013, %v1029
        %v1033 = vcombine.high %v1013, %v1029
        %vm1034 = vcmask 64512
        %v1036 = vsel %vm1034, %v738, 0
        %v1039 = vsel %vm1034, %v884, 0
        %1041 = vmatprep.subr.mxu0 0.0
        %1042 = vmatpush1.xpose.msra.mxu0 %v1039
        %1043 = vmatprep.subr.mxu0 0.0
        %1044 = vmatpush1.xpose.msra.mxu0 0.0
        %1045 = vmatprep.subr.mxu0 0.0
        %1046 = vmatpush1.xpose.msra.mxu0 0.0
        %1047 = vmatprep.subr.mxu0 0.0
        %1048 = vmatpush1.xpose.msra.mxu0 0.0
        %1049 = vmatprep.subr.mxu0 0.0
        %1050 = vmatpush1.xpose.msra.mxu0 0.0
        %1051 = vmatprep.subr.mxu0 0.0
        %1052 = vmatpush1.xpose.msra.mxu0 0.0
        %1053 = vmatprep.subr.mxu0 0.0
        %1054 = vmatpush1.xpose.msra.mxu0 0.0
        %1055 = vmatprep.subr.mxu0 0.0
        %1056 = vmatpush1.xpose.msra.mxu0 0.0
        %1057 = vmatprep.subr.mxu0 0.0
        %1058 = vmatpush1.xpose.msra.mxu0 0.0
        %1059 = vmatprep.subr.mxu0 0.0
        %1060 = vmatpush1.xpose.msra.mxu0 0.0
        %1061 = vmatprep.subr.mxu0 0.0
        %1062 = vmatpush1.xpose.msra.mxu0 0.0
        %1063 = vmatprep.subr.mxu0 0.0
        %1064 = vmatpush1.xpose.msra.mxu0 0.0
        %1065 = vmatprep.subr.mxu0 0.0
        %1066 = vmatpush1.xpose.msra.mxu0 0.0
        %1067 = vmatprep.subr.mxu0 0.0
        %1068 = vmatpush1.xpose.msra.mxu0 0.0
        %1069 = vmatprep.subr.mxu0 0.0
        %1070 = vmatpush1.xpose.msra.mxu0 0.0
        %1071 = vmatprep.subr.mxu0 0.0
        %1072 = vmatpush1.xpose.msra.mxu0 0.0
        %1073 = vmatprep.subr.mxu0 0.0
        %1074 = vmatpush1.xpose.msra.mxu0 0.0
        %1075 = vmatprep.subr.mxu0 0.0
        %1076 = vmatpush1.xpose.msra.mxu0 0.0
        %1077 = vmatprep.subr.mxu0 0.0
        %1078 = vmatpush1.xpose.msra.mxu0 0.0
        %1079 = vmatprep.subr.mxu0 0.0
        %1080 = vmatpush1.xpose.msra.mxu0 0.0
        %1081 = vmatprep.subr.mxu0 0.0
        %1082 = vmatpush1.xpose.msra.mxu0 0.0
        %1083 = vmatprep.subr.mxu0 0.0
        %1084 = vmatpush1.xpose.msra.mxu0 0.0
        %1085 = vmatprep.subr.mxu0 0.0
        %1086 = vmatpush1.xpose.msra.mxu0 0.0
        %1087 = vmatprep.subr.mxu0 0.0
        %1088 = vmatpush1.xpose.msra.mxu0 0.0
        %1089 = vmatprep.subr.mxu0 0.0
        %1090 = vmatpush1.xpose.msra.mxu0 0.0
        %1091 = vmatprep.subr.mxu0 0.0
        %1092 = vmatpush1.xpose.msra.mxu0 0.0
        %1093 = vmatprep.subr.mxu0 0.0
        %1094 = vmatpush1.xpose.msra.mxu0 0.0
        %1095 = vmatprep.subr.mxu0 0.0
        %1096 = vmatpush1.xpose.msra.mxu0 0.0
        %1097 = vmatprep.subr.mxu0 0.0
        %1098 = vmatpush1.xpose.msra.mxu0 0.0
        %1099 = vmatprep.subr.mxu0 0.0
        %1100 = vmatpush1.xpose.msra.mxu0 0.0
        %1101 = vmatprep.subr.mxu0 0.0
        %1102 = vmatpush1.xpose.msra.mxu0 0.0
        %1103 = vmatprep.subr.mxu0 0.0
        %1104 = vmatpush1.xpose.msra.mxu0 0.0
        %1105 = vmatprep.mubr.f32.mxu0 0.0
        %1106 = vmatmul.mubr.f32.gmra.mrb[0].mxu0 %v1036
        %v1107 = vpop.f32.mrb[0].mxu0
        %v1108 = vadd.f32 %v322, %v1107
        %v1109 = vpop.f32.mrb[0].mxu0
        %1110 = vdwg.mxu0
        %v1112 = vsel %vm1034, %v739, 0
        %v1115 = vsel %vm1034, %v885, 0
        %1117 = vmatprep.subr.mxu0 0.0
        %1118 = vmatpush1.xpose.msra.mxu0 %v1115
        %1119 = vmatprep.subr.mxu0 0.0
        %1120 = vmatpush1.xpose.msra.mxu0 0.0
        %1121 = vmatprep.subr.mxu0 0.0
        %1122 = vmatpush1.xpose.msra.mxu0 0.0
        %1123 = vmatprep.subr.mxu0 0.0
        %1124 = vmatpush1.xpose.msra.mxu0 0.0
        %1125 = vmatprep.subr.mxu0 0.0
        %1126 = vmatpush1.xpose.msra.mxu0 0.0
        %1127 = vmatprep.subr.mxu0 0.0
        %1128 = vmatpush1.xpose.msra.mxu0 0.0
        %1129 = vmatprep.subr.mxu0 0.0
        %1130 = vmatpush1.xpose.msra.mxu0 0.0
        %1131 = vmatprep.subr.mxu0 0.0
        %1132 = vmatpush1.xpose.msra.mxu0 0.0
        %1133 = vmatprep.subr.mxu0 0.0
        %1134 = vmatpush1.xpose.msra.mxu0 0.0
        %1135 = vmatprep.subr.mxu0 0.0
        %1136 = vmatpush1.xpose.msra.mxu0 0.0
        %1137 = vmatprep.subr.mxu0 0.0
        %1138 = vmatpush1.xpose.msra.mxu0 0.0
        %1139 = vmatprep.subr.mxu0 0.0
        %1140 = vmatpush1.xpose.msra.mxu0 0.0
        %1141 = vmatprep.subr.mxu0 0.0
        %1142 = vmatpush1.xpose.msra.mxu0 0.0
        %1143 = vmatprep.subr.mxu0 0.0
        %1144 = vmatpush1.xpose.msra.mxu0 0.0
        %1145 = vmatprep.subr.mxu0 0.0
        %1146 = vmatpush1.xpose.msra.mxu0 0.0
        %1147 = vmatprep.subr.mxu0 0.0
        %1148 = vmatpush1.xpose.msra.mxu0 0.0
        %1149 = vmatprep.subr.mxu0 0.0
        %1150 = vmatpush1.xpose.msra.mxu0 0.0
        %1151 = vmatprep.subr.mxu0 0.0
        %1152 = vmatpush1.xpose.msra.mxu0 0.0
        %1153 = vmatprep.subr.mxu0 0.0
        %1154 = vmatpush1.xpose.msra.mxu0 0.0
        %1155 = vmatprep.subr.mxu0 0.0
        %1156 = vmatpush1.xpose.msra.mxu0 0.0
        %1157 = vmatprep.subr.mxu0 0.0
        %1158 = vmatpush1.xpose.msra.mxu0 0.0
        %1159 = vmatprep.subr.mxu0 0.0
        %1160 = vmatpush1.xpose.msra.mxu0 0.0
        %1161 = vmatprep.subr.mxu0 0.0
        %1162 = vmatpush1.xpose.msra.mxu0 0.0
        %1163 = vmatprep.subr.mxu0 0.0
        %1164 = vmatpush1.xpose.msra.mxu0 0.0
        %1165 = vmatprep.subr.mxu0 0.0
        %1166 = vmatpush1.xpose.msra.mxu0 0.0
        %1167 = vmatprep.subr.mxu0 0.0
        %1168 = vmatpush1.xpose.msra.mxu0 0.0
        %1169 = vmatprep.subr.mxu0 0.0
        %1170 = vmatpush1.xpose.msra.mxu0 0.0
        %1171 = vmatprep.subr.mxu0 0.0
        %1172 = vmatpush1.xpose.msra.mxu0 0.0
        %1173 = vmatprep.subr.mxu0 0.0
        %1174 = vmatpush1.xpose.msra.mxu0 0.0
        %1175 = vmatprep.subr.mxu0 0.0
        %1176 = vmatpush1.xpose.msra.mxu0 0.0
        %1177 = vmatprep.subr.mxu0 0.0
        %1178 = vmatpush1.xpose.msra.mxu0 0.0
        %1179 = vmatprep.subr.mxu0 0.0
        %1180 = vmatpush1.xpose.msra.mxu0 0.0
        %1181 = vmatprep.mubr.f32.mxu0 0.0
        %1182 = vmatmul.mubr.f32.gmra.mrb[0].mxu0 %v1112
        %v1183 = vpop.f32.mrb[0].mxu0
        %v1184 = vadd.f32 %v322, %v1183
        %v1185 = vpop.f32.mrb[0].mxu0
        %1186 = vdwg.mxu0
        %v1188 = vsel %vm1034, %v740, 0
        %v1191 = vsel %vm1034, %v886, 0
        %1193 = vmatprep.subr.mxu0 0.0
        %1194 = vmatpush1.xpose.msra.mxu0 %v1191
        %1195 = vmatprep.subr.mxu0 0.0
        %1196 = vmatpush1.xpose.msra.mxu0 0.0
        %1197 = vmatprep.subr.mxu0 0.0
        %1198 = vmatpush1.xpose.msra.mxu0 0.0
        %1199 = vmatprep.subr.mxu0 0.0
        %1200 = vmatpush1.xpose.msra.mxu0 0.0
        %1201 = vmatprep.subr.mxu0 0.0
        %1202 = vmatpush1.xpose.msra.mxu0 0.0
        %1203 = vmatprep.subr.mxu0 0.0
        %1204 = vmatpush1.xpose.msra.mxu0 0.0
        %1205 = vmatprep.subr.mxu0 0.0
        %1206 = vmatpush1.xpose.msra.mxu0 0.0
        %1207 = vmatprep.subr.mxu0 0.0
        %1208 = vmatpush1.xpose.msra.mxu0 0.0
        %1209 = vmatprep.subr.mxu0 0.0
        %1210 = vmatpush1.xpose.msra.mxu0 0.0
        %1211 = vmatprep.subr.mxu0 0.0
        %1212 = vmatpush1.xpose.msra.mxu0 0.0
        %1213 = vmatprep.subr.mxu0 0.0
        %1214 = vmatpush1.xpose.msra.mxu0 0.0
        %1215 = vmatprep.subr.mxu0 0.0
        %1216 = vmatpush1.xpose.msra.mxu0 0.0
        %1217 = vmatprep.subr.mxu0 0.0
        %1218 = vmatpush1.xpose.msra.mxu0 0.0
        %1219 = vmatprep.subr.mxu0 0.0
        %1220 = vmatpush1.xpose.msra.mxu0 0.0
        %1221 = vmatprep.subr.mxu0 0.0
        %1222 = vmatpush1.xpose.msra.mxu0 0.0
        %1223 = vmatprep.subr.mxu0 0.0
        %1224 = vmatpush1.xpose.msra.mxu0 0.0
        %1225 = vmatprep.subr.mxu0 0.0
        %1226 = vmatpush1.xpose.msra.mxu0 0.0
        %1227 = vmatprep.subr.mxu0 0.0
        %1228 = vmatpush1.xpose.msra.mxu0 0.0
        %1229 = vmatprep.subr.mxu0 0.0
        %1230 = vmatpush1.xpose.msra.mxu0 0.0
        %1231 = vmatprep.subr.mxu0 0.0
        %1232 = vmatpush1.xpose.msra.mxu0 0.0
        %1233 = vmatprep.subr.mxu0 0.0
        %1234 = vmatpush1.xpose.msra.mxu0 0.0
        %1235 = vmatprep.subr.mxu0 0.0
        %1236 = vmatpush1.xpose.msra.mxu0 0.0
        %1237 = vmatprep.subr.mxu0 0.0
        %1238 = vmatpush1.xpose.msra.mxu0 0.0
        %1239 = vmatprep.subr.mxu0 0.0
        %1240 = vmatpush1.xpose.msra.mxu0 0.0
        %1241 = vmatprep.subr.mxu0 0.0
        %1242 = vmatpush1.xpose.msra.mxu0 0.0
        %1243 = vmatprep.subr.mxu0 0.0
        %1244 = vmatpush1.xpose.msra.mxu0 0.0
        %1245 = vmatprep.subr.mxu0 0.0
        %1246 = vmatpush1.xpose.msra.mxu0 0.0
        %1247 = vmatprep.subr.mxu0 0.0
        %1248 = vmatpush1.xpose.msra.mxu0 0.0
        %1249 = vmatprep.subr.mxu0 0.0
        %1250 = vmatpush1.xpose.msra.mxu0 0.0
        %1251 = vmatprep.subr.mxu0 0.0
        %1252 = vmatpush1.xpose.msra.mxu0 0.0
        %1253 = vmatprep.subr.mxu0 0.0
        %1254 = vmatpush1.xpose.msra.mxu0 0.0
        %1255 = vmatprep.subr.mxu0 0.0
        %1256 = vmatpush1.xpose.msra.mxu0 0.0
        %1257 = vmatprep.mubr.f32.mxu0 0.0
        %1258 = vmatmul.mubr.f32.gmra.mrb[0].mxu0 %v1188
        %v1259 = vpop.f32.mrb[0].mxu0
        %v1260 = vadd.f32 %v322, %v1259
        %v1261 = vpop.f32.mrb[0].mxu0
        %1262 = vdwg.mxu0
        %v1264 = vsel %vm1034, %v741, 0
        %v1267 = vsel %vm1034, %v887, 0
        %1269 = vmatprep.subr.mxu0 0.0
        %1270 = vmatpush1.xpose.msra.mxu0 %v1267
        %1271 = vmatprep.subr.mxu0 0.0
        %1272 = vmatpush1.xpose.msra.mxu0 0.0
        %1273 = vmatprep.subr.mxu0 0.0
        %1274 = vmatpush1.xpose.msra.mxu0 0.0
        %1275 = vmatprep.subr.mxu0 0.0
        %1276 = vmatpush1.xpose.msra.mxu0 0.0
        %1277 = vmatprep.subr.mxu0 0.0
        %1278 = vmatpush1.xpose.msra.mxu0 0.0
        %1279 = vmatprep.subr.mxu0 0.0
        %1280 = vmatpush1.xpose.msra.mxu0 0.0
        %1281 = vmatprep.subr.mxu0 0.0
        %1282 = vmatpush1.xpose.msra.mxu0 0.0
        %1283 = vmatprep.subr.mxu0 0.0
        %1284 = vmatpush1.xpose.msra.mxu0 0.0
        %1285 = vmatprep.subr.mxu0 0.0
        %1286 = vmatpush1.xpose.msra.mxu0 0.0
        %1287 = vmatprep.subr.mxu0 0.0
        %1288 = vmatpush1.xpose.msra.mxu0 0.0
        %1289 = vmatprep.subr.mxu0 0.0
        %1290 = vmatpush1.xpose.msra.mxu0 0.0
        %1291 = vmatprep.subr.mxu0 0.0
        %1292 = vmatpush1.xpose.msra.mxu0 0.0
        %1293 = vmatprep.subr.mxu0 0.0
        %1294 = vmatpush1.xpose.msra.mxu0 0.0
        %1295 = vmatprep.subr.mxu0 0.0
        %1296 = vmatpush1.xpose.msra.mxu0 0.0
        %1297 = vmatprep.subr.mxu0 0.0
        %1298 = vmatpush1.xpose.msra.mxu0 0.0
        %1299 = vmatprep.subr.mxu0 0.0
        %1300 = vmatpush1.xpose.msra.mxu0 0.0
        %1301 = vmatprep.subr.mxu0 0.0
        %1302 = vmatpush1.xpose.msra.mxu0 0.0
        %1303 = vmatprep.subr.mxu0 0.0
        %1304 = vmatpush1.xpose.msra.mxu0 0.0
        %1305 = vmatprep.subr.mxu0 0.0
        %1306 = vmatpush1.xpose.msra.mxu0 0.0
        %1307 = vmatprep.subr.mxu0 0.0
        %1308 = vmatpush1.xpose.msra.mxu0 0.0
        %1309 = vmatprep.subr.mxu0 0.0
        %1310 = vmatpush1.xpose.msra.mxu0 0.0
        %1311 = vmatprep.subr.mxu0 0.0
        %1312 = vmatpush1.xpose.msra.mxu0 0.0
        %1313 = vmatprep.subr.mxu0 0.0
        %1314 = vmatpush1.xpose.msra.mxu0 0.0
        %1315 = vmatprep.subr.mxu0 0.0
        %1316 = vmatpush1.xpose.msra.mxu0 0.0
        %1317 = vmatprep.subr.mxu0 0.0
        %1318 = vmatpush1.xpose.msra.mxu0 0.0
        %1319 = vmatprep.subr.mxu0 0.0
        %1320 = vmatpush1.xpose.msra.mxu0 0.0
        %1321 = vmatprep.subr.mxu0 0.0
        %1322 = vmatpush1.xpose.msra.mxu0 0.0
        %1323 = vmatprep.subr.mxu0 0.0
        %1324 = vmatpush1.xpose.msra.mxu0 0.0
        %1325 = vmatprep.subr.mxu0 0.0
        %1326 = vmatpush1.xpose.msra.mxu0 0.0
        %1327 = vmatprep.subr.mxu0 0.0
        %1328 = vmatpush1.xpose.msra.mxu0 0.0
        %1329 = vmatprep.subr.mxu0 0.0
        %1330 = vmatpush1.xpose.msra.mxu0 0.0
        %1331 = vmatprep.subr.mxu0 0.0
        %1332 = vmatpush1.xpose.msra.mxu0 0.0
        %1333 = vmatprep.mubr.f32.mxu0 0.0
        %1334 = vmatmul.mubr.f32.gmra.mrb[0].mxu0 %v1264
        %v1335 = vpop.f32.mrb[0].mxu0
        %v1336 = vadd.f32 %v322, %v1335
        %v1337 = vpop.f32.mrb[0].mxu0
        %1338 = vdwg.mxu0
        %v1339 = vsel %vm1034, %v1108, -inf
        %1340 = vmax.xlane.f32.xlu0 %v1339
        %v1341 = vpop.xlane.xlu0 %1340
        %v1342 = vsel %vm1034, %v1184, -inf
        %1343 = vmax.xlane.f32.xlu0 %v1342
        %v1344 = vpop.xlane.xlu0 %1343
        %v1345 = vsel %vm1034, %v1260, -inf
        %1346 = vmax.xlane.f32.xlu0 %v1345
        %v1347 = vpop.xlane.xlu0 %1346
        %v1348 = vsel %vm1034, %v1336, -inf
        %1349 = vmax.xlane.f32.xlu0 %v1348
        %v1350 = vpop.xlane.xlu0 %1349
        %v1351 = vsub.f32 %v1108, %v1341
        %v1352 = vsub.f32 %v1184, %v1344
        %v1353 = vsub.f32 %v1260, %v1347
        %v1354 = vsub.f32 %v1336, %v1350
        %v1355 = vmul.f32 %v1351, 1.442695
        %v1356 = vpow.pop %v1355
        %v1357 = vmul.f32 %v1352, 1.442695
        %v1358 = vpow.pop %v1357
        %v1359 = vmul.f32 %v1353, 1.442695
        %v1360 = vpow.pop %v1359
        %v1361 = vmul.f32 %v1354, 1.442695
        %v1362 = vpow.pop %v1361
        %v1363 = vsel %vm1034, %v1356, 0.0
        %1364 = vadd.xlane.f32.xlu0 %v1363
        %v1365 = vpop.xlane.xlu0 %1364
        %v1366 = vsel %vm1034, %v1358, 0.0
        %1367 = vadd.xlane.f32.xlu0 %v1366
        %v1368 = vpop.xlane.xlu0 %1367
        %v1369 = vsel %vm1034, %v1360, 0.0
        %1370 = vadd.xlane.f32.xlu0 %v1369
        %v1371 = vpop.xlane.xlu0 %1370
        %v1372 = vsel %vm1034, %v1362, 0.0
        %1373 = vadd.xlane.f32.xlu0 %v1372
        %v1374 = vpop.xlane.xlu0 %1373
        %v1375 = vrcp.pop %v1365
        %v1376 = vrcp.pop %v1368
        %v1377 = vrcp.pop %v1371
        %v1378 = vrcp.pop %v1374
        %v1379 = vmul.f32 %v1356, %v1375
        %v1380 = vmul.f32 %v1358, %v1376
        %v1381 = vmul.f32 %v1360, %v1377
        %v1382 = vmul.f32 %v1362, %v1378
        %v1384 = vsel %vm1034, %v1379, 0
        %1386 = vmatprep.subr.mxu0 0.0
        %1387 = vmatpush1.msra.mxu0 %v1030
        %1388 = vmatprep.subr.mxu0 0.0
        %1389 = vmatpush1.msra.mxu0 0.0
        %1390 = vmatprep.subr.mxu0 0.0
        %1391 = vmatpush1.msra.mxu0 0.0
        %1392 = vmatprep.subr.mxu0 0.0
        %1393 = vmatpush1.msra.mxu0 0.0
        %1394 = vmatprep.subr.mxu0 0.0
        %1395 = vmatpush1.msra.mxu0 0.0
        %1396 = vmatprep.subr.mxu0 0.0
        %1397 = vmatpush1.msra.mxu0 0.0
        %1398 = vmatprep.subr.mxu0 0.0
        %1399 = vmatpush1.msra.mxu0 0.0
        %1400 = vmatprep.subr.mxu0 0.0
        %1401 = vmatpush1.msra.mxu0 0.0
        %1402 = vmatprep.subr.mxu0 0.0
        %1403 = vmatpush1.msra.mxu0 0.0
        %1404 = vmatprep.subr.mxu0 0.0
        %1405 = vmatpush1.msra.mxu0 0.0
        %1406 = vmatprep.subr.mxu0 0.0
        %1407 = vmatpush1.msra.mxu0 0.0
        %1408 = vmatprep.subr.mxu0 0.0
        %1409 = vmatpush1.msra.mxu0 0.0
        %1410 = vmatprep.subr.mxu0 0.0
        %1411 = vmatpush1.msra.mxu0 0.0
        %1412 = vmatprep.subr.mxu0 0.0
        %1413 = vmatpush1.msra.mxu0 0.0
        %1414 = vmatprep.subr.mxu0 0.0
        %1415 = vmatpush1.msra.mxu0 0.0
        %1416 = vmatprep.subr.mxu0 0.0
        %1417 = vmatpush1.msra.mxu0 0.0
        %1418 = vmatprep.subr.mxu0 0.0
        %1419 = vmatpush1.msra.mxu0 0.0
        %1420 = vmatprep.subr.mxu0 0.0
        %1421 = vmatpush1.msra.mxu0 0.0
        %1422 = vmatprep.subr.mxu0 0.0
        %1423 = vmatpush1.msra.mxu0 0.0
        %1424 = vmatprep.subr.mxu0 0.0
        %1425 = vmatpush1.msra.mxu0 0.0
        %1426 = vmatprep.subr.mxu0 0.0
        %1427 = vmatpush1.msra.mxu0 0.0
        %1428 = vmatprep.subr.mxu0 0.0
        %1429 = vmatpush1.msra.mxu0 0.0
        %1430 = vmatprep.subr.mxu0 0.0
        %1431 = vmatpush1.msra.mxu0 0.0
        %1432 = vmatprep.subr.mxu0 0.0
        %1433 = vmatpush1.msra.mxu0 0.0
        %1434 = vmatprep.subr.mxu0 0.0
        %1435 = vmatpush1.msra.mxu0 0.0
        %1436 = vmatprep.subr.mxu0 0.0
        %1437 = vmatpush1.msra.mxu0 0.0
        %1438 = vmatprep.subr.mxu0 0.0
        %1439 = vmatpush1.msra.mxu0 0.0
        %1440 = vmatprep.subr.mxu0 0.0
        %1441 = vmatpush1.msra.mxu0 0.0
        %1442 = vmatprep.subr.mxu0 0.0
        %1443 = vmatpush1.msra.mxu0 0.0
        %1444 = vmatprep.subr.mxu0 0.0
        %1445 = vmatpush1.msra.mxu0 0.0
        %1446 = vmatprep.subr.mxu0 0.0
        %1447 = vmatpush1.msra.mxu0 0.0
        %1448 = vmatprep.subr.mxu0 0.0
        %1449 = vmatpush1.msra.mxu0 0.0
        %1450 = vmatprep.mubr.f32.mxu0 0.0
        %1451 = vmatmul.mubr.f32.gmra.mrb[0].mxu0 %v1384
        %v1452 = vpop.f32.mrb[0].mxu0
        %v1453 = vadd.f32 0.0, %v1452
        %v1454 = vpop.f32.mrb[0].mxu0
        %1455 = vdwg.mxu0
        %v1457 = vsel %vm1034, %v1380, 0
        %1459 = vmatprep.subr.mxu0 0.0
        %1460 = vmatpush1.msra.mxu0 %v1031
        %1461 = vmatprep.subr.mxu0 0.0
        %1462 = vmatpush1.msra.mxu0 0.0
        %1463 = vmatprep.subr.mxu0 0.0
        %1464 = vmatpush1.msra.mxu0 0.0
        %1465 = vmatprep.subr.mxu0 0.0
        %1466 = vmatpush1.msra.mxu0 0.0
        %1467 = vmatprep.subr.mxu0 0.0
        %1468 = vmatpush1.msra.mxu0 0.0
        %1469 = vmatprep.subr.mxu0 0.0
        %1470 = vmatpush1.msra.mxu0 0.0
        %1471 = vmatprep.subr.mxu0 0.0
        %1472 = vmatpush1.msra.mxu0 0.0
        %1473 = vmatprep.subr.mxu0 0.0
        %1474 = vmatpush1.msra.mxu0 0.0
        %1475 = vmatprep.subr.mxu0 0.0
        %1476 = vmatpush1.msra.mxu0 0.0
        %1477 = vmatprep.subr.mxu0 0.0
        %1478 = vmatpush1.msra.mxu0 0.0
        %1479 = vmatprep.subr.mxu0 0.0
        %1480 = vmatpush1.msra.mxu0 0.0
        %1481 = vmatprep.subr.mxu0 0.0
        %1482 = vmatpush1.msra.mxu0 0.0
        %1483 = vmatprep.subr.mxu0 0.0
        %1484 = vmatpush1.msra.mxu0 0.0
        %1485 = vmatprep.subr.mxu0 0.0
        %1486 = vmatpush1.msra.mxu0 0.0
        %1487 = vmatprep.subr.mxu0 0.0
        %1488 = vmatpush1.msra.mxu0 0.0
        %1489 = vmatprep.subr.mxu0 0.0
        %1490 = vmatpush1.msra.mxu0 0.0
        %1491 = vmatprep.subr.mxu0 0.0
        %1492 = vmatpush1.msra.mxu0 0.0
        %1493 = vmatprep.subr.mxu0 0.0
        %1494 = vmatpush1.msra.mxu0 0.0
        %1495 = vmatprep.subr.mxu0 0.0
        %1496 = vmatpush1.msra.mxu0 0.0
        %1497 = vmatprep.subr.mxu0 0.0
        %1498 = vmatpush1.msra.mxu0 0.0
        %1499 = vmatprep.subr.mxu0 0.0
        %1500 = vmatpush1.msra.mxu0 0.0
        %1501 = vmatprep.subr.mxu0 0.0
        %1502 = vmatpush1.msra.mxu0 0.0
        %1503 = vmatprep.subr.mxu0 0.0
        %1504 = vmatpush1.msra.mxu0 0.0
        %1505 = vmatprep.subr.mxu0 0.0
        %1506 = vmatpush1.msra.mxu0 0.0
        %1507 = vmatprep.subr.mxu0 0.0
        %1508 = vmatpush1.msra.mxu0 0.0
        %1509 = vmatprep.subr.mxu0 0.0
        %1510 = vmatpush1.msra.mxu0 0.0
        %1511 = vmatprep.subr.mxu0 0.0
        %1512 = vmatpush1.msra.mxu0 0.0
        %1513 = vmatprep.subr.mxu0 0.0
        %1514 = vmatpush1.msra.mxu0 0.0
        %1515 = vmatprep.subr.mxu0 0.0
        %1516 = vmatpush1.msra.mxu0 0.0
        %1517 = vmatprep.subr.mxu0 0.0
        %1518 = vmatpush1.msra.mxu0 0.0
        %1519 = vmatprep.subr.mxu0 0.0
        %1520 = vmatpush1.msra.mxu0 0.0
        %1521 = vmatprep.subr.mxu0 0.0
        %1522 = vmatpush1.msra.mxu0 0.0
        %1523 = vmatprep.mubr.f32.mxu0 0.0
        %1524 = vmatmul.mubr.f32.gmra.mrb[0].mxu0 %v1457
        %v1525 = vpop.f32.mrb[0].mxu0
        %v1526 = vadd.f32 0.0, %v1525
        %v1527 = vpop.f32.mrb[0].mxu0
        %1528 = vdwg.mxu0
        %v1530 = vsel %vm1034, %v1381, 0
        %1532 = vmatprep.subr.mxu0 0.0
        %1533 = vmatpush1.msra.mxu0 %v1032
        %1534 = vmatprep.subr.mxu0 0.0
        %1535 = vmatpush1.msra.mxu0 0.0
        %1536 = vmatprep.subr.mxu0 0.0
        %1537 = vmatpush1.msra.mxu0 0.0
        %1538 = vmatprep.subr.mxu0 0.0
        %1539 = vmatpush1.msra.mxu0 0.0
        %1540 = vmatprep.subr.mxu0 0.0
        %1541 = vmatpush1.msra.mxu0 0.0
        %1542 = vmatprep.subr.mxu0 0.0
        %1543 = vmatpush1.msra.mxu0 0.0
        %1544 = vmatprep.subr.mxu0 0.0
        %1545 = vmatpush1.msra.mxu0 0.0
        %1546 = vmatprep.subr.mxu0 0.0
        %1547 = vmatpush1.msra.mxu0 0.0
        %1548 = vmatprep.subr.mxu0 0.0
        %1549 = vmatpush1.msra.mxu0 0.0
        %1550 = vmatprep.subr.mxu0 0.0
        %1551 = vmatpush1.msra.mxu0 0.0
        %1552 = vmatprep.subr.mxu0 0.0
        %1553 = vmatpush1.msra.mxu0 0.0
        %1554 = vmatprep.subr.mxu0 0.0
        %1555 = vmatpush1.msra.mxu0 0.0
        %1556 = vmatprep.subr.mxu0 0.0
        %1557 = vmatpush1.msra.mxu0 0.0
        %1558 = vmatprep.subr.mxu0 0.0
        %1559 = vmatpush1.msra.mxu0 0.0
        %1560 = vmatprep.subr.mxu0 0.0
        %1561 = vmatpush1.msra.mxu0 0.0
        %1562 = vmatprep.subr.mxu0 0.0
        %1563 = vmatpush1.msra.mxu0 0.0
        %1564 = vmatprep.subr.mxu0 0.0
        %1565 = vmatpush1.msra.mxu0 0.0
        %1566 = vmatprep.subr.mxu0 0.0
        %1567 = vmatpush1.msra.mxu0 0.0
        %1568 = vmatprep.subr.mxu0 0.0
        %1569 = vmatpush1.msra.mxu0 0.0
        %1570 = vmatprep.subr.mxu0 0.0
        %1571 = vmatpush1.msra.mxu0 0.0
        %1572 = vmatprep.subr.mxu0 0.0
        %1573 = vmatpush1.msra.mxu0 0.0
        %1574 = vmatprep.subr.mxu0 0.0
        %1575 = vmatpush1.msra.mxu0 0.0
        %1576 = vmatprep.subr.mxu0 0.0
        %1577 = vmatpush1.msra.mxu0 0.0
        %1578 = vmatprep.subr.mxu0 0.0
        %1579 = vmatpush1.msra.mxu0 0.0
        %1580 = vmatprep.subr.mxu0 0.0
        %1581 = vmatpush1.msra.mxu0 0.0
        %1582 = vmatprep.subr.mxu0 0.0
        %1583 = vmatpush1.msra.mxu0 0.0
        %1584 = vmatprep.subr.mxu0 0.0
        %1585 = vmatpush1.msra.mxu0 0.0
        %1586 = vmatprep.subr.mxu0 0.0
        %1587 = vmatpush1.msra.mxu0 0.0
        %1588 = vmatprep.subr.mxu0 0.0
        %1589 = vmatpush1.msra.mxu0 0.0
        %1590 = vmatprep.subr.mxu0 0.0
        %1591 = vmatpush1.msra.mxu0 0.0
        %1592 = vmatprep.subr.mxu0 0.0
        %1593 = vmatpush1.msra.mxu0 0.0
        %1594 = vmatprep.subr.mxu0 0.0
        %1595 = vmatpush1.msra.mxu0 0.0
        %1596 = vmatprep.mubr.f32.mxu0 0.0
        %1597 = vmatmul.mubr.f32.gmra.mrb[0].mxu0 %v1530
        %v1598 = vpop.f32.mrb[0].mxu0
        %v1599 = vadd.f32 0.0, %v1598
        %v1600 = vpop.f32.mrb[0].mxu0
        %1601 = vdwg.mxu0
        %v1603 = vsel %vm1034, %v1382, 0
        %1605 = vmatprep.subr.mxu0 0.0
        %1606 = vmatpush1.msra.mxu0 %v1033
        %1607 = vmatprep.subr.mxu0 0.0
        %1608 = vmatpush1.msra.mxu0 0.0
        %1609 = vmatprep.subr.mxu0 0.0
        %1610 = vmatpush1.msra.mxu0 0.0
        %1611 = vmatprep.subr.mxu0 0.0
        %1612 = vmatpush1.msra.mxu0 0.0
        %1613 = vmatprep.subr.mxu0 0.0
        %1614 = vmatpush1.msra.mxu0 0.0
        %1615 = vmatprep.subr.mxu0 0.0
        %1616 = vmatpush1.msra.mxu0 0.0
        %1617 = vmatprep.subr.mxu0 0.0
        %1618 = vmatpush1.msra.mxu0 0.0
        %1619 = vmatprep.subr.mxu0 0.0
        %1620 = vmatpush1.msra.mxu0 0.0
        %1621 = vmatprep.subr.mxu0 0.0
        %1622 = vmatpush1.msra.mxu0 0.0
        %1623 = vmatprep.subr.mxu0 0.0
        %1624 = vmatpush1.msra.mxu0 0.0
        %1625 = vmatprep.subr.mxu0 0.0
        %1626 = vmatpush1.msra.mxu0 0.0
        %1627 = vmatprep.subr.mxu0 0.0
        %1628 = vmatpush1.msra.mxu0 0.0
        %1629 = vmatprep.subr.mxu0 0.0
        %1630 = vmatpush1.msra.mxu0 0.0
        %1631 = vmatprep.subr.mxu0 0.0
        %1632 = vmatpush1.msra.mxu0 0.0
        %1633 = vmatprep.subr.mxu0 0.0
        %1634 = vmatpush1.msra.mxu0 0.0
        %1635 = vmatprep.subr.mxu0 0.0
        %1636 = vmatpush1.msra.mxu0 0.0
        %1637 = vmatprep.subr.mxu0 0.0
        %1638 = vmatpush1.msra.mxu0 0.0
        %1639 = vmatprep.subr.mxu0 0.0
        %1640 = vmatpush1.msra.mxu0 0.0
        %1641 = vmatprep.subr.mxu0 0.0
        %1642 = vmatpush1.msra.mxu0 0.0
        %1643 = vmatprep.subr.mxu0 0.0
        %1644 = vmatpush1.msra.mxu0 0.0
        %1645 = vmatprep.subr.mxu0 0.0
        %1646 = vmatpush1.msra.mxu0 0.0
        %1647 = vmatprep.subr.mxu0 0.0
        %1648 = vmatpush1.msra.mxu0 0.0
        %1649 = vmatprep.subr.mxu0 0.0
        %1650 = vmatpush1.msra.mxu0 0.0
        %1651 = vmatprep.subr.mxu0 0.0
        %1652 = vmatpush1.msra.mxu0 0.0
        %1653 = vmatprep.subr.mxu0 0.0
        %1654 = vmatpush1.msra.mxu0 0.0
        %1655 = vmatprep.subr.mxu0 0.0
        %1656 = vmatpush1.msra.mxu0 0.0
        %1657 = vmatprep.subr.mxu0 0.0
        %1658 = vmatpush1.msra.mxu0 0.0
        %1659 = vmatprep.subr.mxu0 0.0
        %1660 = vmatpush1.msra.mxu0 0.0
        %1661 = vmatprep.subr.mxu0 0.0
        %1662 = vmatpush1.msra.mxu0 0.0
        %1663 = vmatprep.subr.mxu0 0.0
        %1664 = vmatpush1.msra.mxu0 0.0
        %1665 = vmatprep.subr.mxu0 0.0
        %1666 = vmatpush1.msra.mxu0 0.0
        %1667 = vmatprep.subr.mxu0 0.0
        %1668 = vmatpush1.msra.mxu0 0.0
        %1669 = vmatprep.mubr.f32.mxu0 0.0
        %1670 = vmatmul.mubr.f32.gmra.mrb[0].mxu0 %v1603
        %v1671 = vpop.f32.mrb[0].mxu0
        %v1672 = vadd.f32 0.0, %v1671
        %v1673 = vpop.f32.mrb[0].mxu0
        %1674 = vdwg.mxu0
        %v1675 = vcombine.low %v1453, %v1599
        %v1676 = vcombine.high %v1453, %v1599
        %v1678 = vunpack.c.l.s4 1983009808
        %v1679 = vunpack.c.0.s8 %v1678
        %v1680 = vlaneseq
        %v1681 = vshrl.u32 %v1680, 7
        %v1682 = vsub.s32 %v1679, %v1681
        %v1683 = vrot.slane %v1675, %v1682
        %v1685 = vunpack.c.l.s4 1983009808
        %v1686 = vunpack.c.0.s8 %v1685
        %v1687 = vlaneseq
        %v1688 = vshrl.u32 %v1687, 7
        %v1689 = vsub.s32 %v1686, %v1688
        %v1690 = vrot.slane %v1676, %v1689
        %v1691 = vcombine.low %v1526, %v1672
        %v1692 = vcombine.high %v1526, %v1672
        %v1694 = vunpack.c.l.s4 1983009808
        %v1695 = vunpack.c.0.s8 %v1694
        %v1696 = vlaneseq
        %v1697 = vshrl.u32 %v1696, 7
        %v1698 = vsub.s32 %v1695, %v1697
        %v1699 = vrot.slane %v1691, %v1698
        %v1701 = vunpack.c.l.s4 1983009808
        %v1702 = vunpack.c.0.s8 %v1701
        %v1703 = vlaneseq
        %v1704 = vshrl.u32 %v1703, 7
        %v1705 = vsub.s32 %v1702, %v1704
        %v1706 = vrot.slane %v1692, %v1705
        %v1707 = vcombine.low %v1683, %v1699
        %v1708 = vcombine.high %v1683, %v1699
        %v1710 = vunpack.c.l.s4 1934713408
        %v1711 = vunpack.c.0.s8 %v1710
        %v1712 = vlaneseq
        %v1713 = vshrl.u32 %v1712, 7
        %v1714 = vsub.s32 %v1711, %v1713
        %v1715 = vrot.slane %v1707, %v1714
        %v1717 = vunpack.c.l.s4 1934713408
        %v1718 = vunpack.c.0.s8 %v1717
        %v1719 = vlaneseq
        %v1720 = vshrl.u32 %v1719, 7
        %v1721 = vsub.s32 %v1718, %v1720
        %v1722 = vrot.slane %v1708, %v1721
        %v1723 = vcombine.low %v1690, %v1706
        %v1724 = vcombine.high %v1690, %v1706
        %v1726 = vunpack.c.l.s4 1934713408
        %v1727 = vunpack.c.0.s8 %v1726
        %v1728 = vlaneseq
        %v1729 = vshrl.u32 %v1728, 7
        %v1730 = vsub.s32 %v1727, %v1729
        %v1731 = vrot.slane %v1723, %v1730
        %v1733 = vunpack.c.l.s4 1934713408
        %v1734 = vunpack.c.0.s8 %v1733
        %v1735 = vlaneseq
        %v1736 = vshrl.u32 %v1735, 7
        %v1737 = vsub.s32 %v1734, %v1736
        %v1738 = vrot.slane %v1724, %v1737
        %v1739 = vcombine.high %v1715, 0.0
        %v1740 = vcombine.high %v1722, 0.0
        %v1741 = vcombine.high %v1731, 0.0
        %v1742 = vcombine.high %v1738, 0.0
        %v1743 = vcombine.low %v1715, %v1722
        %v1745 = vunpack.c.l.s4 1983009808
        %v1746 = vunpack.c.0.s8 %v1745
        %v1747 = vlaneseq
        %v1748 = vshrl.u32 %v1747, 7
        %v1749 = vsub.s32 %v1746, %v1748
        %v1750 = vrot.slane %v1743, %v1749
        %v1751 = vcombine.low %v1739, %v1740
        %v1753 = vunpack.c.l.s4 1983009808
        %v1754 = vunpack.c.0.s8 %v1753
        %v1755 = vlaneseq
        %v1756 = vshrl.u32 %v1755, 7
        %v1757 = vsub.s32 %v1754, %v1756
        %v1758 = vrot.slane %v1751, %v1757
        %v1759 = vcombine.low %v1731, %v1738
        %v1761 = vunpack.c.l.s4 1983009808
        %v1762 = vunpack.c.0.s8 %v1761
        %v1763 = vlaneseq
        %v1764 = vshrl.u32 %v1763, 7
        %v1765 = vsub.s32 %v1762, %v1764
        %v1766 = vrot.slane %v1759, %v1765
        %v1767 = vcombine.low %v1741, %v1742
        %v1769 = vunpack.c.l.s4 1983009808
        %v1770 = vunpack.c.0.s8 %v1769
        %v1771 = vlaneseq
        %v1772 = vshrl.u32 %v1771, 7
        %v1773 = vsub.s32 %v1770, %v1772
        %v1774 = vrot.slane %v1767, %v1773
        %v1775 = vcombine.low %v1750, %v1758
        %v1776 = vcombine.high %v1750, %v1758
        %v1778 = vunpack.c.l.s4 1934713408
        %v1779 = vunpack.c.0.s8 %v1778
        %v1780 = vlaneseq
        %v1781 = vshrl.u32 %v1780, 7
        %v1782 = vsub.s32 %v1779, %v1781
        %v1783 = vrot.slane %v1775, %v1782
        %v1785 = vunpack.c.l.s4 1934713408
        %v1786 = vunpack.c.0.s8 %v1785
        %v1787 = vlaneseq
        %v1788 = vshrl.u32 %v1787, 7
        %v1789 = vsub.s32 %v1786, %v1788
        %v1790 = vrot.slane %v1776, %v1789
        %v1791 = vcombine.low %v1766, %v1774
        %v1792 = vcombine.high %v1766, %v1774
        %v1794 = vunpack.c.l.s4 1934713408
        %v1795 = vunpack.c.0.s8 %v1794
        %v1796 = vlaneseq
        %v1797 = vshrl.u32 %v1796, 7
        %v1798 = vsub.s32 %v1795, %v1797
        %v1799 = vrot.slane %v1791, %v1798
        %v1801 = vunpack.c.l.s4 1934713408
        %v1802 = vunpack.c.0.s8 %v1801
        %v1803 = vlaneseq
        %v1804 = vshrl.u32 %v1803, 7
        %v1805 = vsub.s32 %v1802, %v1804
        %v1806 = vrot.slane %v1792, %v1805
        %v1807 = vcombine.low %v1783, %v1799
        %v1808 = vcombine.high %v1783, %v1799
        %v1809 = vcombine.low %v1790, %v1806
        %v1810 = vcombine.high %v1790, %v1806
        %1812 = vrot.lane.b32.xlu0 %v1808, 8
        %v1813 = vpop.permute.xlu0 %1812
        %1816 = vrot.lane.b32.xlu0 %v1809, 16
        %v1817 = vpop.permute.xlu0 %1816
        %1820 = vrot.lane.b32.xlu0 %v1810, 24
        %v1821 = vpop.permute.xlu0 %1820
        %v1823 = vsel %vm1034, %v1807, %v1813
        %vm1824 = vcmask 130048
        %v1825 = vsel %vm1824, %v1823, %v1817
        %vm1826 = vcmask 195584
        %v1827 = vsel %vm1826, %v1825, %v1821
        %s1828 = scalar_lea.vmem %s3, 96
        %v1829 = vld [vmem:[%s1828] sm:$0xff]
        %v1830 = vld [vmem:[%s1828 + $0x8] sm:$0xff]
        %v1831 = vld [vmem:[%s1828 + $0x10] sm:$0xff]
        %v1832 = vld [vmem:[%s1828 + $0x18] sm:$0xff]
        %v1834 = vsel %vm329, %v1827, 0
        %1836 = vmatprep.subr.mxu0 0.0
        %1837 = vmatpush1.msra.mxu0 %v1829
        %1838 = vmatprep.subr.mxu0 0.0
        %1839 = vmatpush1.msra.mxu0 %v1830
        %1840 = vmatprep.subr.mxu0 0.0
        %1841 = vmatpush1.msra.mxu0 %v1831
        %1842 = vmatprep.subr.mxu0 0.0
        %1843 = vmatpush1.msra.mxu0 %v1832
        %1844 = vmatprep.subr.mxu0 0.0
        %1845 = vmatpush1.msra.mxu0 0.0
        %1846 = vmatprep.subr.mxu0 0.0
        %1847 = vmatpush1.msra.mxu0 0.0
        %1848 = vmatprep.subr.mxu0 0.0
        %1849 = vmatpush1.msra.mxu0 0.0
        %1850 = vmatprep.subr.mxu0 0.0
        %1851 = vmatpush1.msra.mxu0 0.0
        %1852 = vmatprep.subr.mxu0 0.0
        %1853 = vmatpush1.msra.mxu0 0.0
        %1854 = vmatprep.subr.mxu0 0.0
        %1855 = vmatpush1.msra.mxu0 0.0
        %1856 = vmatprep.subr.mxu0 0.0
        %1857 = vmatpush1.msra.mxu0 0.0
        %1858 = vmatprep.subr.mxu0 0.0
        %1859 = vmatpush1.msra.mxu0 0.0
        %1860 = vmatprep.subr.mxu0 0.0
        %1861 = vmatpush1.msra.mxu0 0.0
        %1862 = vmatprep.subr.mxu0 0.0
        %1863 = vmatpush1.msra.mxu0 0.0
        %1864 = vmatprep.subr.mxu0 0.0
        %1865 = vmatpush1.msra.mxu0 0.0
        %1866 = vmatprep.subr.mxu0 0.0
        %1867 = vmatpush1.msra.mxu0 0.0
        %1868 = vmatprep.subr.mxu0 0.0
        %1869 = vmatpush1.msra.mxu0 0.0
        %1870 = vmatprep.subr.mxu0 0.0
        %1871 = vmatpush1.msra.mxu0 0.0
        %1872 = vmatprep.subr.mxu0 0.0
        %1873 = vmatpush1.msra.mxu0 0.0
        %1874 = vmatprep.subr.mxu0 0.0
        %1875 = vmatpush1.msra.mxu0 0.0
        %1876 = vmatprep.subr.mxu0 0.0
        %1877 = vmatpush1.msra.mxu0 0.0
        %1878 = vmatprep.subr.mxu0 0.0
        %1879 = vmatpush1.msra.mxu0 0.0
        %1880 = vmatprep.subr.mxu0 0.0
        %1881 = vmatpush1.msra.mxu0 0.0
        %1882 = vmatprep.subr.mxu0 0.0
        %1883 = vmatpush1.msra.mxu0 0.0
        %1884 = vmatprep.subr.mxu0 0.0
        %1885 = vmatpush1.msra.mxu0 0.0
        %1886 = vmatprep.subr.mxu0 0.0
        %1887 = vmatpush1.msra.mxu0 0.0
        %1888 = vmatprep.subr.mxu0 0.0
        %1889 = vmatpush1.msra.mxu0 0.0
        %1890 = vmatprep.subr.mxu0 0.0
        %1891 = vmatpush1.msra.mxu0 0.0
        %1892 = vmatprep.subr.mxu0 0.0
        %1893 = vmatpush1.msra.mxu0 0.0
        %1894 = vmatprep.subr.mxu0 0.0
        %1895 = vmatpush1.msra.mxu0 0.0
        %1896 = vmatprep.subr.mxu0 0.0
        %1897 = vmatpush1.msra.mxu0 0.0
        %1898 = vmatprep.subr.mxu0 0.0
        %1899 = vmatpush1.msra.mxu0 0.0
        %1900 = vmatprep.mubr.f32.mxu0 0.0
        %1901 = vmatmul.mubr.f32.gmra.mrb[0].mxu0 %v1834
        %v1902 = vpop.f32.mrb[0].mxu0
        %v1903 = vadd.f32 0.0, %v1902
        %v1904 = vpop.f32.mrb[0].mxu0
        %1905 = vdwg.mxu0
        %v1906 = vadd.f32 %v326, %v1903
        %v1907 = vld [vmem:[%s7 + $0x5] sm:$0x1]
        %v1908 = vlaneseq
        %v1909 = vshrl.u32 %v1908, 7
        %v1910 = vsub.s32 0, %v1909
        %v1911 = vrot.slane %v1907, %v1910
        %v1912 = vadd.f32 %v1906, %v1911
        %v1913 = vld [vmem:[%s7 + $0x6] sm:$0x1]
        %v1914 = vld [vmem:[%s7 + $0x7] sm:$0x1]
        %v1915 = vsel %vm329, %v1912, 0.0
        %1916 = vadd.xlane.f32.xlu0 %v1915
        %v1917 = vpop.xlane.xlu0 %1916
        %v1918 = vmul.f32 %v1917, %v333
        %v1919 = vsub.f32 %v1912, %v1918
        %v1920 = vmul.f32 %v1919, %v1919
        %v1921 = vsel %vm329, %v1920, 0.0
        %1922 = vadd.xlane.f32.xlu0 %v1921
        %v1923 = vpop.xlane.xlu0 %1922
        %v1924 = vmul.f32 %v1923, %v333
        %v1925 = vadd.f32 %v1924, 1e-05
        %v1926 = vrsqrt.pop %v1925
        %v1927 = vmul.f32 %v1919, %v1926
        %v1928 = vlaneseq
        %v1929 = vshrl.u32 %v1928, 7
        %v1930 = vsub.s32 0, %v1929
        %v1931 = vrot.slane %v1913, %v1930
        %v1932 = vmul.f32 %v1927, %v1931
        %v1933 = vlaneseq
        %v1934 = vshrl.u32 %v1933, 7
        %v1935 = vsub.s32 0, %v1934
        %v1936 = vrot.slane %v1914, %v1935
        %v1937 = vadd.f32 %v1932, %v1936
        %v1938 = vld [vmem:[%s4] sm:$0xff]
        %v1939 = vld [vmem:[%s4 + $0x8] sm:$0xff]
        %v1940 = vld [vmem:[%s4 + $0x10] sm:$0xff]
        %v1941 = vld [vmem:[%s4 + $0x18] sm:$0xff]
        %v1942 = vld [vmem:[%s7 + $0x8] sm:$0x1]
        %v1943 = vlaneseq
        %v1944 = vshrl.u32 %v1943, 7
        %v1945 = vsub.s32 0, %v1944
        %v1946 = vrot.slane %v1942, %v1945
        %v1948 = vsel %vm329, %v1937, 0
        %1950 = vmatprep.subr.mxu0 0.0
        %1951 = vmatpush1.msra.mxu0 %v1938
        %1952 = vmatprep.subr.mxu0 0.0
        %1953 = vmatpush1.msra.mxu0 %v1939
        %1954 = vmatprep.subr.mxu0 0.0
        %1955 = vmatpush1.msra.mxu0 %v1940
        %1956 = vmatprep.subr.mxu0 0.0
        %1957 = vmatpush1.msra.mxu0 %v1941
        %1958 = vmatprep.subr.mxu0 0.0
        %1959 = vmatpush1.msra.mxu0 0.0
        %1960 = vmatprep.subr.mxu0 0.0
        %1961 = vmatpush1.msra.mxu0 0.0
        %1962 = vmatprep.subr.mxu0 0.0
        %1963 = vmatpush1.msra.mxu0 0.0
        %1964 = vmatprep.subr.mxu0 0.0
        %1965 = vmatpush1.msra.mxu0 0.0
        %1966 = vmatprep.subr.mxu0 0.0
        %1967 = vmatpush1.msra.mxu0 0.0
        %1968 = vmatprep.subr.mxu0 0.0
        %1969 = vmatpush1.msra.mxu0 0.0
        %1970 = vmatprep.subr.mxu0 0.0
        %1971 = vmatpush1.msra.mxu0 0.0
        %1972 = vmatprep.subr.mxu0 0.0
        %1973 = vmatpush1.msra.mxu0 0.0
        %1974 = vmatprep.subr.mxu0 0.0
        %1975 = vmatpush1.msra.mxu0 0.0
        %1976 = vmatprep.subr.mxu0 0.0
        %1977 = vmatpush1.msra.mxu0 0.0
        %1978 = vmatprep.subr.mxu0 0.0
        %1979 = vmatpush1.msra.mxu0 0.0
        %1980 = vmatprep.subr.mxu0 0.0
        %1981 = vmatpush1.msra.mxu0 0.0
        %1982 = vmatprep.subr.mxu0 0.0
        %1983 = vmatpush1.msra.mxu0 0.0
        %1984 = vmatprep.subr.mxu0 0.0
        %1985 = vmatpush1.msra.mxu0 0.0
        %1986 = vmatprep.subr.mxu0 0.0
        %1987 = vmatpush1.msra.mxu0 0.0
        %1988 = vmatprep.subr.mxu0 0.0
        %1989 = vmatpush1.msra.mxu0 0.0
        %1990 = vmatprep.subr.mxu0 0.0
        %1991 = vmatpush1.msra.mxu0 0.0
        %1992 = vmatprep.subr.mxu0 0.0
        %1993 = vmatpush1.msra.mxu0 0.0
        %1994 = vmatprep.subr.mxu0 0.0
        %1995 = vmatpush1.msra.mxu0 0.0
        %1996 = vmatprep.subr.mxu0 0.0
        %1997 = vmatpush1.msra.mxu0 0.0
        %1998 = vmatprep.subr.mxu0 0.0
        %1999 = vmatpush1.msra.mxu0 0.0
        %2000 = vmatprep.subr.mxu0 0.0
        %2001 = vmatpush1.msra.mxu0 0.0
        %2002 = vmatprep.subr.mxu0 0.0
        %2003 = vmatpush1.msra.mxu0 0.0
        %2004 = vmatprep.subr.mxu0 0.0
        %2005 = vmatpush1.msra.mxu0 0.0
        %2006 = vmatprep.subr.mxu0 0.0
        %2007 = vmatpush1.msra.mxu0 0.0
        %2008 = vmatprep.subr.mxu0 0.0
        %2009 = vmatpush1.msra.mxu0 0.0
        %2010 = vmatprep.subr.mxu0 0.0
        %2011 = vmatpush1.msra.mxu0 0.0
        %2012 = vmatprep.subr.mxu0 0.0
        %2013 = vmatpush1.msra.mxu0 0.0
        %2014 = vmatprep.mubr.f32.mxu0 0.0
        %2015 = vmatmul.mubr.f32.gmra.mrb[0].mxu0 %v1948
        %v2016 = vpop.f32.mrb[0].mxu0
        %v2017 = vadd.f32 %v1946, %v2016
        %v2018 = vpop.f32.mrb[0].mxu0
        %2019 = vdwg.mxu0
        %v2020 = vmul.f32 %v2017, %v2017
        %v2021 = vmul.f32 %v2017, %v2020
        %v2022 = vmul.f32 %v2021, 0.044715
        %v2023 = vadd.f32 %v2017, %v2022
        %v2024 = vmul.f32 %v2023, 0.7978846
        %v2025 = vtanh.pop %v2024
        %v2026 = vadd.f32 %v2025, 1.0
        %v2027 = vmul.f32 %v2026, 0.5
        %v2028 = vmul.f32 %v2017, %v2027
        %v2029 = vld [vmem:[%s5] sm:$0xff]
        %v2030 = vld [vmem:[%s5 + $0x8] sm:$0xff]
        %v2031 = vld [vmem:[%s5 + $0x10] sm:$0xff]
        %v2032 = vld [vmem:[%s5 + $0x18] sm:$0xff]
        %v2033 = vld [vmem:[%s5 + $0x20] sm:$0xff]
        %v2034 = vld [vmem:[%s5 + $0x28] sm:$0xff]
        %v2035 = vld [vmem:[%s5 + $0x30] sm:$0xff]
        %v2036 = vld [vmem:[%s5 + $0x38] sm:$0xff]
        %v2037 = vld [vmem:[%s5 + $0x40] sm:$0xff]
        %v2038 = vld [vmem:[%s5 + $0x48] sm:$0xff]
        %v2039 = vld [vmem:[%s5 + $0x50] sm:$0xff]
        %v2040 = vld [vmem:[%s5 + $0x58] sm:$0xff]
        %v2041 = vld [vmem:[%s5 + $0x60] sm:$0xff]
        %v2042 = vld [vmem:[%s5 + $0x68] sm:$0xff]
        %v2043 = vld [vmem:[%s5 + $0x70] sm:$0xff]
        %v2044 = vld [vmem:[%s5 + $0x78] sm:$0xff]
        %2045 = vmatprep.subr.mxu0 0.0
        %2046 = vmatpush1.msra.mxu0 %v2029
        %2047 = vmatprep.subr.mxu0 0.0
        %2048 = vmatpush1.msra.mxu0 %v2030
        %2049 = vmatprep.subr.mxu0 0.0
        %2050 = vmatpush1.msra.mxu0 %v2031
        %2051 = vmatprep.subr.mxu0 0.0
        %2052 = vmatpush1.msra.mxu0 %v2032
        %2053 = vmatprep.subr.mxu0 0.0
        %2054 = vmatpush1.msra.mxu0 %v2033
        %2055 = vmatprep.subr.mxu0 0.0
        %2056 = vmatpush1.msra.mxu0 %v2034
        %2057 = vmatprep.subr.mxu0 0.0
        %2058 = vmatpush1.msra.mxu0 %v2035
        %2059 = vmatprep.subr.mxu0 0.0
        %2060 = vmatpush1.msra.mxu0 %v2036
        %2061 = vmatprep.subr.mxu0 0.0
        %2062 = vmatpush1.msra.mxu0 %v2037
        %2063 = vmatprep.subr.mxu0 0.0
        %2064 = vmatpush1.msra.mxu0 %v2038
        %2065 = vmatprep.subr.mxu0 0.0
        %2066 = vmatpush1.msra.mxu0 %v2039
        %2067 = vmatprep.subr.mxu0 0.0
        %2068 = vmatpush1.msra.mxu0 %v2040
        %2069 = vmatprep.subr.mxu0 0.0
        %2070 = vmatpush1.msra.mxu0 %v2041
        %2071 = vmatprep.subr.mxu0 0.0
        %2072 = vmatpush1.msra.mxu0 %v2042
        %2073 = vmatprep.subr.mxu0 0.0
        %2074 = vmatpush1.msra.mxu0 %v2043
        %2075 = vmatprep.subr.mxu0 0.0
        %2076 = vmatpush1.msra.mxu0 %v2044
        %2077 = vmatprep.subr.mxu0 0.0
        %2078 = vmatpush1.msra.mxu0 0.0
        %2079 = vmatprep.subr.mxu0 0.0
        %2080 = vmatpush1.msra.mxu0 0.0
        %2081 = vmatprep.subr.mxu0 0.0
        %2082 = vmatpush1.msra.mxu0 0.0
        %2083 = vmatprep.subr.mxu0 0.0
        %2084 = vmatpush1.msra.mxu0 0.0
        %2085 = vmatprep.subr.mxu0 0.0
        %2086 = vmatpush1.msra.mxu0 0.0
        %2087 = vmatprep.subr.mxu0 0.0
        %2088 = vmatpush1.msra.mxu0 0.0
        %2089 = vmatprep.subr.mxu0 0.0
        %2090 = vmatpush1.msra.mxu0 0.0
        %2091 = vmatprep.subr.mxu0 0.0
        %2092 = vmatpush1.msra.mxu0 0.0
        %2093 = vmatprep.subr.mxu0 0.0
        %2094 = vmatpush1.msra.mxu0 0.0
        %2095 = vmatprep.subr.mxu0 0.0
        %2096 = vmatpush1.msra.mxu0 0.0
        %2097 = vmatprep.subr.mxu0 0.0
        %2098 = vmatpush1.msra.mxu0 0.0
        %2099 = vmatprep.subr.mxu0 0.0
        %2100 = vmatpush1.msra.mxu0 0.0
        %2101 = vmatprep.subr.mxu0 0.0
        %2102 = vmatpush1.msra.mxu0 0.0
        %2103 = vmatprep.subr.mxu0 0.0
        %2104 = vmatpush1.msra.mxu0 0.0
        %2105 = vmatprep.subr.mxu0 0.0
        %2106 = vmatpush1.msra.mxu0 0.0
        %2107 = vmatprep.subr.mxu0 0.0
        %2108 = vmatpush1.msra.mxu0 0.0
        %2109 = vmatprep.mubr.f32.mxu0 0.0
        %2110 = vmatmul.mubr.f32.gmra.mrb[0].mxu0 %v2028
        %v2111 = vpop.f32.mrb[0].mxu0
        %v2112 = vadd.f32 0.0, %v2111
        %v2113 = vpop.f32.mrb[0].mxu0
        %2114 = vdwg.mxu0
        %v2115 = vadd.f32 %v1912, %v2112
        %v2116 = vld [vmem:[%s7 + $0x9] sm:$0x1]
        %v2117 = vlaneseq
        %v2118 = vshrl.u32 %v2117, 7
        %v2119 = vsub.s32 0, %v2118
        %v2120 = vrot.slane %v2116, %v2119
        %v2121 = vadd.f32 %v2115, %v2120
        %s2122 = scalar_lea.vmem %s7, 16
        %v2123 = vld [vmem:[%s2122] sm:$0x1]
        %v2124 = vld [vmem:[%s2122 + $0x1] sm:$0x1]
        %v2125 = vsel %vm329, %v2121, 0.0
        %2126 = vadd.xlane.f32.xlu0 %v2125
        %v2127 = vpop.xlane.xlu0 %2126
        %v2128 = vmul.f32 %v2127, %v333
        %v2129 = vsub.f32 %v2121, %v2128
        %v2130 = vmul.f32 %v2129, %v2129
        %v2131 = vsel %vm329, %v2130, 0.0
        %2132 = vadd.xlane.f32.xlu0 %v2131
        %v2133 = vpop.xlane.xlu0 %2132
        %v2134 = vmul.f32 %v2133, %v333
        %v2135 = vadd.f32 %v2134, 1e-05
        %v2136 = vrsqrt.pop %v2135
        %v2137 = vmul.f32 %v2129, %v2136
        %v2138 = vlaneseq
        %v2139 = vshrl.u32 %v2138, 7
        %v2140 = vsub.s32 0, %v2139
        %v2141 = vrot.slane %v2123, %v2140
        %v2142 = vmul.f32 %v2137, %v2141
        %v2143 = vlaneseq
        %v2144 = vshrl.u32 %v2143, 7
        %v2145 = vsub.s32 0, %v2144
        %v2146 = vrot.slane %v2124, %v2145
        %v2147 = vadd.f32 %v2142, %v2146
        %s2148 = scalar_lea.vmem %s3, 128
        %v2149 = vld [vmem:[%s2148] sm:$0xff]
        %v2150 = vld [vmem:[%s2148 + $0x8] sm:$0xff]
        %v2151 = vld [vmem:[%s2148 + $0x10] sm:$0xff]
        %v2152 = vld [vmem:[%s2148 + $0x18] sm:$0xff]
        %v2153 = vld [vmem:[%s2122 + $0x2] sm:$0x1]
        %v2154 = vlaneseq
        %v2155 = vshrl.u32 %v2154, 7
        %v2156 = vsub.s32 0, %v2155
        %v2157 = vrot.slane %v2153, %v2156
        %v2159 = vsel %vm329, %v2147, 0
        %2161 = vmatprep.subr.mxu0 0.0
        %2162 = vmatpush1.msra.mxu0 %v2149
        %2163 = vmatprep.subr.mxu0 0.0
        %2164 = vmatpush1.msra.mxu0 %v2150
        %2165 = vmatprep.subr.mxu0 0.0
        %2166 = vmatpush1.msra.mxu0 %v2151
        %2167 = vmatprep.subr.mxu0 0.0
        %2168 = vmatpush1.msra.mxu0 %v2152
        %2169 = vmatprep.subr.mxu0 0.0
        %2170 = vmatpush1.msra.mxu0 0.0
        %2171 = vmatprep.subr.mxu0 0.0
        %2172 = vmatpush1.msra.mxu0 0.0
        %2173 = vmatprep.subr.mxu0 0.0
        %2174 = vmatpush1.msra.mxu0 0.0
        %2175 = vmatprep.subr.mxu0 0.0
        %2176 = vmatpush1.msra.mxu0 0.0
        %2177 = vmatprep.subr.mxu0 0.0
        %2178 = vmatpush1.msra.mxu0 0.0
        %2179 = vmatprep.subr.mxu0 0.0
        %2180 = vmatpush1.msra.mxu0 0.0
        %2181 = vmatprep.subr.mxu0 0.0
        %2182 = vmatpush1.msra.mxu0 0.0
        %2183 = vmatprep.subr.mxu0 0.0
        %2184 = vmatpush1.msra.mxu0 0.0
        %2185 = vmatprep.subr.mxu0 0.0
        %2186 = vmatpush1.msra.mxu0 0.0
        %2187 = vmatprep.subr.mxu0 0.0
        %2188 = vmatpush1.msra.mxu0 0.0
        %2189 = vmatprep.subr.mxu0 0.0
        %2190 = vmatpush1.msra.mxu0 0.0
        %2191 = vmatprep.subr.mxu0 0.0
        %2192 = vmatpush1.msra.mxu0 0.0
        %2193 = vmatprep.subr.mxu0 0.0
        %2194 = vmatpush1.msra.mxu0 0.0
        %2195 = vmatprep.subr.mxu0 0.0
        %2196 = vmatpush1.msra.mxu0 0.0
        %2197 = vmatprep.subr.mxu0 0.0
        %2198 = vmatpush1.msra.mxu0 0.0
        %2199 = vmatprep.subr.mxu0 0.0
        %2200 = vmatpush1.msra.mxu0 0.0
        %2201 = vmatprep.subr.mxu0 0.0
        %2202 = vmatpush1.msra.mxu0 0.0
        %2203 = vmatprep.subr.mxu0 0.0
        %2204 = vmatpush1.msra.mxu0 0.0
        %2205 = vmatprep.subr.mxu0 0.0
        %2206 = vmatpush1.msra.mxu0 0.0
        %2207 = vmatprep.subr.mxu0 0.0
        %2208 = vmatpush1.msra.mxu0 0.0
        %2209 = vmatprep.subr.mxu0 0.0
        %2210 = vmatpush1.msra.mxu0 0.0
        %2211 = vmatprep.subr.mxu0 0.0
        %2212 = vmatpush1.msra.mxu0 0.0
        %2213 = vmatprep.subr.mxu0 0.0
        %2214 = vmatpush1.msra.mxu0 0.0
        %2215 = vmatprep.subr.mxu0 0.0
        %2216 = vmatpush1.msra.mxu0 0.0
        %2217 = vmatprep.subr.mxu0 0.0
        %2218 = vmatpush1.msra.mxu0 0.0
        %2219 = vmatprep.subr.mxu0 0.0
        %2220 = vmatpush1.msra.mxu0 0.0
        %2221 = vmatprep.subr.mxu0 0.0
        %2222 = vmatpush1.msra.mxu0 0.0
        %2223 = vmatprep.subr.mxu0 0.0
        %2224 = vmatpush1.msra.mxu0 0.0
        %2225 = vmatprep.mubr.f32.mxu0 0.0
        %2226 = vmatmul.mubr.f32.gmra.mrb[0].mxu0 %v2159
        %v2227 = vpop.f32.mrb[0].mxu0
        %v2228 = vadd.f32 %v2157, %v2227
        %v2229 = vpop.f32.mrb[0].mxu0
        %2230 = vdwg.mxu0
        %s2231 = scalar_lea.vmem %s3, 160
        %v2232 = vld [vmem:[%s2231] sm:$0xff]
        %v2233 = vld [vmem:[%s2231 + $0x8] sm:$0xff]
        %v2234 = vld [vmem:[%s2231 + $0x10] sm:$0xff]
        %v2235 = vld [vmem:[%s2231 + $0x18] sm:$0xff]
        %v2236 = vld [vmem:[%s2122 + $0x3] sm:$0x1]
        %v2237 = vlaneseq
        %v2238 = vshrl.u32 %v2237, 7
        %v2239 = vsub.s32 0, %v2238
        %v2240 = vrot.slane %v2236, %v2239
        %2241 = vmatprep.subr.mxu0 0.0
        %2242 = vmatpush1.msra.mxu0 %v2232
        %2243 = vmatprep.subr.mxu0 0.0
        %2244 = vmatpush1.msra.mxu0 %v2233
        %2245 = vmatprep.subr.mxu0 0.0
        %2246 = vmatpush1.msra.mxu0 %v2234
        %2247 = vmatprep.subr.mxu0 0.0
        %2248 = vmatpush1.msra.mxu0 %v2235
        %2249 = vmatprep.subr.mxu0 0.0
        %2250 = vmatpush1.msra.mxu0 0.0
        %2251 = vmatprep.subr.mxu0 0.0
        %2252 = vmatpush1.msra.mxu0 0.0
        %2253 = vmatprep.subr.mxu0 0.0
        %2254 = vmatpush1.msra.mxu0 0.0
        %2255 = vmatprep.subr.mxu0 0.0
        %2256 = vmatpush1.msra.mxu0 0.0
        %2257 = vmatprep.subr.mxu0 0.0
        %2258 = vmatpush1.msra.mxu0 0.0
        %2259 = vmatprep.subr.mxu0 0.0
        %2260 = vmatpush1.msra.mxu0 0.0
        %2261 = vmatprep.subr.mxu0 0.0
        %2262 = vmatpush1.msra.mxu0 0.0
        %2263 = vmatprep.subr.mxu0 0.0
        %2264 = vmatpush1.msra.mxu0 0.0
        %2265 = vmatprep.subr.mxu0 0.0
        %2266 = vmatpush1.msra.mxu0 0.0
        %2267 = vmatprep.subr.mxu0 0.0
        %2268 = vmatpush1.msra.mxu0 0.0
        %2269 = vmatprep.subr.mxu0 0.0
        %2270 = vmatpush1.msra.mxu0 0.0
        %2271 = vmatprep.subr.mxu0 0.0
        %2272 = vmatpush1.msra.mxu0 0.0
        %2273 = vmatprep.subr.mxu0 0.0
        %2274 = vmatpush1.msra.mxu0 0.0
        %2275 = vmatprep.subr.mxu0 0.0
        %2276 = vmatpush1.msra.mxu0 0.0
        %2277 = vmatprep.subr.mxu0 0.0
        %2278 = vmatpush1.msra.mxu0 0.0
        %2279 = vmatprep.subr.mxu0 0.0
        %2280 = vmatpush1.msra.mxu0 0.0
        %2281 = vmatprep.subr.mxu0 0.0
        %2282 = vmatpush1.msra.mxu0 0.0
        %2283 = vmatprep.subr.mxu0 0.0
        %2284 = vmatpush1.msra.mxu0 0.0
        %2285 = vmatprep.subr.mxu0 0.0
        %2286 = vmatpush1.msra.mxu0 0.0
        %2287 = vmatprep.subr.mxu0 0.0
        %2288 = vmatpush1.msra.mxu0 0.0
        %2289 = vmatprep.subr.mxu0 0.0
        %2290 = vmatpush1.msra.mxu0 0.0
        %2291 = vmatprep.subr.mxu0 0.0
        %2292 = vmatpush1.msra.mxu0 0.0
        %2293 = vmatprep.subr.mxu0 0.0
        %2294 = vmatpush1.msra.mxu0 0.0
        %2295 = vmatprep.subr.mxu0 0.0
        %2296 = vmatpush1.msra.mxu0 0.0
        %2297 = vmatprep.subr.mxu0 0.0
        %2298 = vmatpush1.msra.mxu0 0.0
        %2299 = vmatprep.subr.mxu0 0.0
        %2300 = vmatpush1.msra.mxu0 0.0
        %2301 = vmatprep.subr.mxu0 0.0
        %2302 = vmatpush1.msra.mxu0 0.0
        %2303 = vmatprep.subr.mxu0 0.0
        %2304 = vmatpush1.msra.mxu0 0.0
        %2305 = vmatprep.mubr.f32.mxu0 0.0
        %2306 = vmatmul.mubr.f32.gmra.mrb[0].mxu0 %v2159
        %v2307 = vpop.f32.mrb[0].mxu0
        %v2308 = vadd.f32 %v2240, %v2307
        %v2309 = vpop.f32.mrb[0].mxu0
        %2310 = vdwg.mxu0
        %s2311 = scalar_lea.vmem %s3, 192
        %v2312 = vld [vmem:[%s2311] sm:$0xff]
        %v2313 = vld [vmem:[%s2311 + $0x8] sm:$0xff]
        %v2314 = vld [vmem:[%s2311 + $0x10] sm:$0xff]
        %v2315 = vld [vmem:[%s2311 + $0x18] sm:$0xff]
        %v2316 = vld [vmem:[%s2122 + $0x4] sm:$0x1]
        %v2317 = vlaneseq
        %v2318 = vshrl.u32 %v2317, 7
        %v2319 = vsub.s32 0, %v2318
        %v2320 = vrot.slane %v2316, %v2319
        %2321 = vmatprep.subr.mxu0 0.0
        %2322 = vmatpush1.msra.mxu0 %v2312
        %2323 = vmatprep.subr.mxu0 0.0
        %2324 = vmatpush1.msra.mxu0 %v2313
        %2325 = vmatprep.subr.mxu0 0.0
        %2326 = vmatpush1.msra.mxu0 %v2314
        %2327 = vmatprep.subr.mxu0 0.0
        %2328 = vmatpush1.msra.mxu0 %v2315
        %2329 = vmatprep.subr.mxu0 0.0
        %2330 = vmatpush1.msra.mxu0 0.0
        %2331 = vmatprep.subr.mxu0 0.0
        %2332 = vmatpush1.msra.mxu0 0.0
        %2333 = vmatprep.subr.mxu0 0.0
        %2334 = vmatpush1.msra.mxu0 0.0
        %2335 = vmatprep.subr.mxu0 0.0
        %2336 = vmatpush1.msra.mxu0 0.0
        %2337 = vmatprep.subr.mxu0 0.0
        %2338 = vmatpush1.msra.mxu0 0.0
        %2339 = vmatprep.subr.mxu0 0.0
        %2340 = vmatpush1.msra.mxu0 0.0
        %2341 = vmatprep.subr.mxu0 0.0
        %2342 = vmatpush1.msra.mxu0 0.0
        %2343 = vmatprep.subr.mxu0 0.0
        %2344 = vmatpush1.msra.mxu0 0.0
        %2345 = vmatprep.subr.mxu0 0.0
        %2346 = vmatpush1.msra.mxu0 0.0
        %2347 = vmatprep.subr.mxu0 0.0
        %2348 = vmatpush1.msra.mxu0 0.0
        %2349 = vmatprep.subr.mxu0 0.0
        %2350 = vmatpush1.msra.mxu0 0.0
        %2351 = vmatprep.subr.mxu0 0.0
        %2352 = vmatpush1.msra.mxu0 0.0
        %2353 = vmatprep.subr.mxu0 0.0
        %2354 = vmatpush1.msra.mxu0 0.0
        %2355 = vmatprep.subr.mxu0 0.0
        %2356 = vmatpush1.msra.mxu0 0.0
        %2357 = vmatprep.subr.mxu0 0.0
        %2358 = vmatpush1.msra.mxu0 0.0
        %2359 = vmatprep.subr.mxu0 0.0
        %2360 = vmatpush1.msra.mxu0 0.0
        %2361 = vmatprep.subr.mxu0 0.0
        %2362 = vmatpush1.msra.mxu0 0.0
        %2363 = vmatprep.subr.mxu0 0.0
        %2364 = vmatpush1.msra.mxu0 0.0
        %2365 = vmatprep.subr.mxu0 0.0
        %2366 = vmatpush1.msra.mxu0 0.0
        %2367 = vmatprep.subr.mxu0 0.0
        %2368 = vmatpush1.msra.mxu0 0.0
        %2369 = vmatprep.subr.mxu0 0.0
        %2370 = vmatpush1.msra.mxu0 0.0
        %2371 = vmatprep.subr.mxu0 0.0
        %2372 = vmatpush1.msra.mxu0 0.0
        %2373 = vmatprep.subr.mxu0 0.0
        %2374 = vmatpush1.msra.mxu0 0.0
        %2375 = vmatprep.subr.mxu0 0.0
        %2376 = vmatpush1.msra.mxu0 0.0
        %2377 = vmatprep.subr.mxu0 0.0
        %2378 = vmatpush1.msra.mxu0 0.0
        %2379 = vmatprep.subr.mxu0 0.0
        %2380 = vmatpush1.msra.mxu0 0.0
        %2381 = vmatprep.subr.mxu0 0.0
        %2382 = vmatpush1.msra.mxu0 0.0
        %2383 = vmatprep.subr.mxu0 0.0
        %2384 = vmatpush1.msra.mxu0 0.0
        %2385 = vmatprep.mubr.f32.mxu0 0.0
        %2386 = vmatmul.mubr.f32.gmra.mrb[0].mxu0 %v2159
        %v2387 = vpop.f32.mrb[0].mxu0
        %v2388 = vadd.f32 %v2320, %v2387
        %v2389 = vpop.f32.mrb[0].mxu0
        %2390 = vdwg.mxu0
        %2392 = vrot.lane.b32.xlu0 %v2228, 120
        %v2393 = vpop.permute.xlu0 %2392
        %2395 = vrot.lane.b32.xlu0 %v2228, 112
        %v2396 = vpop.permute.xlu0 %2395
        %2398 = vrot.lane.b32.xlu0 %v2228, 104
        %v2399 = vpop.permute.xlu0 %2398
        %v2401 = vcombine.low %v2228, %v2396
        %v2402 = vcombine.high %v2228, %v2396
        %v2404 = vunpack.c.l.s4 1983009808
        %v2405 = vunpack.c.0.s8 %v2404
        %v2406 = vlaneseq
        %v2407 = vshrl.u32 %v2406, 7
        %v2408 = vsub.s32 %v2405, %v2407
        %v2409 = vrot.slane %v2401, %v2408
        %v2411 = vunpack.c.l.s4 1983009808
        %v2412 = vunpack.c.0.s8 %v2411
        %v2413 = vlaneseq
        %v2414 = vshrl.u32 %v2413, 7
        %v2415 = vsub.s32 %v2412, %v2414
        %v2416 = vrot.slane %v2402, %v2415
        %v2417 = vcombine.low %v2393, %v2399
        %v2418 = vcombine.high %v2393, %v2399
        %v2420 = vunpack.c.l.s4 1983009808
        %v2421 = vunpack.c.0.s8 %v2420
        %v2422 = vlaneseq
        %v2423 = vshrl.u32 %v2422, 7
        %v2424 = vsub.s32 %v2421, %v2423
        %v2425 = vrot.slane %v2417, %v2424
        %v2427 = vunpack.c.l.s4 1983009808
        %v2428 = vunpack.c.0.s8 %v2427
        %v2429 = vlaneseq
        %v2430 = vshrl.u32 %v2429, 7
        %v2431 = vsub.s32 %v2428, %v2430
        %v2432 = vrot.slane %v2418, %v2431
        %v2433 = vcombine.low %v2409, %v2425
        %v2434 = vcombine.high %v2409, %v2425
        %v2436 = vunpack.c.l.s4 1934713408
        %v2437 = vunpack.c.0.s8 %v2436
        %v2438 = vlaneseq
        %v2439 = vshrl.u32 %v2438, 7
        %v2440 = vsub.s32 %v2437, %v2439
        %v2441 = vrot.slane %v2433, %v2440
        %v2443 = vunpack.c.l.s4 1934713408
        %v2444 = vunpack.c.0.s8 %v2443
        %v2445 = vlaneseq
        %v2446 = vshrl.u32 %v2445, 7
        %v2447 = vsub.s32 %v2444, %v2446
        %v2448 = vrot.slane %v2434, %v2447
        %v2449 = vcombine.low %v2416, %v2432
        %v2450 = vcombine.high %v2416, %v2432
        %v2452 = vunpack.c.l.s4 1934713408
        %v2453 = vunpack.c.0.s8 %v2452
        %v2454 = vlaneseq
        %v2455 = vshrl.u32 %v2454, 7
        %v2456 = vsub.s32 %v2453, %v2455
        %v2457 = vrot.slane %v2449, %v2456
        %v2459 = vunpack.c.l.s4 1934713408
        %v2460 = vunpack.c.0.s8 %v2459
        %v2461 = vlaneseq
        %v2462 = vshrl.u32 %v2461, 7
        %v2463 = vsub.s32 %v2460, %v2462
        %v2464 = vrot.slane %v2450, %v2463
        %v2465 = vcombine.high %v2441, 0.0
        %v2466 = vcombine.high %v2448, 0.0
        %v2467 = vcombine.high %v2457, 0.0
        %v2468 = vcombine.high %v2464, 0.0
        %v2469 = vcombine.low %v2441, %v2448
        %v2471 = vunpack.c.l.s4 1983009808
        %v2472 = vunpack.c.0.s8 %v2471
        %v2473 = vlaneseq
        %v2474 = vshrl.u32 %v2473, 7
        %v2475 = vsub.s32 %v2472, %v2474
        %v2476 = vrot.slane %v2469, %v2475
        %v2477 = vcombine.low %v2465, %v2466
        %v2479 = vunpack.c.l.s4 1983009808
        %v2480 = vunpack.c.0.s8 %v2479
        %v2481 = vlaneseq
        %v2482 = vshrl.u32 %v2481, 7
        %v2483 = vsub.s32 %v2480, %v2482
        %v2484 = vrot.slane %v2477, %v2483
        %v2485 = vcombine.low %v2457, %v2464
        %v2487 = vunpack.c.l.s4 1983009808
        %v2488 = vunpack.c.0.s8 %v2487
        %v2489 = vlaneseq
        %v2490 = vshrl.u32 %v2489, 7
        %v2491 = vsub.s32 %v2488, %v2490
        %v2492 = vrot.slane %v2485, %v2491
        %v2493 = vcombine.low %v2467, %v2468
        %v2495 = vunpack.c.l.s4 1983009808
        %v2496 = vunpack.c.0.s8 %v2495
        %v2497 = vlaneseq
        %v2498 = vshrl.u32 %v2497, 7
        %v2499 = vsub.s32 %v2496, %v2498
        %v2500 = vrot.slane %v2493, %v2499
        %v2501 = vcombine.low %v2476, %v2484
        %v2502 = vcombine.high %v2476, %v2484
        %v2504 = vunpack.c.l.s4 1934713408
        %v2505 = vunpack.c.0.s8 %v2504
        %v2506 = vlaneseq
        %v2507 = vshrl.u32 %v2506, 7
        %v2508 = vsub.s32 %v2505, %v2507
        %v2509 = vrot.slane %v2501, %v2508
        %v2511 = vunpack.c.l.s4 1934713408
        %v2512 = vunpack.c.0.s8 %v2511
        %v2513 = vlaneseq
        %v2514 = vshrl.u32 %v2513, 7
        %v2515 = vsub.s32 %v2512, %v2514
        %v2516 = vrot.slane %v2502, %v2515
        %v2517 = vcombine.low %v2492, %v2500
        %v2518 = vcombine.high %v2492, %v2500
        %v2520 = vunpack.c.l.s4 1934713408
        %v2521 = vunpack.c.0.s8 %v2520
        %v2522 = vlaneseq
        %v2523 = vshrl.u32 %v2522, 7
        %v2524 = vsub.s32 %v2521, %v2523
        %v2525 = vrot.slane %v2517, %v2524
        %v2527 = vunpack.c.l.s4 1934713408
        %v2528 = vunpack.c.0.s8 %v2527
        %v2529 = vlaneseq
        %v2530 = vshrl.u32 %v2529, 7
        %v2531 = vsub.s32 %v2528, %v2530
        %v2532 = vrot.slane %v2518, %v2531
        %v2533 = vcombine.low %v2509, %v2525
        %v2534 = vcombine.high %v2509, %v2525
        %v2535 = vcombine.low %v2516, %v2532
        %v2536 = vcombine.high %v2516, %v2532
        %2538 = vrot.lane.b32.xlu0 %v2308, 120
        %v2539 = vpop.permute.xlu0 %2538
        %2541 = vrot.lane.b32.xlu0 %v2308, 112
        %v2542 = vpop.permute.xlu0 %2541
        %2544 = vrot.lane.b32.xlu0 %v2308, 104
        %v2545 = vpop.permute.xlu0 %2544
        %v2547 = vcombine.low %v2308, %v2542
        %v2548 = vcombine.high %v2308, %v2542
        %v2550 = vunpack.c.l.s4 1983009808
        %v2551 = vunpack.c.0.s8 %v2550
        %v2552 = vlaneseq
        %v2553 = vshrl.u32 %v2552, 7
        %v2554 = vsub.s32 %v2551, %v2553
        %v2555 = vrot.slane %v2547, %v2554
        %v2557 = vunpack.c.l.s4 1983009808
        %v2558 = vunpack.c.0.s8 %v2557
        %v2559 = vlaneseq
        %v2560 = vshrl.u32 %v2559, 7
        %v2561 = vsub.s32 %v2558, %v2560
        %v2562 = vrot.slane %v2548, %v2561
        %v2563 = vcombine.low %v2539, %v2545
        %v2564 = vcombine.high %v2539, %v2545
        %v2566 = vunpack.c.l.s4 1983009808
        %v2567 = vunpack.c.0.s8 %v2566
        %v2568 = vlaneseq
        %v2569 = vshrl.u32 %v2568, 7
        %v2570 = vsub.s32 %v2567, %v2569
        %v2571 = vrot.slane %v2563, %v2570
        %v2573 = vunpack.c.l.s4 1983009808
        %v2574 = vunpack.c.0.s8 %v2573
        %v2575 = vlaneseq
        %v2576 = vshrl.u32 %v2575, 7
        %v2577 = vsub.s32 %v2574, %v2576
        %v2578 = vrot.slane %v2564, %v2577
        %v2579 = vcombine.low %v2555, %v2571
        %v2580 = vcombine.high %v2555, %v2571
        %v2582 = vunpack.c.l.s4 1934713408
        %v2583 = vunpack.c.0.s8 %v2582
        %v2584 = vlaneseq
        %v2585 = vshrl.u32 %v2584, 7
        %v2586 = vsub.s32 %v2583, %v2585
        %v2587 = vrot.slane %v2579, %v2586
        %v2589 = vunpack.c.l.s4 1934713408
        %v2590 = vunpack.c.0.s8 %v2589
        %v2591 = vlaneseq
        %v2592 = vshrl.u32 %v2591, 7
        %v2593 = vsub.s32 %v2590, %v2592
        %v2594 = vrot.slane %v2580, %v2593
        %v2595 = vcombine.low %v2562, %v2578
        %v2596 = vcombine.high %v2562, %v2578
        %v2598 = vunpack.c.l.s4 1934713408
        %v2599 = vunpack.c.0.s8 %v2598
        %v2600 = vlaneseq
        %v2601 = vshrl.u32 %v2600, 7
        %v2602 = vsub.s32 %v2599, %v2601
        %v2603 = vrot.slane %v2595, %v2602
        %v2605 = vunpack.c.l.s4 1934713408
        %v2606 = vunpack.c.0.s8 %v2605
        %v2607 = vlaneseq
        %v2608 = vshrl.u32 %v2607, 7
        %v2609 = vsub.s32 %v2606, %v2608
        %v2610 = vrot.slane %v2596, %v2609
        %v2611 = vcombine.high %v2587, 0.0
        %v2612 = vcombine.high %v2594, 0.0
        %v2613 = vcombine.high %v2603, 0.0
        %v2614 = vcombine.high %v2610, 0.0
        %v2615 = vcombine.low %v2587, %v2594
        %v2617 = vunpack.c.l.s4 1983009808
        %v2618 = vunpack.c.0.s8 %v2617
        %v2619 = vlaneseq
        %v2620 = vshrl.u32 %v2619, 7
        %v2621 = vsub.s32 %v2618, %v2620
        %v2622 = vrot.slane %v2615, %v2621
        %v2623 = vcombine.low %v2611, %v2612
        %v2625 = vunpack.c.l.s4 1983009808
        %v2626 = vunpack.c.0.s8 %v2625
        %v2627 = vlaneseq
        %v2628 = vshrl.u32 %v2627, 7
        %v2629 = vsub.s32 %v2626, %v2628
        %v2630 = vrot.slane %v2623, %v2629
        %v2631 = vcombine.low %v2603, %v2610
        %v2633 = vunpack.c.l.s4 1983009808
        %v2634 = vunpack.c.0.s8 %v2633
        %v2635 = vlaneseq
        %v2636 = vshrl.u32 %v2635, 7
        %v2637 = vsub.s32 %v2634, %v2636
        %v2638 = vrot.slane %v2631, %v2637
        %v2639 = vcombine.low %v2613, %v2614
        %v2641 = vunpack.c.l.s4 1983009808
        %v2642 = vunpack.c.0.s8 %v2641
        %v2643 = vlaneseq
        %v2644 = vshrl.u32 %v2643, 7
        %v2645 = vsub.s32 %v2642, %v2644
        %v2646 = vrot.slane %v2639, %v2645
        %v2647 = vcombine.low %v2622, %v2630
        %v2648 = vcombine.high %v2622, %v2630
        %v2650 = vunpack.c.l.s4 1934713408
        %v2651 = vunpack.c.0.s8 %v2650
        %v2652 = vlaneseq
        %v2653 = vshrl.u32 %v2652, 7
        %v2654 = vsub.s32 %v2651, %v2653
        %v2655 = vrot.slane %v2647, %v2654
        %v2657 = vunpack.c.l.s4 1934713408
        %v2658 = vunpack.c.0.s8 %v2657
        %v2659 = vlaneseq
        %v2660 = vshrl.u32 %v2659, 7
        %v2661 = vsub.s32 %v2658, %v2660
        %v2662 = vrot.slane %v2648, %v2661
        %v2663 = vcombine.low %v2638, %v2646
        %v2664 = vcombine.high %v2638, %v2646
        %v2666 = vunpack.c.l.s4 1934713408
        %v2667 = vunpack.c.0.s8 %v2666
        %v2668 = vlaneseq
        %v2669 = vshrl.u32 %v2668, 7
        %v2670 = vsub.s32 %v2667, %v2669
        %v2671 = vrot.slane %v2663, %v2670
        %v2673 = vunpack.c.l.s4 1934713408
        %v2674 = vunpack.c.0.s8 %v2673
        %v2675 = vlaneseq
        %v2676 = vshrl.u32 %v2675, 7
        %v2677 = vsub.s32 %v2674, %v2676
        %v2678 = vrot.slane %v2664, %v2677
        %v2679 = vcombine.low %v2655, %v2671
        %v2680 = vcombine.high %v2655, %v2671
        %v2681 = vcombine.low %v2662, %v2678
        %v2682 = vcombine.high %v2662, %v2678
        %2684 = vrot.lane.b32.xlu0 %v2388, 120
        %v2685 = vpop.permute.xlu0 %2684
        %2687 = vrot.lane.b32.xlu0 %v2388, 112
        %v2688 = vpop.permute.xlu0 %2687
        %2690 = vrot.lane.b32.xlu0 %v2388, 104
        %v2691 = vpop.permute.xlu0 %2690
        %v2693 = vcombine.low %v2388, %v2688
        %v2694 = vcombine.high %v2388, %v2688
        %v2696 = vunpack.c.l.s4 1983009808
        %v2697 = vunpack.c.0.s8 %v2696
        %v2698 = vlaneseq
        %v2699 = vshrl.u32 %v2698, 7
        %v2700 = vsub.s32 %v2697, %v2699
        %v2701 = vrot.slane %v2693, %v2700
        %v2703 = vunpack.c.l.s4 1983009808
        %v2704 = vunpack.c.0.s8 %v2703
        %v2705 = vlaneseq
        %v2706 = vshrl.u32 %v2705, 7
        %v2707 = vsub.s32 %v2704, %v2706
        %v2708 = vrot.slane %v2694, %v2707
        %v2709 = vcombine.low %v2685, %v2691
        %v2710 = vcombine.high %v2685, %v2691
        %v2712 = vunpack.c.l.s4 1983009808
        %v2713 = vunpack.c.0.s8 %v2712
        %v2714 = vlaneseq
        %v2715 = vshrl.u32 %v2714, 7
        %v2716 = vsub.s32 %v2713, %v2715
        %v2717 = vrot.slane %v2709, %v2716
        %v2719 = vunpack.c.l.s4 1983009808
        %v2720 = vunpack.c.0.s8 %v2719
        %v2721 = vlaneseq
        %v2722 = vshrl.u32 %v2721, 7
        %v2723 = vsub.s32 %v2720, %v2722
        %v2724 = vrot.slane %v2710, %v2723
        %v2725 = vcombine.low %v2701, %v2717
        %v2726 = vcombine.high %v2701, %v2717
        %v2728 = vunpack.c.l.s4 1934713408
        %v2729 = vunpack.c.0.s8 %v2728
        %v2730 = vlaneseq
        %v2731 = vshrl.u32 %v2730, 7
        %v2732 = vsub.s32 %v2729, %v2731
        %v2733 = vrot.slane %v2725, %v2732
        %v2735 = vunpack.c.l.s4 1934713408
        %v2736 = vunpack.c.0.s8 %v2735
        %v2737 = vlaneseq
        %v2738 = vshrl.u32 %v2737, 7
        %v2739 = vsub.s32 %v2736, %v2738
        %v2740 = vrot.slane %v2726, %v2739
        %v2741 = vcombine.low %v2708, %v2724
        %v2742 = vcombine.high %v2708, %v2724
        %v2744 = vunpack.c.l.s4 1934713408
        %v2745 = vunpack.c.0.s8 %v2744
        %v2746 = vlaneseq
        %v2747 = vshrl.u32 %v2746, 7
        %v2748 = vsub.s32 %v2745, %v2747
        %v2749 = vrot.slane %v2741, %v2748
        %v2751 = vunpack.c.l.s4 1934713408
        %v2752 = vunpack.c.0.s8 %v2751
        %v2753 = vlaneseq
        %v2754 = vshrl.u32 %v2753, 7
        %v2755 = vsub.s32 %v2752, %v2754
        %v2756 = vrot.slane %v2742, %v2755
        %v2757 = vcombine.high %v2733, 0.0
        %v2758 = vcombine.high %v2740, 0.0
        %v2759 = vcombine.high %v2749, 0.0
        %v2760 = vcombine.high %v2756, 0.0
        %v2761 = vcombine.low %v2733, %v2740
        %v2763 = vunpack.c.l.s4 1983009808
        %v2764 = vunpack.c.0.s8 %v2763
        %v2765 = vlaneseq
        %v2766 = vshrl.u32 %v2765, 7
        %v2767 = vsub.s32 %v2764, %v2766
        %v2768 = vrot.slane %v2761, %v2767
        %v2769 = vcombine.low %v2757, %v2758
        %v2771 = vunpack.c.l.s4 1983009808
        %v2772 = vunpack.c.0.s8 %v2771
        %v2773 = vlaneseq
        %v2774 = vshrl.u32 %v2773, 7
        %v2775 = vsub.s32 %v2772, %v2774
        %v2776 = vrot.slane %v2769, %v2775
        %v2777 = vcombine.low %v2749, %v2756
        %v2779 = vunpack.c.l.s4 1983009808
        %v2780 = vunpack.c.0.s8 %v2779
        %v2781 = vlaneseq
        %v2782 = vshrl.u32 %v2781, 7
        %v2783 = vsub.s32 %v2780, %v2782
        %v2784 = vrot.slane %v2777, %v2783
        %v2785 = vcombine.low %v2759, %v2760
        %v2787 = vunpack.c.l.s4 1983009808
        %v2788 = vunpack.c.0.s8 %v2787
        %v2789 = vlaneseq
        %v2790 = vshrl.u32 %v2789, 7
        %v2791 = vsub.s32 %v2788, %v2790
        %v2792 = vrot.slane %v2785, %v2791
        %v2793 = vcombine.low %v2768, %v2776
        %v2794 = vcombine.high %v2768, %v2776
        %v2796 = vunpack.c.l.s4 1934713408
        %v2797 = vunpack.c.0.s8 %v2796
        %v2798 = vlaneseq
        %v2799 = vshrl.u32 %v2798, 7
        %v2800 = vsub.s32 %v2797, %v2799
        %v2801 = vrot.slane %v2793, %v2800
        %v2803 = vunpack.c.l.s4 1934713408
        %v2804 = vunpack.c.0.s8 %v2803
        %v2805 = vlaneseq
        %v2806 = vshrl.u32 %v2805, 7
        %v2807 = vsub.s32 %v2804, %v2806
        %v2808 = vrot.slane %v2794, %v2807
        %v2809 = vcombine.low %v2784, %v2792
        %v2810 = vcombine.high %v2784, %v2792
        %v2812 = vunpack.c.l.s4 1934713408
        %v2813 = vunpack.c.0.s8 %v2812
        %v2814 = vlaneseq
        %v2815 = vshrl.u32 %v2814, 7
        %v2816 = vsub.s32 %v2813, %v2815
        %v2817 = vrot.slane %v2809, %v2816
        %v2819 = vunpack.c.l.s4 1934713408
        %v2820 = vunpack.c.0.s8 %v2819
        %v2821 = vlaneseq
        %v2822 = vshrl.u32 %v2821, 7
        %v2823 = vsub.s32 %v2820, %v2822
        %v2824 = vrot.slane %v2810, %v2823
        %v2825 = vcombine.low %v2801, %v2817
        %v2826 = vcombine.high %v2801, %v2817
        %v2827 = vcombine.low %v2808, %v2824
        %v2828 = vcombine.high %v2808, %v2824
        %v2830 = vsel %vm1034, %v2533, 0
        %v2833 = vsel %vm1034, %v2679, 0
        %2835 = vmatprep.subr.mxu0 0.0
        %2836 = vmatpush1.xpose.msra.mxu0 %v2833
        %2837 = vmatprep.subr.mxu0 0.0
        %2838 = vmatpush1.xpose.msra.mxu0 0.0
        %2839 = vmatprep.subr.mxu0 0.0
        %2840 = vmatpush1.xpose.msra.mxu0 0.0
        %2841 = vmatprep.subr.mxu0 0.0
        %2842 = vmatpush1.xpose.msra.mxu0 0.0
        %2843 = vmatprep.subr.mxu0 0.0
        %2844 = vmatpush1.xpose.msra.mxu0 0.0
        %2845 = vmatprep.subr.mxu0 0.0
        %2846 = vmatpush1.xpose.msra.mxu0 0.0
        %2847 = vmatprep.subr.mxu0 0.0
        %2848 = vmatpush1.xpose.msra.mxu0 0.0
        %2849 = vmatprep.subr.mxu0 0.0
        %2850 = vmatpush1.xpose.msra.mxu0 0.0
        %2851 = vmatprep.subr.mxu0 0.0
        %2852 = vmatpush1.xpose.msra.mxu0 0.0
        %2853 = vmatprep.subr.mxu0 0.0
        %2854 = vmatpush1.xpose.msra.mxu0 0.0
        %2855 = vmatprep.subr.mxu0 0.0
        %2856 = vmatpush1.xpose.msra.mxu0 0.0
        %2857 = vmatprep.subr.mxu0 0.0
        %2858 = vmatpush1.xpose.msra.mxu0 0.0
        %2859 = vmatprep.subr.mxu0 0.0
        %2860 = vmatpush1.xpose.msra.mxu0 0.0
        %2861 = vmatprep.subr.mxu0 0.0
        %2862 = vmatpush1.xpose.msra.mxu0 0.0
        %2863 = vmatprep.subr.mxu0 0.0
        %2864 = vmatpush1.xpose.msra.mxu0 0.0
        %2865 = vmatprep.subr.mxu0 0.0
        %2866 = vmatpush1.xpose.msra.mxu0 0.0
        %2867 = vmatprep.subr.mxu0 0.0
        %2868 = vmatpush1.xpose.msra.mxu0 0.0
        %2869 = vmatprep.subr.mxu0 0.0
        %2870 = vmatpush1.xpose.msra.mxu0 0.0
        %2871 = vmatprep.subr.mxu0 0.0
        %2872 = vmatpush1.xpose.msra.mxu0 0.0
        %2873 = vmatprep.subr.mxu0 0.0
        %2874 = vmatpush1.xpose.msra.mxu0 0.0
        %2875 = vmatprep.subr.mxu0 0.0
        %2876 = vmatpush1.xpose.msra.mxu0 0.0
        %2877 = vmatprep.subr.mxu0 0.0
        %2878 = vmatpush1.xpose.msra.mxu0 0.0
        %2879 = vmatprep.subr.mxu0 0.0
        %2880 = vmatpush1.xpose.msra.mxu0 0.0
        %2881 = vmatprep.subr.mxu0 0.0
        %2882 = vmatpush1.xpose.msra.mxu0 0.0
        %2883 = vmatprep.subr.mxu0 0.0
        %2884 = vmatpush1.xpose.msra.mxu0 0.0
        %2885 = vmatprep.subr.mxu0 0.0
        %2886 = vmatpush1.xpose.msra.mxu0 0.0
        %2887 = vmatprep.subr.mxu0 0.0
        %2888 = vmatpush1.xpose.msra.mxu0 0.0
        %2889 = vmatprep.subr.mxu0 0.0
        %2890 = vmatpush1.xpose.msra.mxu0 0.0
        %2891 = vmatprep.subr.mxu0 0.0
        %2892 = vmatpush1.xpose.msra.mxu0 0.0
        %2893 = vmatprep.subr.mxu0 0.0
        %2894 = vmatpush1.xpose.msra.mxu0 0.0
        %2895 = vmatprep.subr.mxu0 0.0
        %2896 = vmatpush1.xpose.msra.mxu0 0.0
        %2897 = vmatprep.subr.mxu0 0.0
        %2898 = vmatpush1.xpose.msra.mxu0 0.0
        %2899 = vmatprep.mubr.f32.mxu0 0.0
        %2900 = vmatmul.mubr.f32.gmra.mrb[0].mxu0 %v2830
        %v2901 = vpop.f32.mrb[0].mxu0
        %v2902 = vadd.f32 %v322, %v2901
        %v2903 = vpop.f32.mrb[0].mxu0
        %2904 = vdwg.mxu0
        %v2906 = vsel %vm1034, %v2534, 0
        %v2909 = vsel %vm1034, %v2680, 0
        %2911 = vmatprep.subr.mxu0 0.0
        %2912 = vmatpush1.xpose.msra.mxu0 %v2909
        %2913 = vmatprep.subr.mxu0 0.0
        %2914 = vmatpush1.xpose.msra.mxu0 0.0
        %2915 = vmatprep.subr.mxu0 0.0
        %2916 = vmatpush1.xpose.msra.mxu0 0.0
        %2917 = vmatprep.subr.mxu0 0.0
        %2918 = vmatpush1.xpose.msra.mxu0 0.0
        %2919 = vmatprep.subr.mxu0 0.0
        %2920 = vmatpush1.xpose.msra.mxu0 0.0
        %2921 = vmatprep.subr.mxu0 0.0
        %2922 = vmatpush1.xpose.msra.mxu0 0.0
        %2923 = vmatprep.subr.mxu0 0.0
        %2924 = vmatpush1.xpose.msra.mxu0 0.0
        %2925 = vmatprep.subr.mxu0 0.0
        %2926 = vmatpush1.xpose.msra.mxu0 0.0
        %2927 = vmatprep.subr.mxu0 0.0
        %2928 = vmatpush1.xpose.msra.mxu0 0.0
        %2929 = vmatprep.subr.mxu0 0.0
        %2930 = vmatpush1.xpose.msra.mxu0 0.0
        %2931 = vmatprep.subr.mxu0 0.0
        %2932 = vmatpush1.xpose.msra.mxu0 0.0
        %2933 = vmatprep.subr.mxu0 0.0
        %2934 = vmatpush1.xpose.msra.mxu0 0.0
        %2935 = vmatprep.subr.mxu0 0.0
        %2936 = vmatpush1.xpose.msra.mxu0 0.0
        %2937 = vmatprep.subr.mxu0 0.0
        %2938 = vmatpush1.xpose.msra.mxu0 0.0
        %2939 = vmatprep.subr.mxu0 0.0
        %2940 = vmatpush1.xpose.msra.mxu0 0.0
        %2941 = vmatprep.subr.mxu0 0.0
        %2942 = vmatpush1.xpose.msra.mxu0 0.0
        %2943 = vmatprep.subr.mxu0 0.0
        %2944 = vmatpush1.xpose.msra.mxu0 0.0
        %2945 = vmatprep.subr.mxu0 0.0
        %2946 = vmatpush1.xpose.msra.mxu0 0.0
        %2947 = vmatprep.subr.mxu0 0.0
        %2948 = vmatpush1.xpose.msra.mxu0 0.0
        %2949 = vmatprep.subr.mxu0 0.0
        %2950 = vmatpush1.xpose.msra.mxu0 0.0
        %2951 = vmatprep.subr.mxu0 0.0
        %2952 = vmatpush1.xpose.msra.mxu0 0.0
        %2953 = vmatprep.subr.mxu0 0.0
        %2954 = vmatpush1.xpose.msra.mxu0 0.0
        %2955 = vmatprep.subr.mxu0 0.0
        %2956 = vmatpush1.xpose.msra.mxu0 0.0
        %2957 = vmatprep.subr.mxu0 0.0
        %2958 = vmatpush1.xpose.msra.mxu0 0.0
        %2959 = vmatprep.subr.mxu0 0.0
        %2960 = vmatpush1.xpose.msra.mxu0 0.0
        %2961 = vmatprep.subr.mxu0 0.0
        %2962 = vmatpush1.xpose.msra.mxu0 0.0
        %2963 = vmatprep.subr.mxu0 0.0
        %2964 = vmatpush1.xpose.msra.mxu0 0.0
        %2965 = vmatprep.subr.mxu0 0.0
        %2966 = vmatpush1.xpose.msra.mxu0 0.0
        %2967 = vmatprep.subr.mxu0 0.0
        %2968 = vmatpush1.xpose.msra.mxu0 0.0
        %2969 = vmatprep.subr.mxu0 0.0
        %2970 = vmatpush1.xpose.msra.mxu0 0.0
        %2971 = vmatprep.subr.mxu0 0.0
        %2972 = vmatpush1.xpose.msra.mxu0 0.0
        %2973 = vmatprep.subr.mxu0 0.0
        %2974 = vmatpush1.xpose.msra.mxu0 0.0
        %2975 = vmatprep.mubr.f32.mxu0 0.0
        %2976 = vmatmul.mubr.f32.gmra.mrb[0].mxu0 %v2906
        %v2977 = vpop.f32.mrb[0].mxu0
        %v2978 = vadd.f32 %v322, %v2977
        %v2979 = vpop.f32.mrb[0].mxu0
        %2980 = vdwg.mxu0
        %v2982 = vsel %vm1034, %v2535, 0
        %v2985 = vsel %vm1034, %v2681, 0
        %2987 = vmatprep.subr.mxu0 0.0
        %2988 = vmatpush1.xpose.msra.mxu0 %v2985
        %2989 = vmatprep.subr.mxu0 0.0
        %2990 = vmatpush1.xpose.msra.mxu0 0.0
        %2991 = vmatprep.subr.mxu0 0.0
        %2992 = vmatpush1.xpose.msra.mxu0 0.0
        %2993 = vmatprep.subr.mxu0 0.0
        %2994 = vmatpush1.xpose.msra.mxu0 0.0
        %2995 = vmatprep.subr.mxu0 0.0
        %2996 = vmatpush1.xpose.msra.mxu0 0.0
        %2997 = vmatprep.subr.mxu0 0.0
        %2998 = vmatpush1.xpose.msra.mxu0 0.0
        %2999 = vmatprep.subr.mxu0 0.0
        %3000 = vmatpush1.xpose.msra.mxu0 0.0
        %3001 = vmatprep.subr.mxu0 0.0
        %3002 = vmatpush1.xpose.msra.mxu0 0.0
        %3003 = vmatprep.subr.mxu0 0.0
        %3004 = vmatpush1.xpose.msra.mxu0 0.0
        %3005 = vmatprep.subr.mxu0 0.0
        %3006 = vmatpush1.xpose.msra.mxu0 0.0
        %3007 = vmatprep.subr.mxu0 0.0
        %3008 = vmatpush1.xpose.msra.mxu0 0.0
        %3009 = vmatprep.subr.mxu0 0.0
        %3010 = vmatpush1.xpose.msra.mxu0 0.0
        %3011 = vmatprep.subr.mxu0 0.0
        %3012 = vmatpush1.xpose.msra.mxu0 0.0
        %3013 = vmatprep.subr.mxu0 0.0
        %3014 = vmatpush1.xpose.msra.mxu0 0.0
        %3015 = vmatprep.subr.mxu0 0.0
        %3016 = vmatpush1.xpose.msra.mxu0 0.0
        %3017 = vmatprep.subr.mxu0 0.0
        %3018 = vmatpush1.xpose.msra.mxu0 0.0
        %3019 = vmatprep.subr.mxu0 0.0
        %3020 = vmatpush1.xpose.msra.mxu0 0.0
        %3021 = vmatprep.subr.mxu0 0.0
        %3022 = vmatpush1.xpose.msra.mxu0 0.0
        %3023 = vmatprep.subr.mxu0 0.0
        %3024 = vmatpush1.xpose.msra.mxu0 0.0
        %3025 = vmatprep.subr.mxu0 0.0
        %3026 = vmatpush1.xpose.msra.mxu0 0.0
        %3027 = vmatprep.subr.mxu0 0.0
        %3028 = vmatpush1.xpose.msra.mxu0 0.0
        %3029 = vmatprep.subr.mxu0 0.0
        %3030 = vmatpush1.xpose.msra.mxu0 0.0
        %3031 = vmatprep.subr.mxu0 0.0
        %3032 = vmatpush1.xpose.msra.mxu0 0.0
        %3033 = vmatprep.subr.mxu0 0.0
        %3034 = vmatpush1.xpose.msra.mxu0 0.0
        %3035 = vmatprep.subr.mxu0 0.0
        %3036 = vmatpush1.xpose.msra.mxu0 0.0
        %3037 = vmatprep.subr.mxu0 0.0
        %3038 = vmatpush1.xpose.msra.mxu0 0.0
        %3039 = vmatprep.subr.mxu0 0.0
        %3040 = vmatpush1.xpose.msra.mxu0 0.0
        %3041 = vmatprep.subr.mxu0 0.0
        %3042 = vmatpush1.xpose.msra.mxu0 0.0
        %3043 = vmatprep.subr.mxu0 0.0
        %3044 = vmatpush1.xpose.msra.mxu0 0.0
        %3045 = vmatprep.subr.mxu0 0.0
        %3046 = vmatpush1.xpose.msra.mxu0 0.0
        %3047 = vmatprep.subr.mxu0 0.0
        %3048 = vmatpush1.xpose.msra.mxu0 0.0
        %3049 = vmatprep.subr.mxu0 0.0
        %3050 = vmatpush1.xpose.msra.mxu0 0.0
        %3051 = vmatprep.mubr.f32.mxu0 0.0
        %3052 = vmatmul.mubr.f32.gmra.mrb[0].mxu0 %v2982
        %v3053 = vpop.f32.mrb[0].mxu0
        %v3054 = vadd.f32 %v322, %v3053
        %v3055 = vpop.f32.mrb[0].mxu0
        %3056 = vdwg.mxu0
        %v3058 = vsel %vm1034, %v2536, 0
        %v3061 = vsel %vm1034, %v2682, 0
        %3063 = vmatprep.subr.mxu0 0.0
        %3064 = vmatpush1.xpose.msra.mxu0 %v3061
        %3065 = vmatprep.subr.mxu0 0.0
        %3066 = vmatpush1.xpose.msra.mxu0 0.0
        %3067 = vmatprep.subr.mxu0 0.0
        %3068 = vmatpush1.xpose.msra.mxu0 0.0
        %3069 = vmatprep.subr.mxu0 0.0
        %3070 = vmatpush1.xpose.msra.mxu0 0.0
        %3071 = vmatprep.subr.mxu0 0.0
        %3072 = vmatpush1.xpose.msra.mxu0 0.0
        %3073 = vmatprep.subr.mxu0 0.0
        %3074 = vmatpush1.xpose.msra.mxu0 0.0
        %3075 = vmatprep.subr.mxu0 0.0
        %3076 = vmatpush1.xpose.msra.mxu0 0.0
        %3077 = vmatprep.subr.mxu0 0.0
        %3078 = vmatpush1.xpose.msra.mxu0 0.0
        %3079 = vmatprep.subr.mxu0 0.0
        %3080 = vmatpush1.xpose.msra.mxu0 0.0
        %3081 = vmatprep.subr.mxu0 0.0
        %3082 = vmatpush1.xpose.msra.mxu0 0.0
        %3083 = vmatprep.subr.mxu0 0.0
        %3084 = vmatpush1.xpose.msra.mxu0 0.0
        %3085 = vmatprep.subr.mxu0 0.0
        %3086 = vmatpush1.xpose.msra.mxu0 0.0
        %3087 = vmatprep.subr.mxu0 0.0
        %3088 = vmatpush1.xpose.msra.mxu0 0.0
        %3089 = vmatprep.subr.mxu0 0.0
        %3090 = vmatpush1.xpose.msra.mxu0 0.0
        %3091 = vmatprep.subr.mxu0 0.0
        %3092 = vmatpush1.xpose.msra.mxu0 0.0
        %3093 = vmatprep.subr.mxu0 0.0
        %3094 = vmatpush1.xpose.msra.mxu0 0.0
        %3095 = vmatprep.subr.mxu0 0.0
        %3096 = vmatpush1.xpose.msra.mxu0 0.0
        %3097 = vmatprep.subr.mxu0 0.0
        %3098 = vmatpush1.xpose.msra.mxu0 0.0
        %3099 = vmatprep.subr.mxu0 0.0
        %3100 = vmatpush1.xpose.msra.mxu0 0.0
        %3101 = vmatprep.subr.mxu0 0.0
        %3102 = vmatpush1.xpose.msra.mxu0 0.0
        %3103 = vmatprep.subr.mxu0 0.0
        %3104 = vmatpush1.xpose.msra.mxu0 0.0
        %3105 = vmatprep.subr.mxu0 0.0
        %3106 = vmatpush1.xpose.msra.mxu0 0.0
        %3107 = vmatprep.subr.mxu0 0.0
        %3108 = vmatpush1.xpose.msra.mxu0 0.0
        %3109 = vmatprep.subr.mxu0 0.0
        %3110 = vmatpush1.xpose.msra.mxu0 0.0
        %3111 = vmatprep.subr.mxu0 0.0
        %3112 = vmatpush1.xpose.msra.mxu0 0.0
        %3113 = vmatprep.subr.mxu0 0.0
        %3114 = vmatpush1.xpose.msra.mxu0 0.0
        %3115 = vmatprep.subr.mxu0 0.0
        %3116 = vmatpush1.xpose.msra.mxu0 0.0
        %3117 = vmatprep.subr.mxu0 0.0
        %3118 = vmatpush1.xpose.msra.mxu0 0.0
        %3119 = vmatprep.subr.mxu0 0.0
        %3120 = vmatpush1.xpose.msra.mxu0 0.0
        %3121 = vmatprep.subr.mxu0 0.0
        %3122 = vmatpush1.xpose.msra.mxu0 0.0
        %3123 = vmatprep.subr.mxu0 0.0
        %3124 = vmatpush1.xpose.msra.mxu0 0.0
        %3125 = vmatprep.subr.mxu0 0.0
        %3126 = vmatpush1.xpose.msra.mxu0 0.0
        %3127 = vmatprep.mubr.f32.mxu0 0.0
        %3128 = vmatmul.mubr.f32.gmra.mrb[0].mxu0 %v3058
        %v3129 = vpop.f32.mrb[0].mxu0
        %v3130 = vadd.f32 %v322, %v3129
        %v3131 = vpop.f32.mrb[0].mxu0
        %3132 = vdwg.mxu0
        %v3133 = vsel %vm1034, %v2902, -inf
        %3134 = vmax.xlane.f32.xlu0 %v3133
        %v3135 = vpop.xlane.xlu0 %3134
        %v3136 = vsel %vm1034, %v2978, -inf
        %3137 = vmax.xlane.f32.xlu0 %v3136
        %v3138 = vpop.xlane.xlu0 %3137
        %v3139 = vsel %vm1034, %v3054, -inf
        %3140 = vmax.xlane.f32.xlu0 %v3139
        %v3141 = vpop.xlane.xlu0 %3140
        %v3142 = vsel %vm1034, %v3130, -inf
        %3143 = vmax.xlane.f32.xlu0 %v3142
        %v3144 = vpop.xlane.xlu0 %3143
        %v3145 = vsub.f32 %v2902, %v3135
        %v3146 = vsub.f32 %v2978, %v3138
        %v3147 = vsub.f32 %v3054, %v3141
        %v3148 = vsub.f32 %v3130, %v3144
        %v3149 = vmul.f32 %v3145, 1.442695
        %v3150 = vpow.pop %v3149
        %v3151 = vmul.f32 %v3146, 1.442695
        %v3152 = vpow.pop %v3151
        %v3153 = vmul.f32 %v3147, 1.442695
        %v3154 = vpow.pop %v3153
        %v3155 = vmul.f32 %v3148, 1.442695
        %v3156 = vpow.pop %v3155
        %v3157 = vsel %vm1034, %v3150, 0.0
        %3158 = vadd.xlane.f32.xlu0 %v3157
        %v3159 = vpop.xlane.xlu0 %3158
        %v3160 = vsel %vm1034, %v3152, 0.0
        %3161 = vadd.xlane.f32.xlu0 %v3160
        %v3162 = vpop.xlane.xlu0 %3161
        %v3163 = vsel %vm1034, %v3154, 0.0
        %3164 = vadd.xlane.f32.xlu0 %v3163
        %v3165 = vpop.xlane.xlu0 %3164
        %v3166 = vsel %vm1034, %v3156, 0.0
        %3167 = vadd.xlane.f32.xlu0 %v3166
        %v3168 = vpop.xlane.xlu0 %3167
        %v3169 = vrcp.pop %v3159
        %v3170 = vrcp.pop %v3162
        %v3171 = vrcp.pop %v3165
        %v3172 = vrcp.pop %v3168
        %v3173 = vmul.f32 %v3150, %v3169
        %v3174 = vmul.f32 %v3152, %v3170
        %v3175 = vmul.f32 %v3154, %v3171
        %v3176 = vmul.f32 %v3156, %v3172
        %v3178 = vsel %vm1034, %v3173, 0
        %3180 = vmatprep.subr.mxu0 0.0
        %3181 = vmatpush1.msra.mxu0 %v2825
        %3182 = vmatprep.subr.mxu0 0.0
        %3183 = vmatpush1.msra.mxu0 0.0
        %3184 = vmatprep.subr.mxu0 0.0
        %3185 = vmatpush1.msra.mxu0 0.0
        %3186 = vmatprep.subr.mxu0 0.0
        %3187 = vmatpush1.msra.mxu0 0.0
        %3188 = vmatprep.subr.mxu0 0.0
        %3189 = vmatpush1.msra.mxu0 0.0
        %3190 = vmatprep.subr.mxu0 0.0
        %3191 = vmatpush1.msra.mxu0 0.0
        %3192 = vmatprep.subr.mxu0 0.0
        %3193 = vmatpush1.msra.mxu0 0.0
        %3194 = vmatprep.subr.mxu0 0.0
        %3195 = vmatpush1.msra.mxu0 0.0
        %3196 = vmatprep.subr.mxu0 0.0
        %3197 = vmatpush1.msra.mxu0 0.0
        %3198 = vmatprep.subr.mxu0 0.0
        %3199 = vmatpush1.msra.mxu0 0.0
        %3200 = vmatprep.subr.mxu0 0.0
        %3201 = vmatpush1.msra.mxu0 0.0
        %3202 = vmatprep.subr.mxu0 0.0
        %3203 = vmatpush1.msra.mxu0 0.0
        %3204 = vmatprep.subr.mxu0 0.0
        %3205 = vmatpush1.msra.mxu0 0.0
        %3206 = vmatprep.subr.mxu0 0.0
        %3207 = vmatpush1.msra.mxu0 0.0
        %3208 = vmatprep.subr.mxu0 0.0
        %3209 = vmatpush1.msra.mxu0 0.0
        %3210 = vmatprep.subr.mxu0 0.0
        %3211 = vmatpush1.msra.mxu0 0.0
        %3212 = vmatprep.subr.mxu0 0.0
        %3213 = vmatpush1.msra.mxu0 0.0
        %3214 = vmatprep.subr.mxu0 0.0
        %3215 = vmatpush1.msra.mxu0 0.0
        %3216 = vmatprep.subr.mxu0 0.0
        %3217 = vmatpush1.msra.mxu0 0.0
        %3218 = vmatprep.subr.mxu0 0.0
        %3219 = vmatpush1.msra.mxu0 0.0
        %3220 = vmatprep.subr.mxu0 0.0
        %3221 = vmatpush1.msra.mxu0 0.0
        %3222 = vmatprep.subr.mxu0 0.0
        %3223 = vmatpush1.msra.mxu0 0.0
        %3224 = vmatprep.subr.mxu0 0.0
        %3225 = vmatpush1.msra.mxu0 0.0
        %3226 = vmatprep.subr.mxu0 0.0
        %3227 = vmatpush1.msra.mxu0 0.0
        %3228 = vmatprep.subr.mxu0 0.0
        %3229 = vmatpush1.msra.mxu0 0.0
        %3230 = vmatprep.subr.mxu0 0.0
        %3231 = vmatpush1.msra.mxu0 0.0
        %3232 = vmatprep.subr.mxu0 0.0
        %3233 = vmatpush1.msra.mxu0 0.0
        %3234 = vmatprep.subr.mxu0 0.0
        %3235 = vmatpush1.msra.mxu0 0.0
        %3236 = vmatprep.subr.mxu0 0.0
        %3237 = vmatpush1.msra.mxu0 0.0
        %3238 = vmatprep.subr.mxu0 0.0
        %3239 = vmatpush1.msra.mxu0 0.0
        %3240 = vmatprep.subr.mxu0 0.0
        %3241 = vmatpush1.msra.mxu0 0.0
        %3242 = vmatprep.subr.mxu0 0.0
        %3243 = vmatpush1.msra.mxu0 0.0
        %3244 = vmatprep.mubr.f32.mxu0 0.0
        %3245 = vmatmul.mubr.f32.gmra.mrb[0].mxu0 %v3178
        %v3246 = vpop.f32.mrb[0].mxu0
        %v3247 = vadd.f32 0.0, %v3246
        %v3248 = vpop.f32.mrb[0].mxu0
        %3249 = vdwg.mxu0
        %v3251 = vsel %vm1034, %v3174, 0
        %3253 = vmatprep.subr.mxu0 0.0
        %3254 = vmatpush1.msra.mxu0 %v2826
        %3255 = vmatprep.subr.mxu0 0.0
        %3256 = vmatpush1.msra.mxu0 0.0
        %3257 = vmatprep.subr.mxu0 0.0
        %3258 = vmatpush1.msra.mxu0 0.0
        %3259 = vmatprep.subr.mxu0 0.0
        %3260 = vmatpush1.msra.mxu0 0.0
        %3261 = vmatprep.subr.mxu0 0.0
        %3262 = vmatpush1.msra.mxu0 0.0
        %3263 = vmatprep.subr.mxu0 0.0
        %3264 = vmatpush1.msra.mxu0 0.0
        %3265 = vmatprep.subr.mxu0 0.0
        %3266 = vmatpush1.msra.mxu0 0.0
        %3267 = vmatprep.subr.mxu0 0.0
        %3268 = vmatpush1.msra.mxu0 0.0
        %3269 = vmatprep.subr.mxu0 0.0
        %3270 = vmatpush1.msra.mxu0 0.0
        %3271 = vmatprep.subr.mxu0 0.0
        %3272 = vmatpush1.msra.mxu0 0.0
        %3273 = vmatprep.subr.mxu0 0.0
        %3274 = vmatpush1.msra.mxu0 0.0
        %3275 = vmatprep.subr.mxu0 0.0
        %3276 = vmatpush1.msra.mxu0 0.0
        %3277 = vmatprep.subr.mxu0 0.0
        %3278 = vmatpush1.msra.mxu0 0.0
        %3279 = vmatprep.subr.mxu0 0.0
        %3280 = vmatpush1.msra.mxu0 0.0
        %3281 = vmatprep.subr.mxu0 0.0
        %3282 = vmatpush1.msra.mxu0 0.0
        %3283 = vmatprep.subr.mxu0 0.0
        %3284 = vmatpush1.msra.mxu0 0.0
        %3285 = vmatprep.subr.mxu0 0.0
        %3286 = vmatpush1.msra.mxu0 0.0
        %3287 = vmatprep.subr.mxu0 0.0
        %3288 = vmatpush1.msra.mxu0 0.0
        %3289 = vmatprep.subr.mxu0 0.0
        %3290 = vmatpush1.msra.mxu0 0.0
        %3291 = vmatprep.subr.mxu0 0.0
        %3292 = vmatpush1.msra.mxu0 0.0
        %3293 = vmatprep.subr.mxu0 0.0
        %3294 = vmatpush1.msra.mxu0 0.0
        %3295 = vmatprep.subr.mxu0 0.0
        %3296 = vmatpush1.msra.mxu0 0.0
        %3297 = vmatprep.subr.mxu0 0.0
        %3298 = vmatpush1.msra.mxu0 0.0
        %3299 = vmatprep.subr.mxu0 0.0
        %3300 = vmatpush1.msra.mxu0 0.0
        %3301 = vmatprep.subr.mxu0 0.0
        %3302 = vmatpush1.msra.mxu0 0.0
        %3303 = vmatprep.subr.mxu0 0.0
        %3304 = vmatpush1.msra.mxu0 0.0
        %3305 = vmatprep.subr.mxu0 0.0
        %3306 = vmatpush1.msra.mxu0 0.0
        %3307 = vmatprep.subr.mxu0 0.0
        %3308 = vmatpush1.msra.mxu0 0.0
        %3309 = vmatprep.subr.mxu0 0.0
        %3310 = vmatpush1.msra.mxu0 0.0
        %3311 = vmatprep.subr.mxu0 0.0
        %3312 = vmatpush1.msra.mxu0 0.0
        %3313 = vmatprep.subr.mxu0 0.0
        %3314 = vmatpush1.msra.mxu0 0.0
        %3315 = vmatprep.subr.mxu0 0.0
        %3316 = vmatpush1.msra.mxu0 0.0
        %3317 = vmatprep.mubr.f32.mxu0 0.0
        %3318 = vmatmul.mubr.f32.gmra.mrb[0].mxu0 %v3251
        %v3319 = vpop.f32.mrb[0].mxu0
        %v3320 = vadd.f32 0.0, %v3319
        %v3321 = vpop.f32.mrb[0].mxu0
        %3322 = vdwg.mxu0
        %v3324 = vsel %vm1034, %v3175, 0
        %3326 = vmatprep.subr.mxu0 0.0
        %3327 = vmatpush1.msra.mxu0 %v2827
        %3328 = vmatprep.subr.mxu0 0.0
        %3329 = vmatpush1.msra.mxu0 0.0
        %3330 = vmatprep.subr.mxu0 0.0
        %3331 = vmatpush1.msra.mxu0 0.0
        %3332 = vmatprep.subr.mxu0 0.0
        %3333 = vmatpush1.msra.mxu0 0.0
        %3334 = vmatprep.subr.mxu0 0.0
        %3335 = vmatpush1.msra.mxu0 0.0
        %3336 = vmatprep.subr.mxu0 0.0
        %3337 = vmatpush1.msra.mxu0 0.0
        %3338 = vmatprep.subr.mxu0 0.0
        %3339 = vmatpush1.msra.mxu0 0.0
        %3340 = vmatprep.subr.mxu0 0.0
        %3341 = vmatpush1.msra.mxu0 0.0
        %3342 = vmatprep.subr.mxu0 0.0
        %3343 = vmatpush1.msra.mxu0 0.0
        %3344 = vmatprep.subr.mxu0 0.0
        %3345 = vmatpush1.msra.mxu0 0.0
        %3346 = vmatprep.subr.mxu0 0.0
        %3347 = vmatpush1.msra.mxu0 0.0
        %3348 = vmatprep.subr.mxu0 0.0
        %3349 = vmatpush1.msra.mxu0 0.0
        %3350 = vmatprep.subr.mxu0 0.0
        %3351 = vmatpush1.msra.mxu0 0.0
        %3352 = vmatprep.subr.mxu0 0.0
        %3353 = vmatpush1.msra.mxu0 0.0
        %3354 = vmatprep.subr.mxu0 0.0
        %3355 = vmatpush1.msra.mxu0 0.0
        %3356 = vmatprep.subr.mxu0 0.0
        %3357 = vmatpush1.msra.mxu0 0.0
        %3358 = vmatprep.subr.mxu0 0.0
        %3359 = vmatpush1.msra.mxu0 0.0
        %3360 = vmatprep.subr.mxu0 0.0
        %3361 = vmatpush1.msra.mxu0 0.0
        %3362 = vmatprep.subr.mxu0 0.0
        %3363 = vmatpush1.msra.mxu0 0.0
        %3364 = vmatprep.subr.mxu0 0.0
        %3365 = vmatpush1.msra.mxu0 0.0
        %3366 = vmatprep.subr.mxu0 0.0
        %3367 = vmatpush1.msra.mxu0 0.0
        %3368 = vmatprep.subr.mxu0 0.0
        %3369 = vmatpush1.msra.mxu0 0.0
        %3370 = vmatprep.subr.mxu0 0.0
        %3371 = vmatpush1.msra.mxu0 0.0
        %3372 = vmatprep.subr.mxu0 0.0
        %3373 = vmatpush1.msra.mxu0 0.0
        %3374 = vmatprep.subr.mxu0 0.0
        %3375 = vmatpush1.msra.mxu0 0.0
        %3376 = vmatprep.subr.mxu0 0.0
        %3377 = vmatpush1.msra.mxu0 0.0
        %3378 = vmatprep.subr.mxu0 0.0
        %3379 = vmatpush1.msra.mxu0 0.0
        %3380 = vmatprep.subr.mxu0 0.0
        %3381 = vmatpush1.msra.mxu0 0.0
        %3382 = vmatprep.subr.mxu0 0.0
        %3383 = vmatpush1.msra.mxu0 0.0
        %3384 = vmatprep.subr.mxu0 0.0
        %3385 = vmatpush1.msra.mxu0 0.0
        %3386 = vmatprep.subr.mxu0 0.0
        %3387 = vmatpush1.msra.mxu0 0.0
        %3388 = vmatprep.subr.mxu0 0.0
        %3389 = vmatpush1.msra.mxu0 0.0
        %3390 = vmatprep.mubr.f32.mxu0 0.0
        %3391 = vmatmul.mubr.f32.gmra.mrb[0].mxu0 %v3324
        %v3392 = vpop.f32.mrb[0].mxu0
        %v3393 = vadd.f32 0.0, %v3392
        %v3394 = vpop.f32.mrb[0].mxu0
        %3395 = vdwg.mxu0
        %v3397 = vsel %vm1034, %v3176, 0
        %3399 = vmatprep.subr.mxu0 0.0
        %3400 = vmatpush1.msra.mxu0 %v2828
        %3401 = vmatprep.subr.mxu0 0.0
        %3402 = vmatpush1.msra.mxu0 0.0
        %3403 = vmatprep.subr.mxu0 0.0
        %3404 = vmatpush1.msra.mxu0 0.0
        %3405 = vmatprep.subr.mxu0 0.0
        %3406 = vmatpush1.msra.mxu0 0.0
        %3407 = vmatprep.subr.mxu0 0.0
        %3408 = vmatpush1.msra.mxu0 0.0
        %3409 = vmatprep.subr.mxu0 0.0
        %3410 = vmatpush1.msra.mxu0 0.0
        %3411 = vmatprep.subr.mxu0 0.0
        %3412 = vmatpush1.msra.mxu0 0.0
        %3413 = vmatprep.subr.mxu0 0.0
        %3414 = vmatpush1.msra.mxu0 0.0
        %3415 = vmatprep.subr.mxu0 0.0
        %3416 = vmatpush1.msra.mxu0 0.0
        %3417 = vmatprep.subr.mxu0 0.0
        %3418 = vmatpush1.msra.mxu0 0.0
        %3419 = vmatprep.subr.mxu0 0.0
        %3420 = vmatpush1.msra.mxu0 0.0
        %3421 = vmatprep.subr.mxu0 0.0
        %3422 = vmatpush1.msra.mxu0 0.0
        %3423 = vmatprep.subr.mxu0 0.0
        %3424 = vmatpush1.msra.mxu0 0.0
        %3425 = vmatprep.subr.mxu0 0.0
        %3426 = vmatpush1.msra.mxu0 0.0
        %3427 = vmatprep.subr.mxu0 0.0
        %3428 = vmatpush1.msra.mxu0 0.0
        %3429 = vmatprep.subr.mxu0 0.0
        %3430 = vmatpush1.msra.mxu0 0.0
        %3431 = vmatprep.subr.mxu0 0.0
        %3432 = vmatpush1.msra.mxu0 0.0
        %3433 = vmatprep.subr.mxu0 0.0
        %3434 = vmatpush1.msra.mxu0 0.0
        %3435 = vmatprep.subr.mxu0 0.0
        %3436 = vmatpush1.msra.mxu0 0.0
        %3437 = vmatprep.subr.mxu0 0.0
        %3438 = vmatpush1.msra.mxu0 0.0
        %3439 = vmatprep.subr.mxu0 0.0
        %3440 = vmatpush1.msra.mxu0 0.0
        %3441 = vmatprep.subr.mxu0 0.0
        %3442 = vmatpush1.msra.mxu0 0.0
        %3443 = vmatprep.subr.mxu0 0.0
        %3444 = vmatpush1.msra.mxu0 0.0
        %3445 = vmatprep.subr.mxu0 0.0
        %3446 = vmatpush1.msra.mxu0 0.0
        %3447 = vmatprep.subr.mxu0 0.0
        %3448 = vmatpush1.msra.mxu0 0.0
        %3449 = vmatprep.subr.mxu0 0.0
        %3450 = vmatpush1.msra.mxu0 0.0
        %3451 = vmatprep.subr.mxu0 0.0
        %3452 = vmatpush1.msra.mxu0 0.0
        %3453 = vmatprep.subr.mxu0 0.0
        %3454 = vmatpush1.msra.mxu0 0.0
        %3455 = vmatprep.subr.mxu0 0.0
        %3456 = vmatpush1.msra.mxu0 0.0
        %3457 = vmatprep.subr.mxu0 0.0
        %3458 = vmatpush1.msra.mxu0 0.0
        %3459 = vmatprep.subr.mxu0 0.0
        %3460 = vmatpush1.msra.mxu0 0.0
        %3461 = vmatprep.subr.mxu0 0.0
        %3462 = vmatpush1.msra.mxu0 0.0
        %3463 = vmatprep.mubr.f32.mxu0 0.0
        %3464 = vmatmul.mubr.f32.gmra.mrb[0].mxu0 %v3397
        %v3465 = vpop.f32.mrb[0].mxu0
        %v3466 = vadd.f32 0.0, %v3465
        %v3467 = vpop.f32.mrb[0].mxu0
        %3468 = vdwg.mxu0
        %v3469 = vcombine.low %v3247, %v3393
        %v3470 = vcombine.high %v3247, %v3393
        %v3472 = vunpack.c.l.s4 1983009808
        %v3473 = vunpack.c.0.s8 %v3472
        %v3474 = vlaneseq
        %v3475 = vshrl.u32 %v3474, 7
        %v3476 = vsub.s32 %v3473, %v3475
        %v3477 = vrot.slane %v3469, %v3476
        %v3479 = vunpack.c.l.s4 1983009808
        %v3480 = vunpack.c.0.s8 %v3479
        %v3481 = vlaneseq
        %v3482 = vshrl.u32 %v3481, 7
        %v3483 = vsub.s32 %v3480, %v3482
        %v3484 = vrot.slane %v3470, %v3483
        %v3485 = vcombine.low %v3320, %v3466
        %v3486 = vcombine.high %v3320, %v3466
        %v3488 = vunpack.c.l.s4 1983009808
        %v3489 = vunpack.c.0.s8 %v3488
        %v3490 = vlaneseq
        %v3491 = vshrl.u32 %v3490, 7
        %v3492 = vsub.s32 %v3489, %v3491
        %v3493 = vrot.slane %v3485, %v3492
        %v3495 = vunpack.c.l.s4 1983009808
        %v3496 = vunpack.c.0.s8 %v3495
        %v3497 = vlaneseq
        %v3498 = vshrl.u32 %v3497, 7
        %v3499 = vsub.s32 %v3496, %v3498
        %v3500 = vrot.slane %v3486, %v3499
        %v3501 = vcombine.low %v3477, %v3493
        %v3502 = vcombine.high %v3477, %v3493
        %v3504 = vunpack.c.l.s4 1934713408
        %v3505 = vunpack.c.0.s8 %v3504
        %v3506 = vlaneseq
        %v3507 = vshrl.u32 %v3506, 7
        %v3508 = vsub.s32 %v3505, %v3507
        %v3509 = vrot.slane %v3501, %v3508
        %v3511 = vunpack.c.l.s4 1934713408
        %v3512 = vunpack.c.0.s8 %v3511
        %v3513 = vlaneseq
        %v3514 = vshrl.u32 %v3513, 7
        %v3515 = vsub.s32 %v3512, %v3514
        %v3516 = vrot.slane %v3502, %v3515
        %v3517 = vcombine.low %v3484, %v3500
        %v3518 = vcombine.high %v3484, %v3500
        %v3520 = vunpack.c.l.s4 1934713408
        %v3521 = vunpack.c.0.s8 %v3520
        %v3522 = vlaneseq
        %v3523 = vshrl.u32 %v3522, 7
        %v3524 = vsub.s32 %v3521, %v3523
        %v3525 = vrot.slane %v3517, %v3524
        %v3527 = vunpack.c.l.s4 1934713408
        %v3528 = vunpack.c.0.s8 %v3527
        %v3529 = vlaneseq
        %v3530 = vshrl.u32 %v3529, 7
        %v3531 = vsub.s32 %v3528, %v3530
        %v3532 = vrot.slane %v3518, %v3531
        %v3533 = vcombine.high %v3509, 0.0
        %v3534 = vcombine.high %v3516, 0.0
        %v3535 = vcombine.high %v3525, 0.0
        %v3536 = vcombine.high %v3532, 0.0
        %v3537 = vcombine.low %v3509, %v3516
        %v3539 = vunpack.c.l.s4 1983009808
        %v3540 = vunpack.c.0.s8 %v3539
        %v3541 = vlaneseq
        %v3542 = vshrl.u32 %v3541, 7
        %v3543 = vsub.s32 %v3540, %v3542
        %v3544 = vrot.slane %v3537, %v3543
        %v3545 = vcombine.low %v3533, %v3534
        %v3547 = vunpack.c.l.s4 1983009808
        %v3548 = vunpack.c.0.s8 %v3547
        %v3549 = vlaneseq
        %v3550 = vshrl.u32 %v3549, 7
        %v3551 = vsub.s32 %v3548, %v3550
        %v3552 = vrot.slane %v3545, %v3551
        %v3553 = vcombine.low %v3525, %v3532
        %v3555 = vunpack.c.l.s4 1983009808
        %v3556 = vunpack.c.0.s8 %v3555
        %v3557 = vlaneseq
        %v3558 = vshrl.u32 %v3557, 7
        %v3559 = vsub.s32 %v3556, %v3558
        %v3560 = vrot.slane %v3553, %v3559
        %v3561 = vcombine.low %v3535, %v3536
        %v3563 = vunpack.c.l.s4 1983009808
        %v3564 = vunpack.c.0.s8 %v3563
        %v3565 = vlaneseq
        %v3566 = vshrl.u32 %v3565, 7
        %v3567 = vsub.s32 %v3564, %v3566
        %v3568 = vrot.slane %v3561, %v3567
        %v3569 = vcombine.low %v3544, %v3552
        %v3570 = vcombine.high %v3544, %v3552
        %v3572 = vunpack.c.l.s4 1934713408
        %v3573 = vunpack.c.0.s8 %v3572
        %v3574 = vlaneseq
        %v3575 = vshrl.u32 %v3574, 7
        %v3576 = vsub.s32 %v3573, %v3575
        %v3577 = vrot.slane %v3569, %v3576
        %v3579 = vunpack.c.l.s4 1934713408
        %v3580 = vunpack.c.0.s8 %v3579
        %v3581 = vlaneseq
        %v3582 = vshrl.u32 %v3581, 7
        %v3583 = vsub.s32 %v3580, %v3582
        %v3584 = vrot.slane %v3570, %v3583
        %v3585 = vcombine.low %v3560, %v3568
        %v3586 = vcombine.high %v3560, %v3568
        %v3588 = vunpack.c.l.s4 1934713408
        %v3589 = vunpack.c.0.s8 %v3588
        %v3590 = vlaneseq
        %v3591 = vshrl.u32 %v3590, 7
        %v3592 = vsub.s32 %v3589, %v3591
        %v3593 = vrot.slane %v3585, %v3592
        %v3595 = vunpack.c.l.s4 1934713408
        %v3596 = vunpack.c.0.s8 %v3595
        %v3597 = vlaneseq
        %v3598 = vshrl.u32 %v3597, 7
        %v3599 = vsub.s32 %v3596, %v3598
        %v3600 = vrot.slane %v3586, %v3599
        %v3601 = vcombine.low %v3577, %v3593
        %v3602 = vcombine.high %v3577, %v3593
        %v3603 = vcombine.low %v3584, %v3600
        %v3604 = vcombine.high %v3584, %v3600
        %3606 = vrot.lane.b32.xlu0 %v3602, 8
        %v3607 = vpop.permute.xlu0 %3606
        %3610 = vrot.lane.b32.xlu0 %v3603, 16
        %v3611 = vpop.permute.xlu0 %3610
        %3614 = vrot.lane.b32.xlu0 %v3604, 24
        %v3615 = vpop.permute.xlu0 %3614
        %v3617 = vsel %vm1034, %v3601, %v3607
        %v3618 = vsel %vm1824, %v3617, %v3611
        %v3619 = vsel %vm1826, %v3618, %v3615
        %s3620 = scalar_lea.vmem %s3, 224
        %v3621 = vld [vmem:[%s3620] sm:$0xff]
        %v3622 = vld [vmem:[%s3620 + $0x8] sm:$0xff]
        %v3623 = vld [vmem:[%s3620 + $0x10] sm:$0xff]
        %v3624 = vld [vmem:[%s3620 + $0x18] sm:$0xff]
        %v3626 = vsel %vm329, %v3619, 0
        %3628 = vmatprep.subr.mxu0 0.0
        %3629 = vmatpush1.msra.mxu0 %v3621
        %3630 = vmatprep.subr.mxu0 0.0
        %3631 = vmatpush1.msra.mxu0 %v3622
        %3632 = vmatprep.subr.mxu0 0.0
        %3633 = vmatpush1.msra.mxu0 %v3623
        %3634 = vmatprep.subr.mxu0 0.0
        %3635 = vmatpush1.msra.mxu0 %v3624
        %3636 = vmatprep.subr.mxu0 0.0
        %3637 = vmatpush1.msra.mxu0 0.0
        %3638 = vmatprep.subr.mxu0 0.0
        %3639 = vmatpush1.msra.mxu0 0.0
        %3640 = vmatprep.subr.mxu0 0.0
        %3641 = vmatpush1.msra.mxu0 0.0
        %3642 = vmatprep.subr.mxu0 0.0
        %3643 = vmatpush1.msra.mxu0 0.0
        %3644 = vmatprep.subr.mxu0 0.0
        %3645 = vmatpush1.msra.mxu0 0.0
        %3646 = vmatprep.subr.mxu0 0.0
        %3647 = vmatpush1.msra.mxu0 0.0
        %3648 = vmatprep.subr.mxu0 0.0
        %3649 = vmatpush1.msra.mxu0 0.0
        %3650 = vmatprep.subr.mxu0 0.0
        %3651 = vmatpush1.msra.mxu0 0.0
        %3652 = vmatprep.subr.mxu0 0.0
        %3653 = vmatpush1.msra.mxu0 0.0
        %3654 = vmatprep.subr.mxu0 0.0
        %3655 = vmatpush1.msra.mxu0 0.0
        %3656 = vmatprep.subr.mxu0 0.0
        %3657 = vmatpush1.msra.mxu0 0.0
        %3658 = vmatprep.subr.mxu0 0.0
        %3659 = vmatpush1.msra.mxu0 0.0
        %3660 = vmatprep.subr.mxu0 0.0
        %3661 = vmatpush1.msra.mxu0 0.0
        %3662 = vmatprep.subr.mxu0 0.0
        %3663 = vmatpush1.msra.mxu0 0.0
        %3664 = vmatprep.subr.mxu0 0.0
        %3665 = vmatpush1.msra.mxu0 0.0
        %3666 = vmatprep.subr.mxu0 0.0
        %3667 = vmatpush1.msra.mxu0 0.0
        %3668 = vmatprep.subr.mxu0 0.0
        %3669 = vmatpush1.msra.mxu0 0.0
        %3670 = vmatprep.subr.mxu0 0.0
        %3671 = vmatpush1.msra.mxu0 0.0
        %3672 = vmatprep.subr.mxu0 0.0
        %3673 = vmatpush1.msra.mxu0 0.0
        %3674 = vmatprep.subr.mxu0 0.0
        %3675 = vmatpush1.msra.mxu0 0.0
        %3676 = vmatprep.subr.mxu0 0.0
        %3677 = vmatpush1.msra.mxu0 0.0
        %3678 = vmatprep.subr.mxu0 0.0
        %3679 = vmatpush1.msra.mxu0 0.0
        %3680 = vmatprep.subr.mxu0 0.0
        %3681 = vmatpush1.msra.mxu0 0.0
        %3682 = vmatprep.subr.mxu0 0.0
        %3683 = vmatpush1.msra.mxu0 0.0
        %3684 = vmatprep.subr.mxu0 0.0
        %3685 = vmatpush1.msra.mxu0 0.0
        %3686 = vmatprep.subr.mxu0 0.0
        %3687 = vmatpush1.msra.mxu0 0.0
        %3688 = vmatprep.subr.mxu0 0.0
        %3689 = vmatpush1.msra.mxu0 0.0
        %3690 = vmatprep.subr.mxu0 0.0
        %3691 = vmatpush1.msra.mxu0 0.0
        %3692 = vmatprep.mubr.f32.mxu0 0.0
        %3693 = vmatmul.mubr.f32.gmra.mrb[0].mxu0 %v3626
        %v3694 = vpop.f32.mrb[0].mxu0
        %v3695 = vadd.f32 0.0, %v3694
        %v3696 = vpop.f32.mrb[0].mxu0
        %3697 = vdwg.mxu0
        %v3698 = vadd.f32 %v2121, %v3695
        %v3699 = vld [vmem:[%s2122 + $0x5] sm:$0x1]
        %v3700 = vlaneseq
        %v3701 = vshrl.u32 %v3700, 7
        %v3702 = vsub.s32 0, %v3701
        %v3703 = vrot.slane %v3699, %v3702
        %v3704 = vadd.f32 %v3698, %v3703
        %v3705 = vld [vmem:[%s2122 + $0x6] sm:$0x1]
        %v3706 = vld [vmem:[%s2122 + $0x7] sm:$0x1]
        %v3707 = vsel %vm329, %v3704, 0.0
        %3708 = vadd.xlane.f32.xlu0 %v3707
        %v3709 = vpop.xlane.xlu0 %3708
        %v3710 = vmul.f32 %v3709, %v333
        %v3711 = vsub.f32 %v3704, %v3710
        %v3712 = vmul.f32 %v3711, %v3711
        %v3713 = vsel %vm329, %v3712, 0.0
        %3714 = vadd.xlane.f32.xlu0 %v3713
        %v3715 = vpop.xlane.xlu0 %3714
        %v3716 = vmul.f32 %v3715, %v333
        %v3717 = vadd.f32 %v3716, 1e-05
        %v3718 = vrsqrt.pop %v3717
        %v3719 = vmul.f32 %v3711, %v3718
        %v3720 = vlaneseq
        %v3721 = vshrl.u32 %v3720, 7
        %v3722 = vsub.s32 0, %v3721
        %v3723 = vrot.slane %v3705, %v3722
        %v3724 = vmul.f32 %v3719, %v3723
        %v3725 = vlaneseq
        %v3726 = vshrl.u32 %v3725, 7
        %v3727 = vsub.s32 0, %v3726
        %v3728 = vrot.slane %v3706, %v3727
        %v3729 = vadd.f32 %v3724, %v3728
        %s3730 = scalar_lea.vmem %s4, 32
        %v3731 = vld [vmem:[%s3730] sm:$0xff]
        %v3732 = vld [vmem:[%s3730 + $0x8] sm:$0xff]
        %v3733 = vld [vmem:[%s3730 + $0x10] sm:$0xff]
        %v3734 = vld [vmem:[%s3730 + $0x18] sm:$0xff]
        %v3735 = vld [vmem:[%s2122 + $0x8] sm:$0x1]
        %v3736 = vlaneseq
        %v3737 = vshrl.u32 %v3736, 7
        %v3738 = vsub.s32 0, %v3737
        %v3739 = vrot.slane %v3735, %v3738
        %v3741 = vsel %vm329, %v3729, 0
        %3743 = vmatprep.subr.mxu0 0.0
        %3744 = vmatpush1.msra.mxu0 %v3731
        %3745 = vmatprep.subr.mxu0 0.0
        %3746 = vmatpush1.msra.mxu0 %v3732
        %3747 = vmatprep.subr.mxu0 0.0
        %3748 = vmatpush1.msra.mxu0 %v3733
        %3749 = vmatprep.subr.mxu0 0.0
        %3750 = vmatpush1.msra.mxu0 %v3734
        %3751 = vmatprep.subr.mxu0 0.0
        %3752 = vmatpush1.msra.mxu0 0.0
        %3753 = vmatprep.subr.mxu0 0.0
        %3754 = vmatpush1.msra.mxu0 0.0
        %3755 = vmatprep.subr.mxu0 0.0
        %3756 = vmatpush1.msra.mxu0 0.0
        %3757 = vmatprep.subr.mxu0 0.0
        %3758 = vmatpush1.msra.mxu0 0.0
        %3759 = vmatprep.subr.mxu0 0.0
        %3760 = vmatpush1.msra.mxu0 0.0
        %3761 = vmatprep.subr.mxu0 0.0
        %3762 = vmatpush1.msra.mxu0 0.0
        %3763 = vmatprep.subr.mxu0 0.0
        %3764 = vmatpush1.msra.mxu0 0.0
        %3765 = vmatprep.subr.mxu0 0.0
        %3766 = vmatpush1.msra.mxu0 0.0
        %3767 = vmatprep.subr.mxu0 0.0
        %3768 = vmatpush1.msra.mxu0 0.0
        %3769 = vmatprep.subr.mxu0 0.0
        %3770 = vmatpush1.msra.mxu0 0.0
        %3771 = vmatprep.subr.mxu0 0.0
        %3772 = vmatpush1.msra.mxu0 0.0
        %3773 = vmatprep.subr.mxu0 0.0
        %3774 = vmatpush1.msra.mxu0 0.0
        %3775 = vmatprep.subr.mxu0 0.0
        %3776 = vmatpush1.msra.mxu0 0.0
        %3777 = vmatprep.subr.mxu0 0.0
        %3778 = vmatpush1.msra.mxu0 0.0
        %3779 = vmatprep.subr.mxu0 0.0
        %3780 = vmatpush1.msra.mxu0 0.0
        %3781 = vmatprep.subr.mxu0 0.0
        %3782 = vmatpush1.msra.mxu0 0.0
        %3783 = vmatprep.subr.mxu0 0.0
        %3784 = vmatpush1.msra.mxu0 0.0
        %3785 = vmatprep.subr.mxu0 0.0
        %3786 = vmatpush1.msra.mxu0 0.0
        %3787 = vmatprep.subr.mxu0 0.0
        %3788 = vmatpush1.msra.mxu0 0.0
        %3789 = vmatprep.subr.mxu0 0.0
        %3790 = vmatpush1.msra.mxu0 0.0
        %3791 = vmatprep.subr.mxu0 0.0
        %3792 = vmatpush1.msra.mxu0 0.0
        %3793 = vmatprep.subr.mxu0 0.0
        %3794 = vmatpush1.msra.mxu0 0.0
        %3795 = vmatprep.subr.mxu0 0.0
        %3796 = vmatpush1.msra.mxu0 0.0
        %3797 = vmatprep.subr.mxu0 0.0
        %3798 = vmatpush1.msra.mxu0 0.0
        %3799 = vmatprep.subr.mxu0 0.0
        %3800 = vmatpush1.msra.mxu0 0.0
        %3801 = vmatprep.subr.mxu0 0.0
        %3802 = vmatpush1.msra.mxu0 0.0
        %3803 = vmatprep.subr.mxu0 0.0
        %3804 = vmatpush1.msra.mxu0 0.0
        %3805 = vmatprep.subr.mxu0 0.0
        %3806 = vmatpush1.msra.mxu0 0.0
        %3807 = vmatprep.mubr.f32.mxu0 0.0
        %3808 = vmatmul.mubr.f32.gmra.mrb[0].mxu0 %v3741
        %v3809 = vpop.f32.mrb[0].mxu0
        %v3810 = vadd.f32 %v3739, %v3809
        %v3811 = vpop.f32.mrb[0].mxu0
        %3812 = vdwg.mxu0
        %v3813 = vmul.f32 %v3810, %v3810
        %v3814 = vmul.f32 %v3810, %v3813
        %v3815 = vmul.f32 %v3814, 0.044715
        %v3816 = vadd.f32 %v3810, %v3815
        %v3817 = vmul.f32 %v3816, 0.7978846
        %v3818 = vtanh.pop %v3817
        %v3819 = vadd.f32 %v3818, 1.0
        %v3820 = vmul.f32 %v3819, 0.5
        %v3821 = vmul.f32 %v3810, %v3820
        %s3822 = scalar_lea.vmem %s5, 128
        %v3823 = vld [vmem:[%s3822] sm:$0xff]
        %v3824 = vld [vmem:[%s3822 + $0x8] sm:$0xff]
        %v3825 = vld [vmem:[%s3822 + $0x10] sm:$0xff]
        %v3826 = vld [vmem:[%s3822 + $0x18] sm:$0xff]
        %v3827 = vld [vmem:[%s3822 + $0x20] sm:$0xff]
        %v3828 = vld [vmem:[%s3822 + $0x28] sm:$0xff]
        %v3829 = vld [vmem:[%s3822 + $0x30] sm:$0xff]
        %v3830 = vld [vmem:[%s3822 + $0x38] sm:$0xff]
        %v3831 = vld [vmem:[%s3822 + $0x40] sm:$0xff]
        %v3832 = vld [vmem:[%s3822 + $0x48] sm:$0xff]
        %v3833 = vld [vmem:[%s3822 + $0x50] sm:$0xff]
        %v3834 = vld [vmem:[%s3822 + $0x58] sm:$0xff]
        %v3835 = vld [vmem:[%s3822 + $0x60] sm:$0xff]
        %v3836 = vld [vmem:[%s3822 + $0x68] sm:$0xff]
        %v3837 = vld [vmem:[%s3822 + $0x70] sm:$0xff]
        %v3838 = vld [vmem:[%s3822 + $0x78] sm:$0xff]
        %3839 = vmatprep.subr.mxu0 0.0
        %3840 = vmatpush1.msra.mxu0 %v3823
        %3841 = vmatprep.subr.mxu0 0.0
        %3842 = vmatpush1.msra.mxu0 %v3824
        %3843 = vmatprep.subr.mxu0 0.0
        %3844 = vmatpush1.msra.mxu0 %v3825
        %3845 = vmatprep.subr.mxu0 0.0
        %3846 = vmatpush1.msra.mxu0 %v3826
        %3847 = vmatprep.subr.mxu0 0.0
        %3848 = vmatpush1.msra.mxu0 %v3827
        %3849 = vmatprep.subr.mxu0 0.0
        %3850 = vmatpush1.msra.mxu0 %v3828
        %3851 = vmatprep.subr.mxu0 0.0
        %3852 = vmatpush1.msra.mxu0 %v3829
        %3853 = vmatprep.subr.mxu0 0.0
        %3854 = vmatpush1.msra.mxu0 %v3830
        %3855 = vmatprep.subr.mxu0 0.0
        %3856 = vmatpush1.msra.mxu0 %v3831
        %3857 = vmatprep.subr.mxu0 0.0
        %3858 = vmatpush1.msra.mxu0 %v3832
        %3859 = vmatprep.subr.mxu0 0.0
        %3860 = vmatpush1.msra.mxu0 %v3833
        %3861 = vmatprep.subr.mxu0 0.0
        %3862 = vmatpush1.msra.mxu0 %v3834
        %3863 = vmatprep.subr.mxu0 0.0
        %3864 = vmatpush1.msra.mxu0 %v3835
        %3865 = vmatprep.subr.mxu0 0.0
        %3866 = vmatpush1.msra.mxu0 %v3836
        %3867 = vmatprep.subr.mxu0 0.0
        %3868 = vmatpush1.msra.mxu0 %v3837
        %3869 = vmatprep.subr.mxu0 0.0
        %3870 = vmatpush1.msra.mxu0 %v3838
        %3871 = vmatprep.subr.mxu0 0.0
        %3872 = vmatpush1.msra.mxu0 0.0
        %3873 = vmatprep.subr.mxu0 0.0
        %3874 = vmatpush1.msra.mxu0 0.0
        %3875 = vmatprep.subr.mxu0 0.0
        %3876 = vmatpush1.msra.mxu0 0.0
        %3877 = vmatprep.subr.mxu0 0.0
        %3878 = vmatpush1.msra.mxu0 0.0
        %3879 = vmatprep.subr.mxu0 0.0
        %3880 = vmatpush1.msra.mxu0 0.0
        %3881 = vmatprep.subr.mxu0 0.0
        %3882 = vmatpush1.msra.mxu0 0.0
        %3883 = vmatprep.subr.mxu0 0.0
        %3884 = vmatpush1.msra.mxu0 0.0
        %3885 = vmatprep.subr.mxu0 0.0
        %3886 = vmatpush1.msra.mxu0 0.0
        %3887 = vmatprep.subr.mxu0 0.0
        %3888 = vmatpush1.msra.mxu0 0.0
        %3889 = vmatprep.subr.mxu0 0.0
        %3890 = vmatpush1.msra.mxu0 0.0
        %3891 = vmatprep.subr.mxu0 0.0
        %3892 = vmatpush1.msra.mxu0 0.0
        %3893 = vmatprep.subr.mxu0 0.0
        %3894 = vmatpush1.msra.mxu0 0.0
        %3895 = vmatprep.subr.mxu0 0.0
        %3896 = vmatpush1.msra.mxu0 0.0
        %3897 = vmatprep.subr.mxu0 0.0
        %3898 = vmatpush1.msra.mxu0 0.0
        %3899 = vmatprep.subr.mxu0 0.0
        %3900 = vmatpush1.msra.mxu0 0.0
        %3901 = vmatprep.subr.mxu0 0.0
        %3902 = vmatpush1.msra.mxu0 0.0
        %3903 = vmatprep.mubr.f32.mxu0 0.0
        %3904 = vmatmul.mubr.f32.gmra.mrb[0].mxu0 %v3821
        %v3905 = vpop.f32.mrb[0].mxu0
        %v3906 = vadd.f32 0.0, %v3905
        %v3907 = vpop.f32.mrb[0].mxu0
        %3908 = vdwg.mxu0
        %v3909 = vadd.f32 %v3704, %v3906
        %v3910 = vld [vmem:[%s2122 + $0x9] sm:$0x1]
        %v3911 = vlaneseq
        %v3912 = vshrl.u32 %v3911, 7
        %v3913 = vsub.s32 0, %v3912
        %v3914 = vrot.slane %v3910, %v3913
        %v3915 = vadd.f32 %v3909, %v3914
        %s3916 = scalar_lea.vmem %s7, 32
        %v3917 = vld [vmem:[%s3916] sm:$0x1]
        %v3918 = vld [vmem:[%s3916 + $0x1] sm:$0x1]
        %v3919 = vsel %vm329, %v3915, 0.0
        %3920 = vadd.xlane.f32.xlu0 %v3919
        %v3921 = vpop.xlane.xlu0 %3920
        %v3922 = vmul.f32 %v3921, %v333
        %v3923 = vsub.f32 %v3915, %v3922
        %v3924 = vmul.f32 %v3923, %v3923
        %v3925 = vsel %vm329, %v3924, 0.0
        %3926 = vadd.xlane.f32.xlu0 %v3925
        %v3927 = vpop.xlane.xlu0 %3926
        %v3928 = vmul.f32 %v3927, %v333
        %v3929 = vadd.f32 %v3928, 1e-05
        %v3930 = vrsqrt.pop %v3929
        %v3931 = vmul.f32 %v3923, %v3930
        %v3932 = vlaneseq
        %v3933 = vshrl.u32 %v3932, 7
        %v3934 = vsub.s32 0, %v3933
        %v3935 = vrot.slane %v3917, %v3934
        %v3936 = vmul.f32 %v3931, %v3935
        %v3937 = vlaneseq
        %v3938 = vshrl.u32 %v3937, 7
        %v3939 = vsub.s32 0, %v3938
        %v3940 = vrot.slane %v3918, %v3939
        %v3941 = vadd.f32 %v3936, %v3940
        %v3942 = vld [vmem:[%s6] sm:$0xff]
        %v3943 = vld [vmem:[%s6 + $0x8] sm:$0xff]
        %v3944 = vld [vmem:[%s6 + $0x10] sm:$0xff]
        %v3945 = vld [vmem:[%s6 + $0x18] sm:$0xff]
        %v3947 = vsel %vm329, %v3941, 0
        %3949 = vmatprep.subr.mxu0 0.0
        %3950 = vmatpush1.msra.mxu0 %v3942
        %3951 = vmatprep.subr.mxu0 0.0
        %3952 = vmatpush1.msra.mxu0 %v3943
        %3953 = vmatprep.subr.mxu0 0.0
        %3954 = vmatpush1.msra.mxu0 %v3944
        %3955 = vmatprep.subr.mxu0 0.0
        %3956 = vmatpush1.msra.mxu0 %v3945
        %3957 = vmatprep.subr.mxu0 0.0
        %3958 = vmatpush1.msra.mxu0 0.0
        %3959 = vmatprep.subr.mxu0 0.0
        %3960 = vmatpush1.msra.mxu0 0.0
        %3961 = vmatprep.subr.mxu0 0.0
        %3962 = vmatpush1.msra.mxu0 0.0
        %3963 = vmatprep.subr.mxu0 0.0
        %3964 = vmatpush1.msra.mxu0 0.0
        %3965 = vmatprep.subr.mxu0 0.0
        %3966 = vmatpush1.msra.mxu0 0.0
        %3967 = vmatprep.subr.mxu0 0.0
        %3968 = vmatpush1.msra.mxu0 0.0
        %3969 = vmatprep.subr.mxu0 0.0
        %3970 = vmatpush1.msra.mxu0 0.0
        %3971 = vmatprep.subr.mxu0 0.0
        %3972 = vmatpush1.msra.mxu0 0.0
        %3973 = vmatprep.subr.mxu0 0.0
        %3974 = vmatpush1.msra.mxu0 0.0
        %3975 = vmatprep.subr.mxu0 0.0
        %3976 = vmatpush1.msra.mxu0 0.0
        %3977 = vmatprep.subr.mxu0 0.0
        %3978 = vmatpush1.msra.mxu0 0.0
        %3979 = vmatprep.subr.mxu0 0.0
        %3980 = vmatpush1.msra.mxu0 0.0
        %3981 = vmatprep.subr.mxu0 0.0
        %3982 = vmatpush1.msra.mxu0 0.0
        %3983 = vmatprep.subr.mxu0 0.0
        %3984 = vmatpush1.msra.mxu0 0.0
        %3985 = vmatprep.subr.mxu0 0.0
        %3986 = vmatpush1.msra.mxu0 0.0
        %3987 = vmatprep.subr.mxu0 0.0
        %3988 = vmatpush1.msra.mxu0 0.0
        %3989 = vmatprep.subr.mxu0 0.0
        %3990 = vmatpush1.msra.mxu0 0.0
        %3991 = vmatprep.subr.mxu0 0.0
        %3992 = vmatpush1.msra.mxu0 0.0
        %3993 = vmatprep.subr.mxu0 0.0
        %3994 = vmatpush1.msra.mxu0 0.0
        %3995 = vmatprep.subr.mxu0 0.0
        %3996 = vmatpush1.msra.mxu0 0.0
        %3997 = vmatprep.subr.mxu0 0.0
        %3998 = vmatpush1.msra.mxu0 0.0
        %3999 = vmatprep.subr.mxu0 0.0
        %4000 = vmatpush1.msra.mxu0 0.0
        %4001 = vmatprep.subr.mxu0 0.0
        %4002 = vmatpush1.msra.mxu0 0.0
        %4003 = vmatprep.subr.mxu0 0.0
        %4004 = vmatpush1.msra.mxu0 0.0
        %4005 = vmatprep.subr.mxu0 0.0
        %4006 = vmatpush1.msra.mxu0 0.0
        %4007 = vmatprep.subr.mxu0 0.0
        %4008 = vmatpush1.msra.mxu0 0.0
        %4009 = vmatprep.subr.mxu0 0.0
        %4010 = vmatpush1.msra.mxu0 0.0
        %4011 = vmatprep.subr.mxu0 0.0
        %4012 = vmatpush1.msra.mxu0 0.0
        %4013 = vmatprep.mubr.f32.mxu0 0.0
        %4014 = vmatmul.mubr.f32.gmra.mrb[0].mxu0 %v3947
        %v4015 = vpop.f32.mrb[0].mxu0
        %v4016 = vadd.f32 0.0, %v4015
        %v4017 = vpop.f32.mrb[0].mxu0
        %4018 = vdwg.mxu0
        %4019 = vst [vmem:[%s307] sm:$0xff] %v4016
        %s4020 = sand.u32 %s208, 1
        %s4021 = scalar_lea.sflag [#allocation3], %s4020
        %s4022 = sand.u32 %s208, 1
        %s4023 = smul.addr %s4022, 8
        %s4024 = scalar_lea.vmem [#allocation2], %s4023
        // Predicated region
        $region53: #{stack_forward.1} parent=51 // pred_check
          %p4025 = pneg %p218
        $region54: #{stack_forward.1} parent=51 // pred_check_branch
          %4027 = sbr.rel (%p4025) target = $region56
        $region55: #{stack_forward.1} parent=51 // pred_region
          %s4029 = ssub.s32 128, 128
          %4030 = vsyncadd %s4021, %s4029
          %s4031 = smul.addr %s22, 128
          %s4032 = scalar_lea.hbm %s8, %s4031
          %s4034 = sshll.u32 %s4024, 4
          %s4035 = int_to_ptr.vmem [resolvable:$true] %s4034
          %4037 = dma.vmem_to_hbm [thread:$0]  %s4035, 128, %s4032, %s4021
        $region56: #{stack_forward.1} parent=51 // pred_fallthru
          _
      $region52: #{stack_forward.1} parent=5 // pred_fallthru
        _
      %p4038 = scmp.le.s32.totalorder 2, %s17
      // Predicated region
      $region57: #{stack_forward.1} parent=5 // pred_check
        %p4039 = pneg %p4038
      $region58: #{stack_forward.1} parent=5 // pred_check_branch
        %4041 = sbr.rel (%p4039) target = $region60
      $region59: #{stack_forward.1} parent=5 // pred_region
        %s4042 = ssub.s32 %s17, 2
        // Predicated region
        $region61: #{stack_forward.1} parent=59 // pred_check
          %p4043 = pneg %p224
        $region62: #{stack_forward.1} parent=59 // pred_check_branch
          %4045 = sbr.rel (%p4043) target = $region64
        $region63: #{stack_forward.1} parent=59 // pred_region
          %s4046 = sand.u32 %s209, 1
          %s4047 = scalar_lea.sflag [#allocation3], %s4046
          %s4048 = sand.u32 %s209, 1
          %s4049 = smul.addr %s4048, 8
          %s4050 = scalar_lea.vmem [#allocation2], %s4049
          %4051 = dma.done %s4047, 128
        $region64: #{stack_forward.1} parent=59 // pred_fallthru
          _
      $region60: #{stack_forward.1} parent=5 // pred_fallthru
        _
    $region6: #{stack_forward.1} parent=1 // loop_footer
      %s21 = sadd.s32 1, %s17
    $region7: #{stack_forward.1} parent=1 // loop_footer_branch
      %16 = sbr.rel target = $region3
    $region8: #{stack_forward.1} parent=1 // loop_exit
      _
    %4052 = vsyncpa [#allocation3], 1
    %s4053 = scalar_lea.sflag [#allocation3], 1
    %4054 = vsyncpa %s4053, 1

</llo_original>
